<compile_context>
chip_gen: v7x
topology: tpu7x:2x2x1
jax: 0.10.0
libtpu: 0.0.40
codegen_flags: <defaults>
</compile_context>

<pallas_src>
import jax
import jax.numpy as jnp
import numpy as np
from jax import lax
from jax.experimental import pallas as pl
from jax.experimental.pallas import tpu as pltpu

# mini "vgg.features": Conv3x3(pad=1)+ReLU blocks interleaved with 2x2 maxpool,
# and "vgg.avgpool" = AdaptiveAvgPool2d((7, 7)) - torchvision-VGG structure with
# tiny channel counts for this synthetic kernel.
CFG = [8, "M", 16, "M"]
POOL_HW = (7, 7)
IN_CH = 3
IMG_HW = 32


def _layer_plan(cfg, in_ch, hw):
    """Static per-layer shapes: ("conv", H, W, Cin, Cout) or ("pool", H, W, C)."""
    plan = []
    c, h, w = in_ch, hw, hw
    for v in cfg:
        if v == "M":
            plan.append(("pool", h, w, c))
            h, w = h // 2, w // 2
        else:
            plan.append(("conv", h, w, c, v))
            c = v
    return plan, (h, w, c)


def _adaptive_pool_matrix(hin, win, hout, wout):
    """(hout*wout, hin*win) matrix reproducing PyTorch AdaptiveAvgPool2d windows."""
    def axis_mat(n_in, n_out):
        m = np.zeros((n_out, n_in), np.float32)
        for i in range(n_out):
            s = (i * n_in) // n_out
            e = -(-((i + 1) * n_in) // n_out)
            m[i, s:e] = 1.0 / float(e - s)
        return m
    return np.kron(axis_mat(hin, hout), axis_mat(win, wout)).astype(np.float32)


def _pool_select_matrix(h, w):
    """0/1 matrix (h*w - w - 1, (h//2)*(w//2)) selecting the 2x2-window maxima at
    even (row, col) positions of the flattened window-max array (see _maxpool2x2)."""
    n, h2, w2 = h * w, h // 2, w // 2
    s = np.zeros((n - w - 1, h2 * w2), np.float32)
    for i in range(h2):
        for j in range(w2):
            s[2 * i * w + 2 * j, i * w2 + j] = 1.0
    return s


# --------------------------- in-kernel building blocks ------------------------
def _conv3x3_relu(act, pad_ref, w_ref, b_ref, H, W, Cin, Cout):
    """act: (Cin, H*W) lane-dense -> (Cout, H*W).  9 accumulated MXU dots."""
    assert (W & (W - 1)) == 0, "W must be a power of two for the cheap col mask"
    N = H * W
    P = W + 1                                     # flank width (covers shift +-(W+1))
    # zero ONLY the two flanks; the interior is fully overwritten every grid step
    # (per-core scratch on v7x, so no program_id-gated init).
    pad_ref[:, 0:P] = jnp.zeros((Cin, P), jnp.float32)
    pad_ref[:, P + N:P + N + P] = jnp.zeros((Cin, P), jnp.float32)
    pad_ref[:, P:P + N] = act

    # column masks for the left/right image border (row borders are handled by
    # the zero flanks automatically).
    col = lax.broadcasted_iota(jnp.int32, (1, N), 1) & (W - 1)
    not_col0 = (col != 0).astype(jnp.float32)     # kill w==0     when dkw == -1
    not_colL = (col != W - 1).astype(jnp.float32)  # kill w==W-1  when dkw == +1

    acc = jnp.zeros((Cout, N), jnp.float32)
    for kh in range(3):
        for kw in range(3):
            s = (kh - 1) * W + (kw - 1)           # flat shift of this tap
            xs = pad_ref[:, P + s:P + s + N]      # (Cin, N) shifted tap (static slice)
            if kw == 0:
                xs = xs * not_col0
            elif kw == 2:
                xs = xs * not_colL
            t = kh * 3 + kw
            w_tap = w_ref[:, t * Cin:(t + 1) * Cin]          # (Cout, Cin)
            acc = acc + jnp.dot(w_tap, xs, preferred_element_type=jnp.float32)
    return jnp.maximum(acc + b_ref[...], 0.0)     # bias (Cout,1) broadcast + ReLU


def _maxpool2x2(act, s_ref, H, W):
    """2x2/stride-2 maxpool on the flat (C, H*W) layout: two contiguous-shift maxes
    compute every 2x2 window max, then one matmul with a 0/1 selection matrix
    compacts the even-(h,w) positions into a dense (C, H*W/4) result."""
    N = H * W
    m = jnp.maximum(act[:, :N - 1], act[:, 1:])           # max(a[i], a[i+1])
    m = jnp.maximum(m[:, :N - W - 1], m[:, W:])           # ... and a[i+W], a[i+W+1]
    return jnp.dot(m, s_ref[...], preferred_element_type=jnp.float32)


def _make_fused_kernel(plan):
    n_in = 1 + sum(2 if l[0] == "conv" else 1 for l in plan) + 1   # x, layer consts, PT

    def kernel(*refs):
        in_refs = refs[:n_in]
        o_ref = refs[n_in]
        pad_refs = refs[n_in + 1:]                 # one flank-pad scratch per conv

        x_ref = in_refs[0]
        pt_ref = in_refs[n_in - 1]                 # (Hf*Wf, Ho*Wo) avg-pool matrix

        act = x_ref[0]                             # (C, H*W), spatial on lanes
        ri, ci = 1, 0
        for layer in plan:
            if layer[0] == "conv":
                _, H, W, Cin, Cout = layer
                w_ref, b_ref = in_refs[ri], in_refs[ri + 1]
                ri += 2
                act = _conv3x3_relu(act, pad_refs[ci], w_ref, b_ref, H, W, Cin, Cout)
                ci += 1
            else:
                _, H, W, C = layer
                s_ref = in_refs[ri]
                ri += 1
                act = _maxpool2x2(act, s_ref, H, W)

        # AdaptiveAvgPool2d((7,7)) as one matmul; result is channel-major (Cf, 49),
        # stored directly so torch.flatten(x, 1) becomes a free host-side reshape.
        g = jnp.dot(act, pt_ref[...], preferred_element_type=jnp.float32)
        o_ref[0] = g.astype(o_ref.dtype)

    return kernel


# --------------------------------- wrapper ------------------------------------
def make_params(key, cfg, in_channels):
    params = []
    c = in_channels
    for v in cfg:
        if v == "M":
            continue
        key, kw_, kb = jax.random.split(key, 3)
        w = jax.random.normal(kw_, (3, 3, c, v), jnp.float32) / np.sqrt(9.0 * c)  # HWIO
        b = 0.01 * jax.random.normal(kb, (v,), jnp.float32)
        params.append((w, b))
        c = v
    return params


def vgg_encoder_forward(x_nchw, params):
    n, cin, hh, ww = x_nchw.shape
    x = x_nchw.reshape(n, cin, hh * ww)            # NCHW -> (N, C, H*W): free reshape
    plan, (hf, wf, cf) = _layer_plan(CFG, cin, hh)
    ho, wo = POOL_HW
    pt = jnp.asarray(_adaptive_pool_matrix(hf, wf, ho, wo).T)   # (Hf*Wf, Ho*Wo)

    inputs = [x]
    in_specs = [pl.BlockSpec((1, cin, hh * ww), lambda i: (i, 0, 0))]
    scratch_shapes = []
    pi = 0
    for layer in plan:
        if layer[0] == "conv":
            _, H, W, Ci, Co = layer
            w_hwio, b = params[pi]
            pi += 1
            # (Cout, 9*Cin) with tap-major columns: col = (kh*3+kw)*Cin + cin
            wk = jnp.transpose(w_hwio, (3, 0, 1, 2)).reshape(Co, 9 * Ci)
            bk = b.reshape(Co, 1)
            inputs += [wk, bk]
            in_specs += [pl.BlockSpec(wk.shape, lambda i: (0, 0)),
                         pl.BlockSpec(bk.shape, lambda i: (0, 0))]
            scratch_shapes.append(
                pltpu.VMEM((Ci, H * W + 2 * (W + 1)), jnp.float32))
        else:
            _, H, W, C = layer
            sm = jnp.asarray(_pool_select_matrix(H, W))
            inputs.append(sm)
            in_specs.append(pl.BlockSpec(sm.shape, lambda i: (0, 0)))
    inputs.append(pt)
    in_specs.append(pl.BlockSpec(pt.shape, lambda i: (0, 0)))

    out = pl.pallas_call(
        _make_fused_kernel(plan),
        out_shape=jax.ShapeDtypeStruct((n, cf, ho * wo), x.dtype),
        grid_spec=pltpu.PrefetchScalarGridSpec(
            num_scalar_prefetch=0,
            grid=(n,),
            in_specs=in_specs,
            out_specs=pl.BlockSpec((1, cf, ho * wo), lambda i: (i, 0, 0)),
            scratch_shapes=scratch_shapes),
        compiler_params=pltpu.CompilerParams(
            dimension_semantics=("parallel",)),     # v7x: one image per TensorCore
    )(*inputs)

    # already channel-major: flatten(N, Cf, Ho*Wo) -> (N, Cf*Ho*Wo) is a pure reshape
    return out.reshape(n, -1)


# ------------------------------ pure-JAX reference ----------------------------
def reference_forward(x_nchw, params):
    x = jnp.transpose(x_nchw, (0, 2, 3, 1))
    pi = 0
    for v in CFG:
        if v == "M":
            x = lax.reduce_window(x, -jnp.inf, lax.max,
                                  (1, 2, 2, 1), (1, 2, 2, 1), "VALID")
        else:
            w, b = params[pi]
            pi += 1
            y = lax.conv_general_dilated(x, w, (1, 1), "SAME",
                                         dimension_numbers=("NHWC", "HWIO", "NHWC"),
                                         precision=lax.Precision.HIGHEST)
            x = jnp.maximum(y + b.reshape(1, 1, 1, -1), 0.0)
    _, h, w_, _c = x.shape
    ho, wo = POOL_HW
    rows = []
    for oi in range(ho):
        h0, h1 = (oi * h) // ho, -(-((oi + 1) * h) // ho)
        cols = []
        for oj in range(wo):
            w0, w1 = (oj * w_) // wo, -(-((oj + 1) * w_) // wo)
            cols.append(jnp.mean(x[:, h0:h1, w0:w1, :], axis=(1, 2)))
        rows.append(jnp.stack(cols, axis=1))
    x = jnp.stack(rows, axis=1)                    # (N, Ho, Wo, C)
    x = jnp.transpose(x, (0, 3, 1, 2))             # NCHW for torch.flatten(x, 1)
    return x.reshape(x.shape[0], -1)


if __name__ == "__main__":
    key = jax.random.PRNGKey(0)
    kx, kp = jax.random.split(key)
    x = jax.random.normal(kx, (2, IN_CH, IMG_HW, IMG_HW), jnp.float32)  # NCHW
    params = make_params(kp, CFG, in_channels=IN_CH)

    out = jax.block_until_ready(vgg_encoder_forward(x, params))
    assert out.shape == (2, 16 * POOL_HW[0] * POOL_HW[1]), out.shape

    ref = reference_forward(x, params)
    # tolerance leaves headroom for MXU bf16-pass rounding of f32 matmuls vs. the
    # HIGHEST-precision XLA reference; real layout/tap bugs would be O(0.1-1).
    np.testing.assert_allclose(np.asarray(out), np.asarray(ref),
                               rtol=1e-2, atol=1e-2)
    print("KERNEL_OK")
</pallas_src>

<mosaic_0001>
module attributes {stable_mosaic.version = 11 : i64} {
  func.func @kernel(%arg0: i32, %arg1: memref<1x3x1024xf32, #tpu.memory_space<vmem>>, %arg2: memref<8x27xf32, #tpu.memory_space<vmem>>, %arg3: memref<8x1xf32, #tpu.memory_space<vmem>>, %arg4: memref<991x256xf32, #tpu.memory_space<vmem>>, %arg5: memref<16x72xf32, #tpu.memory_space<vmem>>, %arg6: memref<16x1xf32, #tpu.memory_space<vmem>>, %arg7: memref<239x64xf32, #tpu.memory_space<vmem>>, %arg8: memref<64x49xf32, #tpu.memory_space<vmem>>, %arg9: memref<1x16x49xf32, #tpu.memory_space<vmem>>, %arg10: memref<3x1090xf32, #tpu.memory_space<vmem>>, %arg11: memref<8x290xf32, #tpu.memory_space<vmem>>) attributes {dimension_semantics = [#tpu.dimension_semantics<parallel>], iteration_bounds = array<i64: 2>, scalar_prefetch = 0 : i64, scratch_operands = 2 : i64, tpu.core_type = #tpu.core_type<tc>, window_params = [{transform_indices = @transform_0, window_bounds = array<i64: 1, 3, 1024>}, {pipeline_mode = #tpu.pipeline_mode<synchronous>, transform_indices = @transform_1, window_bounds = array<i64: 8, 27>}, {pipeline_mode = #tpu.pipeline_mode<synchronous>, transform_indices = @transform_2, window_bounds = array<i64: 8, 1>}, {pipeline_mode = #tpu.pipeline_mode<synchronous>, transform_indices = @transform_3, window_bounds = array<i64: 991, 256>}, {pipeline_mode = #tpu.pipeline_mode<synchronous>, transform_indices = @transform_4, window_bounds = array<i64: 16, 72>}, {pipeline_mode = #tpu.pipeline_mode<synchronous>, transform_indices = @transform_5, window_bounds = array<i64: 16, 1>}, {pipeline_mode = #tpu.pipeline_mode<synchronous>, transform_indices = @transform_6, window_bounds = array<i64: 239, 64>}, {pipeline_mode = #tpu.pipeline_mode<synchronous>, transform_indices = @transform_7, window_bounds = array<i64: 64, 49>}, {transform_indices = @transform_8, window_bounds = array<i64: 1, 16, 49>}]} {
    %c0 = arith.constant 0 : index
    %c0_0 = arith.constant 0 : index
    %c0_1 = arith.constant 0 : index
    %0 = vector.load %arg1[%c0, %c0_0, %c0_1] : memref<1x3x1024xf32, #tpu.memory_space<vmem>>, vector<1x3x1024xf32>
    %1 = vector.shape_cast %0 : vector<1x3x1024xf32> to vector<3x1024xf32>
    %cst = arith.constant 0.000000e+00 : f32
    %2 = vector.broadcast %cst : f32 to vector<3x33xf32>
    %c0_2 = arith.constant 0 : index
    %c0_3 = arith.constant 0 : index
    %3 = vector.load %arg10[%c0_2, %c0_3] : memref<3x1090xf32, #tpu.memory_space<vmem>>, vector<3x33xf32>
    tpu.vector_store %arg10[%c0_2, %c0_3], %2 {strides = array<i32>} : memref<3x1090xf32, #tpu.memory_space<vmem>>, vector<3x33xf32>,
    %cst_4 = arith.constant 0.000000e+00 : f32
    %4 = vector.broadcast %cst_4 : f32 to vector<3x33xf32>
    %c0_5 = arith.constant 0 : index
    %c1057 = arith.constant 1057 : index
    %5 = vector.load %arg10[%c0_5, %c1057] : memref<3x1090xf32, #tpu.memory_space<vmem>>, vector<3x33xf32>
    tpu.vector_store %arg10[%c0_5, %c1057], %4 {strides = array<i32>} : memref<3x1090xf32, #tpu.memory_space<vmem>>, vector<3x33xf32>,
    %c0_6 = arith.constant 0 : index
    %c33 = arith.constant 33 : index
    %6 = vector.load %arg10[%c0_6, %c33] : memref<3x1090xf32, #tpu.memory_space<vmem>>, vector<3x1024xf32>
    tpu.vector_store %arg10[%c0_6, %c33], %1 {strides = array<i32>} : memref<3x1090xf32, #tpu.memory_space<vmem>>, vector<3x1024xf32>,
    %7 = tpu.iota {dimensions = array<i32: 1>} : vector<1x1024xi32>
    %c31_i32 = arith.constant 31 : i32
    %8 = vector.broadcast %c31_i32 : i32 to vector<1x1024xi32>
    %9 = arith.andi %7, %8 : vector<1x1024xi32>
    %c0_i32 = arith.constant 0 : i32
    %10 = vector.broadcast %c0_i32 : i32 to vector<1x1024xi32>
    %11 = arith.cmpi ne, %9, %10 : vector<1x1024xi32>
    %12 = arith.extui %11 : vector<1x1024xi1> to vector<1x1024xi32>
    %13 = arith.sitofp %12 : vector<1x1024xi32> to vector<1x1024xf32>
    %c31_i32_7 = arith.constant 31 : i32
    %14 = vector.broadcast %c31_i32_7 : i32 to vector<1x1024xi32>
    %15 = arith.cmpi ne, %9, %14 : vector<1x1024xi32>
    %16 = arith.extui %15 : vector<1x1024xi1> to vector<1x1024xi32>
    %17 = arith.sitofp %16 : vector<1x1024xi32> to vector<1x1024xf32>
    %cst_8 = arith.constant 0.000000e+00 : f32
    %18 = vector.broadcast %cst_8 : f32 to vector<8x1024xf32>
    %c0_9 = arith.constant 0 : index
    %c0_10 = arith.constant 0 : index
    %19 = vector.load %arg10[%c0_9, %c0_10] : memref<3x1090xf32, #tpu.memory_space<vmem>>, vector<3x1024xf32>
    %20 = vector.broadcast %13 : vector<1x1024xf32> to vector<3x1024xf32>
    %21 = arith.mulf %19, %20 : vector<3x1024xf32>
    %c0_11 = arith.constant 0 : index
    %c0_12 = arith.constant 0 : index
    %22 = vector.load %arg2[%c0_11, %c0_12] : memref<8x27xf32, #tpu.memory_space<vmem>>, vector<8x3xf32>
    %cst_13 = arith.constant dense<0.000000e+00> : vector<8x1024xf32>
    %23 = tpu.matmul %22, %21, %cst_13 {dimension_numbers = #tpu.dot_dimension_numbers<[1], [0], [0], [1], [0, 0, 1, 1], [], []>} : vector<8x3xf32>, vector<3x1024xf32>, vector<8x1024xf32> -> vector<8x1024xf32>
    %24 = arith.addf %18, %23 : vector<8x1024xf32>
    %c0_14 = arith.constant 0 : index
    %c1 = arith.constant 1 : index
    %25 = vector.load %arg10[%c0_14, %c1] : memref<3x1090xf32, #tpu.memory_space<vmem>>, vector<3x1024xf32>
    %c0_15 = arith.constant 0 : index
    %c3 = arith.constant 3 : index
    %26 = vector.load %arg2[%c0_15, %c3] : memref<8x27xf32, #tpu.memory_space<vmem>>, vector<8x3xf32>
    %cst_16 = arith.constant dense<0.000000e+00> : vector<8x1024xf32>
    %27 = tpu.matmul %26, %25, %cst_16 {dimension_numbers = #tpu.dot_dimension_numbers<[1], [0], [0], [1], [0, 0, 1, 1], [], []>} : vector<8x3xf32>, vector<3x1024xf32>, vector<8x1024xf32> -> vector<8x1024xf32>
    %28 = arith.addf %24, %27 : vector<8x1024xf32>
    %c0_17 = arith.constant 0 : index
    %c2 = arith.constant 2 : index
    %29 = vector.load %arg10[%c0_17, %c2] : memref<3x1090xf32, #tpu.memory_space<vmem>>, vector<3x1024xf32>
    %30 = vector.broadcast %17 : vector<1x1024xf32> to vector<3x1024xf32>
    %31 = arith.mulf %29, %30 : vector<3x1024xf32>
    %c0_18 = arith.constant 0 : index
    %c6 = arith.constant 6 : index
    %32 = vector.load %arg2[%c0_18, %c6] : memref<8x27xf32, #tpu.memory_space<vmem>>, vector<8x3xf32>
    %cst_19 = arith.constant dense<0.000000e+00> : vector<8x1024xf32>
    %33 = tpu.matmul %32, %31, %cst_19 {dimension_numbers = #tpu.dot_dimension_numbers<[1], [0], [0], [1], [0, 0, 1, 1], [], []>} : vector<8x3xf32>, vector<3x1024xf32>, vector<8x1024xf32> -> vector<8x1024xf32>
    %34 = arith.addf %28, %33 : vector<8x1024xf32>
    %c0_20 = arith.constant 0 : index
    %c32 = arith.constant 32 : index
    %35 = vector.load %arg10[%c0_20, %c32] : memref<3x1090xf32, #tpu.memory_space<vmem>>, vector<3x1024xf32>
    %36 = vector.broadcast %13 : vector<1x1024xf32> to vector<3x1024xf32>
    %37 = arith.mulf %35, %36 : vector<3x1024xf32>
    %c0_21 = arith.constant 0 : index
    %c9 = arith.constant 9 : index
    %38 = vector.load %arg2[%c0_21, %c9] : memref<8x27xf32, #tpu.memory_space<vmem>>, vector<8x3xf32>
    %cst_22 = arith.constant dense<0.000000e+00> : vector<8x1024xf32>
    %39 = tpu.matmul %38, %37, %cst_22 {dimension_numbers = #tpu.dot_dimension_numbers<[1], [0], [0], [1], [0, 0, 1, 1], [], []>} : vector<8x3xf32>, vector<3x1024xf32>, vector<8x1024xf32> -> vector<8x1024xf32>
    %40 = arith.addf %34, %39 : vector<8x1024xf32>
    %c0_23 = arith.constant 0 : index
    %c33_24 = arith.constant 33 : index
    %41 = vector.load %arg10[%c0_23, %c33_24] : memref<3x1090xf32, #tpu.memory_space<vmem>>, vector<3x1024xf32>
    %c0_25 = arith.constant 0 : index
    %c12 = arith.constant 12 : index
    %42 = vector.load %arg2[%c0_25, %c12] : memref<8x27xf32, #tpu.memory_space<vmem>>, vector<8x3xf32>
    %cst_26 = arith.constant dense<0.000000e+00> : vector<8x1024xf32>
    %43 = tpu.matmul %42, %41, %cst_26 {dimension_numbers = #tpu.dot_dimension_numbers<[1], [0], [0], [1], [0, 0, 1, 1], [], []>} : vector<8x3xf32>, vector<3x1024xf32>, vector<8x1024xf32> -> vector<8x1024xf32>
    %44 = arith.addf %40, %43 : vector<8x1024xf32>
    %c0_27 = arith.constant 0 : index
    %c34 = arith.constant 34 : index
    %45 = vector.load %arg10[%c0_27, %c34] : memref<3x1090xf32, #tpu.memory_space<vmem>>, vector<3x1024xf32>
    %46 = vector.broadcast %17 : vector<1x1024xf32> to vector<3x1024xf32>
    %47 = arith.mulf %45, %46 : vector<3x1024xf32>
    %c0_28 = arith.constant 0 : index
    %c15 = arith.constant 15 : index
    %48 = vector.load %arg2[%c0_28, %c15] : memref<8x27xf32, #tpu.memory_space<vmem>>, vector<8x3xf32>
    %cst_29 = arith.constant dense<0.000000e+00> : vector<8x1024xf32>
    %49 = tpu.matmul %48, %47, %cst_29 {dimension_numbers = #tpu.dot_dimension_numbers<[1], [0], [0], [1], [0, 0, 1, 1], [], []>} : vector<8x3xf32>, vector<3x1024xf32>, vector<8x1024xf32> -> vector<8x1024xf32>
    %50 = arith.addf %44, %49 : vector<8x1024xf32>
    %c0_30 = arith.constant 0 : index
    %c64 = arith.constant 64 : index
    %51 = vector.load %arg10[%c0_30, %c64] : memref<3x1090xf32, #tpu.memory_space<vmem>>, vector<3x1024xf32>
    %52 = vector.broadcast %13 : vector<1x1024xf32> to vector<3x1024xf32>
    %53 = arith.mulf %51, %52 : vector<3x1024xf32>
    %c0_31 = arith.constant 0 : index
    %c18 = arith.constant 18 : index
    %54 = vector.load %arg2[%c0_31, %c18] : memref<8x27xf32, #tpu.memory_space<vmem>>, vector<8x3xf32>
    %cst_32 = arith.constant dense<0.000000e+00> : vector<8x1024xf32>
    %55 = tpu.matmul %54, %53, %cst_32 {dimension_numbers = #tpu.dot_dimension_numbers<[1], [0], [0], [1], [0, 0, 1, 1], [], []>} : vector<8x3xf32>, vector<3x1024xf32>, vector<8x1024xf32> -> vector<8x1024xf32>
    %56 = arith.addf %50, %55 : vector<8x1024xf32>
    %c0_33 = arith.constant 0 : index
    %c65 = arith.constant 65 : index
    %57 = vector.load %arg10[%c0_33, %c65] : memref<3x1090xf32, #tpu.memory_space<vmem>>, vector<3x1024xf32>
    %c0_34 = arith.constant 0 : index
    %c21 = arith.constant 21 : index
    %58 = vector.load %arg2[%c0_34, %c21] : memref<8x27xf32, #tpu.memory_space<vmem>>, vector<8x3xf32>
    %cst_35 = arith.constant dense<0.000000e+00> : vector<8x1024xf32>
    %59 = tpu.matmul %58, %57, %cst_35 {dimension_numbers = #tpu.dot_dimension_numbers<[1], [0], [0], [1], [0, 0, 1, 1], [], []>} : vector<8x3xf32>, vector<3x1024xf32>, vector<8x1024xf32> -> vector<8x1024xf32>
    %60 = arith.addf %56, %59 : vector<8x1024xf32>
    %c0_36 = arith.constant 0 : index
    %c66 = arith.constant 66 : index
    %61 = vector.load %arg10[%c0_36, %c66] : memref<3x1090xf32, #tpu.memory_space<vmem>>, vector<3x1024xf32>
    %62 = vector.broadcast %17 : vector<1x1024xf32> to vector<3x1024xf32>
    %63 = arith.mulf %61, %62 : vector<3x1024xf32>
    %c0_37 = arith.constant 0 : index
    %c24 = arith.constant 24 : index
    %64 = vector.load %arg2[%c0_37, %c24] : memref<8x27xf32, #tpu.memory_space<vmem>>, vector<8x3xf32>
    %cst_38 = arith.constant dense<0.000000e+00> : vector<8x1024xf32>
    %65 = tpu.matmul %64, %63, %cst_38 {dimension_numbers = #tpu.dot_dimension_numbers<[1], [0], [0], [1], [0, 0, 1, 1], [], []>} : vector<8x3xf32>, vector<3x1024xf32>, vector<8x1024xf32> -> vector<8x1024xf32>
    %66 = arith.addf %60, %65 : vector<8x1024xf32>
    %c0_39 = arith.constant 0 : index
    %c0_40 = arith.constant 0 : index
    %67 = vector.load %arg3[%c0_39, %c0_40] : memref<8x1xf32, #tpu.memory_space<vmem>>, vector<8x1xf32>
    %68 = vector.broadcast %67 : vector<8x1xf32> to vector<8x1024xf32>
    %69 = arith.addf %66, %68 : vector<8x1024xf32>
    %cst_41 = arith.constant 0.000000e+00 : f32
    %70 = vector.broadcast %cst_41 : f32 to vector<8x1024xf32>
    %71 = arith.maximumf %69, %70 : vector<8x1024xf32>
    %72 = vector.extract_strided_slice %71 {offsets = [0, 0], sizes = [8, 1023], strides = [1, 1]} : vector<8x1024xf32> to vector<8x1023xf32>
    %73 = vector.extract_strided_slice %71 {offsets = [0, 1], sizes = [8, 1023], strides = [1, 1]} : vector<8x1024xf32> to vector<8x1023xf32>
    %74 = arith.maximumf %72, %73 : vector<8x1023xf32>
    %75 = vector.extract_strided_slice %74 {offsets = [0, 0], sizes = [8, 991], strides = [1, 1]} : vector<8x1023xf32> to vector<8x991xf32>
    %76 = vector.extract_strided_slice %74 {offsets = [0, 32], sizes = [8, 991], strides = [1, 1]} : vector<8x1023xf32> to vector<8x991xf32>
    %77 = arith.maximumf %75, %76 : vector<8x991xf32>
    %c0_42 = arith.constant 0 : index
    %c0_43 = arith.constant 0 : index
    %78 = vector.load %arg4[%c0_42, %c0_43] : memref<991x256xf32, #tpu.memory_space<vmem>>, vector<991x256xf32>
    %cst_44 = arith.constant dense<0.000000e+00> : vector<8x256xf32>
    %79 = tpu.matmul %77, %78, %cst_44 {dimension_numbers = #tpu.dot_dimension_numbers<[1], [0], [0], [1], [0, 0, 1, 1], [], []>} : vector<8x991xf32>, vector<991x256xf32>, vector<8x256xf32> -> vector<8x256xf32>
    %cst_45 = arith.constant 0.000000e+00 : f32
    %80 = vector.broadcast %cst_45 : f32 to vector<8x17xf32>
    %c0_46 = arith.constant 0 : index
    %c0_47 = arith.constant 0 : index
    %81 = vector.load %arg11[%c0_46, %c0_47] : memref<8x290xf32, #tpu.memory_space<vmem>>, vector<8x17xf32>
    tpu.vector_store %arg11[%c0_46, %c0_47], %80 {strides = array<i32>} : memref<8x290xf32, #tpu.memory_space<vmem>>, vector<8x17xf32>,
    %cst_48 = arith.constant 0.000000e+00 : f32
    %82 = vector.broadcast %cst_48 : f32 to vector<8x17xf32>
    %c0_49 = arith.constant 0 : index
    %c273 = arith.constant 273 : index
    %83 = vector.load %arg11[%c0_49, %c273] : memref<8x290xf32, #tpu.memory_space<vmem>>, vector<8x17xf32>
    tpu.vector_store %arg11[%c0_49, %c273], %82 {strides = array<i32>} : memref<8x290xf32, #tpu.memory_space<vmem>>, vector<8x17xf32>,
    %c0_50 = arith.constant 0 : index
    %c17 = arith.constant 17 : index
    %84 = vector.load %arg11[%c0_50, %c17] : memref<8x290xf32, #tpu.memory_space<vmem>>, vector<8x256xf32>
    tpu.vector_store %arg11[%c0_50, %c17], %79 {strides = array<i32>} : memref<8x290xf32, #tpu.memory_space<vmem>>, vector<8x256xf32>,
    %85 = tpu.iota {dimensions = array<i32: 1>} : vector<1x256xi32>
    %c15_i32 = arith.constant 15 : i32
    %86 = vector.broadcast %c15_i32 : i32 to vector<1x256xi32>
    %87 = arith.andi %85, %86 : vector<1x256xi32>
    %c0_i32_51 = arith.constant 0 : i32
    %88 = vector.broadcast %c0_i32_51 : i32 to vector<1x256xi32>
    %89 = arith.cmpi ne, %87, %88 : vector<1x256xi32>
    %90 = arith.extui %89 : vector<1x256xi1> to vector<1x256xi32>
    %91 = arith.sitofp %90 : vector<1x256xi32> to vector<1x256xf32>
    %c15_i32_52 = arith.constant 15 : i32
    %92 = vector.broadcast %c15_i32_52 : i32 to vector<1x256xi32>
    %93 = arith.cmpi ne, %87, %92 : vector<1x256xi32>
    %94 = arith.extui %93 : vector<1x256xi1> to vector<1x256xi32>
    %95 = arith.sitofp %94 : vector<1x256xi32> to vector<1x256xf32>
    %cst_53 = arith.constant 0.000000e+00 : f32
    %96 = vector.broadcast %cst_53 : f32 to vector<16x256xf32>
    %c0_54 = arith.constant 0 : index
    %c0_55 = arith.constant 0 : index
    %97 = vector.load %arg11[%c0_54, %c0_55] : memref<8x290xf32, #tpu.memory_space<vmem>>, vector<8x256xf32>
    %98 = vector.broadcast %91 : vector<1x256xf32> to vector<8x256xf32>
    %99 = arith.mulf %97, %98 : vector<8x256xf32>
    %c0_56 = arith.constant 0 : index
    %c0_57 = arith.constant 0 : index
    %100 = vector.load %arg5[%c0_56, %c0_57] : memref<16x72xf32, #tpu.memory_space<vmem>>, vector<16x8xf32>
    %cst_58 = arith.constant dense<0.000000e+00> : vector<16x256xf32>
    %101 = tpu.matmul %100, %99, %cst_58 {dimension_numbers = #tpu.dot_dimension_numbers<[1], [0], [0], [1], [0, 0, 1, 1], [], []>} : vector<16x8xf32>, vector<8x256xf32>, vector<16x256xf32> -> vector<16x256xf32>
    %102 = arith.addf %96, %101 : vector<16x256xf32>
    %c0_59 = arith.constant 0 : index
    %c1_60 = arith.constant 1 : index
    %103 = vector.load %arg11[%c0_59, %c1_60] : memref<8x290xf32, #tpu.memory_space<vmem>>, vector<8x256xf32>
    %c0_61 = arith.constant 0 : index
    %c8 = arith.constant 8 : index
    %104 = vector.load %arg5[%c0_61, %c8] : memref<16x72xf32, #tpu.memory_space<vmem>>, vector<16x8xf32>
    %cst_62 = arith.constant dense<0.000000e+00> : vector<16x256xf32>
    %105 = tpu.matmul %104, %103, %cst_62 {dimension_numbers = #tpu.dot_dimension_numbers<[1], [0], [0], [1], [0, 0, 1, 1], [], []>} : vector<16x8xf32>, vector<8x256xf32>, vector<16x256xf32> -> vector<16x256xf32>
    %106 = arith.addf %102, %105 : vector<16x256xf32>
    %c0_63 = arith.constant 0 : index
    %c2_64 = arith.constant 2 : index
    %107 = vector.load %arg11[%c0_63, %c2_64] : memref<8x290xf32, #tpu.memory_space<vmem>>, vector<8x256xf32>
    %108 = vector.broadcast %95 : vector<1x256xf32> to vector<8x256xf32>
    %109 = arith.mulf %107, %108 : vector<8x256xf32>
    %c0_65 = arith.constant 0 : index
    %c16 = arith.constant 16 : index
    %110 = vector.load %arg5[%c0_65, %c16] : memref<16x72xf32, #tpu.memory_space<vmem>>, vector<16x8xf32>
    %cst_66 = arith.constant dense<0.000000e+00> : vector<16x256xf32>
    %111 = tpu.matmul %110, %109, %cst_66 {dimension_numbers = #tpu.dot_dimension_numbers<[1], [0], [0], [1], [0, 0, 1, 1], [], []>} : vector<16x8xf32>, vector<8x256xf32>, vector<16x256xf32> -> vector<16x256xf32>
    %112 = arith.addf %106, %111 : vector<16x256xf32>
    %c0_67 = arith.constant 0 : index
    %c16_68 = arith.constant 16 : index
    %113 = vector.load %arg11[%c0_67, %c16_68] : memref<8x290xf32, #tpu.memory_space<vmem>>, vector<8x256xf32>
    %114 = vector.broadcast %91 : vector<1x256xf32> to vector<8x256xf32>
    %115 = arith.mulf %113, %114 : vector<8x256xf32>
    %c0_69 = arith.constant 0 : index
    %c24_70 = arith.constant 24 : index
    %116 = vector.load %arg5[%c0_69, %c24_70] : memref<16x72xf32, #tpu.memory_space<vmem>>, vector<16x8xf32>
    %cst_71 = arith.constant dense<0.000000e+00> : vector<16x256xf32>
    %117 = tpu.matmul %116, %115, %cst_71 {dimension_numbers = #tpu.dot_dimension_numbers<[1], [0], [0], [1], [0, 0, 1, 1], [], []>} : vector<16x8xf32>, vector<8x256xf32>, vector<16x256xf32> -> vector<16x256xf32>
    %118 = arith.addf %112, %117 : vector<16x256xf32>
    %c0_72 = arith.constant 0 : index
    %c17_73 = arith.constant 17 : index
    %119 = vector.load %arg11[%c0_72, %c17_73] : memref<8x290xf32, #tpu.memory_space<vmem>>, vector<8x256xf32>
    %c0_74 = arith.constant 0 : index
    %c32_75 = arith.constant 32 : index
    %120 = vector.load %arg5[%c0_74, %c32_75] : memref<16x72xf32, #tpu.memory_space<vmem>>, vector<16x8xf32>
    %cst_76 = arith.constant dense<0.000000e+00> : vector<16x256xf32>
    %121 = tpu.matmul %120, %119, %cst_76 {dimension_numbers = #tpu.dot_dimension_numbers<[1], [0], [0], [1], [0, 0, 1, 1], [], []>} : vector<16x8xf32>, vector<8x256xf32>, vector<16x256xf32> -> vector<16x256xf32>
    %122 = arith.addf %118, %121 : vector<16x256xf32>
    %c0_77 = arith.constant 0 : index
    %c18_78 = arith.constant 18 : index
    %123 = vector.load %arg11[%c0_77, %c18_78] : memref<8x290xf32, #tpu.memory_space<vmem>>, vector<8x256xf32>
    %124 = vector.broadcast %95 : vector<1x256xf32> to vector<8x256xf32>
    %125 = arith.mulf %123, %124 : vector<8x256xf32>
    %c0_79 = arith.constant 0 : index
    %c40 = arith.constant 40 : index
    %126 = vector.load %arg5[%c0_79, %c40] : memref<16x72xf32, #tpu.memory_space<vmem>>, vector<16x8xf32>
    %cst_80 = arith.constant dense<0.000000e+00> : vector<16x256xf32>
    %127 = tpu.matmul %126, %125, %cst_80 {dimension_numbers = #tpu.dot_dimension_numbers<[1], [0], [0], [1], [0, 0, 1, 1], [], []>} : vector<16x8xf32>, vector<8x256xf32>, vector<16x256xf32> -> vector<16x256xf32>
    %128 = arith.addf %122, %127 : vector<16x256xf32>
    %c0_81 = arith.constant 0 : index
    %c32_82 = arith.constant 32 : index
    %129 = vector.load %arg11[%c0_81, %c32_82] : memref<8x290xf32, #tpu.memory_space<vmem>>, vector<8x256xf32>
    %130 = vector.broadcast %91 : vector<1x256xf32> to vector<8x256xf32>
    %131 = arith.mulf %129, %130 : vector<8x256xf32>
    %c0_83 = arith.constant 0 : index
    %c48 = arith.constant 48 : index
    %132 = vector.load %arg5[%c0_83, %c48] : memref<16x72xf32, #tpu.memory_space<vmem>>, vector<16x8xf32>
    %cst_84 = arith.constant dense<0.000000e+00> : vector<16x256xf32>
    %133 = tpu.matmul %132, %131, %cst_84 {dimension_numbers = #tpu.dot_dimension_numbers<[1], [0], [0], [1], [0, 0, 1, 1], [], []>} : vector<16x8xf32>, vector<8x256xf32>, vector<16x256xf32> -> vector<16x256xf32>
    %134 = arith.addf %128, %133 : vector<16x256xf32>
    %c0_85 = arith.constant 0 : index
    %c33_86 = arith.constant 33 : index
    %135 = vector.load %arg11[%c0_85, %c33_86] : memref<8x290xf32, #tpu.memory_space<vmem>>, vector<8x256xf32>
    %c0_87 = arith.constant 0 : index
    %c56 = arith.constant 56 : index
    %136 = vector.load %arg5[%c0_87, %c56] : memref<16x72xf32, #tpu.memory_space<vmem>>, vector<16x8xf32>
    %cst_88 = arith.constant dense<0.000000e+00> : vector<16x256xf32>
    %137 = tpu.matmul %136, %135, %cst_88 {dimension_numbers = #tpu.dot_dimension_numbers<[1], [0], [0], [1], [0, 0, 1, 1], [], []>} : vector<16x8xf32>, vector<8x256xf32>, vector<16x256xf32> -> vector<16x256xf32>
    %138 = arith.addf %134, %137 : vector<16x256xf32>
    %c0_89 = arith.constant 0 : index
    %c34_90 = arith.constant 34 : index
    %139 = vector.load %arg11[%c0_89, %c34_90] : memref<8x290xf32, #tpu.memory_space<vmem>>, vector<8x256xf32>
    %140 = vector.broadcast %95 : vector<1x256xf32> to vector<8x256xf32>
    %141 = arith.mulf %139, %140 : vector<8x256xf32>
    %c0_91 = arith.constant 0 : index
    %c64_92 = arith.constant 64 : index
    %142 = vector.load %arg5[%c0_91, %c64_92] : memref<16x72xf32, #tpu.memory_space<vmem>>, vector<16x8xf32>
    %cst_93 = arith.constant dense<0.000000e+00> : vector<16x256xf32>
    %143 = tpu.matmul %142, %141, %cst_93 {dimension_numbers = #tpu.dot_dimension_numbers<[1], [0], [0], [1], [0, 0, 1, 1], [], []>} : vector<16x8xf32>, vector<8x256xf32>, vector<16x256xf32> -> vector<16x256xf32>
    %144 = arith.addf %138, %143 : vector<16x256xf32>
    %c0_94 = arith.constant 0 : index
    %c0_95 = arith.constant 0 : index
    %145 = vector.load %arg6[%c0_94, %c0_95] : memref<16x1xf32, #tpu.memory_space<vmem>>, vector<16x1xf32>
    %146 = vector.broadcast %145 : vector<16x1xf32> to vector<16x256xf32>
    %147 = arith.addf %144, %146 : vector<16x256xf32>
    %cst_96 = arith.constant 0.000000e+00 : f32
    %148 = vector.broadcast %cst_96 : f32 to vector<16x256xf32>
    %149 = arith.maximumf %147, %148 : vector<16x256xf32>
    %150 = vector.extract_strided_slice %149 {offsets = [0, 0], sizes = [16, 255], strides = [1, 1]} : vector<16x256xf32> to vector<16x255xf32>
    %151 = vector.extract_strided_slice %149 {offsets = [0, 1], sizes = [16, 255], strides = [1, 1]} : vector<16x256xf32> to vector<16x255xf32>
    %152 = arith.maximumf %150, %151 : vector<16x255xf32>
    %153 = vector.extract_strided_slice %152 {offsets = [0, 0], sizes = [16, 239], strides = [1, 1]} : vector<16x255xf32> to vector<16x239xf32>
    %154 = vector.extract_strided_slice %152 {offsets = [0, 16], sizes = [16, 239], strides = [1, 1]} : vector<16x255xf32> to vector<16x239xf32>
    %155 = arith.maximumf %153, %154 : vector<16x239xf32>
    %c0_97 = arith.constant 0 : index
    %c0_98 = arith.constant 0 : index
    %156 = vector.load %arg7[%c0_97, %c0_98] : memref<239x64xf32, #tpu.memory_space<vmem>>, vector<239x64xf32>
    %cst_99 = arith.constant dense<0.000000e+00> : vector<16x64xf32>
    %157 = tpu.matmul %155, %156, %cst_99 {dimension_numbers = #tpu.dot_dimension_numbers<[1], [0], [0], [1], [0, 0, 1, 1], [], []>} : vector<16x239xf32>, vector<239x64xf32>, vector<16x64xf32> -> vector<16x64xf32>
    %c0_100 = arith.constant 0 : index
    %c0_101 = arith.constant 0 : index
    %158 = vector.load %arg8[%c0_100, %c0_101] : memref<64x49xf32, #tpu.memory_space<vmem>>, vector<64x49xf32>
    %cst_102 = arith.constant dense<0.000000e+00> : vector<16x49xf32>
    %159 = tpu.matmul %157, %158, %cst_102 {dimension_numbers = #tpu.dot_dimension_numbers<[1], [0], [0], [1], [0, 0, 1, 1], [], []>} : vector<16x64xf32>, vector<64x49xf32>, vector<16x49xf32> -> vector<16x49xf32>
    %c0_103 = arith.constant 0 : index
    %c0_104 = arith.constant 0 : index
    %c0_105 = arith.constant 0 : index
    %160 = vector.load %arg9[%c0_103, %c0_104, %c0_105] : memref<1x16x49xf32, #tpu.memory_space<vmem>>, vector<1x16x49xf32>
    %161 = vector.shape_cast %160 : vector<1x16x49xf32> to vector<16x49xf32>
    %162 = vector.shape_cast %159 : vector<16x49xf32> to vector<1x16x49xf32>
    tpu.vector_store %arg9[%c0_103, %c0_104, %c0_105], %162 {strides = array<i32>} : memref<1x16x49xf32, #tpu.memory_space<vmem>>, vector<1x16x49xf32>,
    return
  }
  func.func @transform_0(%arg0: i32) -> (i32, i32, i32) {
    %c0_i32 = arith.constant 0 : i32
    %c0_i32_0 = arith.constant 0 : i32
    %c0_i32_1 = arith.constant 0 : i32
    return %arg0, %c0_i32, %c0_i32_0 : i32, i32, i32
  }
  func.func @transform_1(%arg0: i32) -> (i32, i32) {
    %c0_i32 = arith.constant 0 : i32
    %c0_i32_0 = arith.constant 0 : i32
    %c0_i32_1 = arith.constant 0 : i32
    return %c0_i32, %c0_i32_0 : i32, i32
  }
  func.func @transform_2(%arg0: i32) -> (i32, i32) {
    %c0_i32 = arith.constant 0 : i32
    %c0_i32_0 = arith.constant 0 : i32
    %c0_i32_1 = arith.constant 0 : i32
    return %c0_i32, %c0_i32_0 : i32, i32
  }
  func.func @transform_3(%arg0: i32) -> (i32, i32) {
    %c0_i32 = arith.constant 0 : i32
    %c0_i32_0 = arith.constant 0 : i32
    %c0_i32_1 = arith.constant 0 : i32
    return %c0_i32, %c0_i32_0 : i32, i32
  }
  func.func @transform_4(%arg0: i32) -> (i32, i32) {
    %c0_i32 = arith.constant 0 : i32
    %c0_i32_0 = arith.constant 0 : i32
    %c0_i32_1 = arith.constant 0 : i32
    return %c0_i32, %c0_i32_0 : i32, i32
  }
  func.func @transform_5(%arg0: i32) -> (i32, i32) {
    %c0_i32 = arith.constant 0 : i32
    %c0_i32_0 = arith.constant 0 : i32
    %c0_i32_1 = arith.constant 0 : i32
    return %c0_i32, %c0_i32_0 : i32, i32
  }
  func.func @transform_6(%arg0: i32) -> (i32, i32) {
    %c0_i32 = arith.constant 0 : i32
    %c0_i32_0 = arith.constant 0 : i32
    %c0_i32_1 = arith.constant 0 : i32
    return %c0_i32, %c0_i32_0 : i32, i32
  }
  func.func @transform_7(%arg0: i32) -> (i32, i32) {
    %c0_i32 = arith.constant 0 : i32
    %c0_i32_0 = arith.constant 0 : i32
    %c0_i32_1 = arith.constant 0 : i32
    return %c0_i32, %c0_i32_0 : i32, i32
  }
  func.func @transform_8(%arg0: i32) -> (i32, i32, i32) {
    %c0_i32 = arith.constant 0 : i32
    %c0_i32_0 = arith.constant 0 : i32
    %c0_i32_1 = arith.constant 0 : i32
    return %arg0, %c0_i32, %c0_i32_0 : i32, i32, i32
  }
}

</mosaic_0001>

<llo_original>
// kernel: tpu_custom_call.1
$region0: #{tpu_custom_call.1}
  #allocation0 [shape = 'u32[]', space=smem, size = 0x4, offset = 0x4, fixed_abs, tag = 'smem constant byte address 0x4 - core index']
  #allocation1 [shape = 'u32[144,128]{1,0:T(1,128)}', space=vmem, size = 0x12000, scoped, tag = 'internal scratch']
  #allocation2 [shape = 'f32[3,1090]{1,0:T(4,128)}', space=vmem, size = 0x4800, scoped, tag = 'scratch operand']
  #allocation3 [shape = 'f32[8,290]{1,0:T(8,128)}', space=vmem, size = 0x3000, scoped, tag = 'scratch operand']
  %s0 = inlined_call_operand.vmem [shape: f32[2,3,1024], index: 0, kind: input, shape index: {}]
  %s1 = inlined_call_operand.vmem [shape: f32[8,27], index: 1, kind: input, shape index: {}]
  %s2 = inlined_call_operand.vmem [shape: f32[8,1], index: 2, kind: input, shape index: {}]
  %s3 = inlined_call_operand.hbm [shape: f32[991,256], index: 3, kind: input, shape index: {}]
  %s4 = inlined_call_operand.vmem [shape: f32[16,72], index: 4, kind: input, shape index: {}]
  %s5 = inlined_call_operand.vmem [shape: f32[16,1], index: 5, kind: input, shape index: {}]
  %s6 = inlined_call_operand.vmem [shape: f32[239,64], index: 6, kind: input, shape index: {}]
  %s7 = inlined_call_operand.vmem [shape: f32[64,49], index: 7, kind: input, shape index: {}]
  %s8 = inlined_call_operand.hbm [shape: f32[2,16,49], index: 8, kind: output, shape index: {}]
  %s9 = sld [smem:[#allocation0]]
  $region69: #{tpu_custom_call.1} parent=0
    _
  %s11 = ssub.s32 1, %s9
  %s12 = scalar_select 0, %s11, %s9
  $region1: #{tpu_custom_call.1} parent=0
    #allocation4 [shape = 'u8[1015808]{0}', space=vmem, size = 0xf8000, scoped, tag = 'input window, operand 3, single buffered']
    #allocation5 [shape = 's32[2]{0}', space=sflag, size = 0x8, scoped, tag = 'scoped memory for tpu_custom_call.1']
    #allocation6 [shape = 's32[2]{0}', space=sflag, size = 0x8, scoped, tag = 'scoped memory for tpu_custom_call.1']
    #allocation7 [shape = 'u8[16384]{0}', space=vmem, size = 0x4000, scoped, tag = 'output window, operand 0']
    %13 = vsyncpa [#allocation5], 0
    %14 = vsyncpa [#allocation6], 0
    %s15 = scalar_lea.sflag [#allocation6], 1
    %16 = vsyncpa %s15, 0
    loop: start=0, step=1, limit=4
    $region2: #{tpu_custom_call.1} parent=1 // loop_pre_header
      _
    $region3: #{tpu_custom_call.1} parent=1 // loop_header
      %s18 = sphi 0, %s22
      %p19 = scmp.ge.s32.totalorder %s18, 4
      %s28 = sphi 0, %s30
      %s31 = sphi 0, %s28
      %s32 = sphi 0, %s31
      %s48 = sphi 0, %s32
      %s52 = sphi 0, %s52
      %s54 = sphi 0, %s52
      %s55 = sphi 0, %s54
      %s69 = sphi 0, %s55
      %s73 = sphi 0, %s73
      %s75 = sphi 0, %s73
      %s76 = sphi 0, %s75
      %s90 = sphi 0, %s76
      %s94 = sphi 0, %s94
      %s96 = sphi 0, %s94
      %s97 = sphi 0, %s96
      %s111 = sphi 0, %s97
      %s115 = sphi 0, %s115
      %s117 = sphi 0, %s115
      %s118 = sphi 0, %s117
      %s132 = sphi 0, %s118
      %s136 = sphi 0, %s136
      %s138 = sphi 0, %s136
      %s139 = sphi 0, %s138
      %s153 = sphi 0, %s139
      %s157 = sphi 0, %s157
      %s159 = sphi 0, %s157
      %s160 = sphi 0, %s159
      %s174 = sphi 0, %s160
      %s178 = sphi 0, %s178
      %s180 = sphi 0, %s178
      %s181 = sphi 0, %s180
      %s195 = sphi 0, %s181
      %s201 = sphi 0, %s203
      %s204 = sphi 0, %s201
      %s205 = sphi 0, %s204
      %s221 = sphi 0, %s205
    $region4: #{tpu_custom_call.1} parent=1 // loop_header_branch
      %21 = sbr.rel (%p19) target = $region8
    $region5: #{tpu_custom_call.1} parent=1 // loop_body
      %s23 = ssub.s32 %s18, 1
      %s24 = ssub.s32 %s18, 2
      %s25 = sadd.s32 %s18, 1
      %s26 = ssub.s32 %s18, %s25
      %p27 = scmp.eq.s32.totalorder %s26, 0
      %s29 = sadd.s32 %s28, 1
      %s30 = scalar_select %p27, %s28, %s29
      %p33 = pneg %p27
      %p34 = scmp.eq.s32.totalorder %s18, 1
      %p35 = por %p33, %p34
      %p36 = scmp.ne.s32.totalorder %s28, %s31
      %p37 = scmp.eq.s32.totalorder %s18, 0
      %p38 = por %p36, %p37
      %p39 = scmp.ne.s32.totalorder %s28, %s31
      %p40 = scmp.eq.s32.totalorder %s23, 1
      %p41 = por %p39, %p40
      %p42 = scmp.ne.s32.totalorder %s31, %s32
      %p43 = scmp.eq.s32.totalorder %s23, 0
      %p44 = por %p42, %p43
      %p45 = scmp.ne.s32.totalorder %s31, %s32
      %p46 = scmp.eq.s32.totalorder %s24, 1
      %p47 = por %p45, %p46
      %p49 = scmp.ne.s32.totalorder %s32, %s48
      %p50 = scmp.eq.s32.totalorder %s24, 0
      %p51 = por %p49, %p50
      %s53 = sadd.s32 %s52, 1
      %p56 = scmp.eq.s32.totalorder %s18, 1
      %p57 = scmp.ne.s32.totalorder %s52, %s54
      %p58 = scmp.eq.s32.totalorder %s18, 0
      %p59 = por %p57, %p58
      %p60 = scmp.ne.s32.totalorder %s52, %s54
      %p61 = scmp.eq.s32.totalorder %s23, 1
      %p62 = por %p60, %p61
      %p63 = scmp.ne.s32.totalorder %s54, %s55
      %p64 = scmp.eq.s32.totalorder %s23, 0
      %p65 = por %p63, %p64
      %p66 = scmp.ne.s32.totalorder %s54, %s55
      %p67 = scmp.eq.s32.totalorder %s24, 1
      %p68 = por %p66, %p67
      %p70 = scmp.ne.s32.totalorder %s55, %s69
      %p71 = scmp.eq.s32.totalorder %s24, 0
      %p72 = por %p70, %p71
      %s74 = sadd.s32 %s73, 1
      %p77 = scmp.eq.s32.totalorder %s18, 1
      %p78 = scmp.ne.s32.totalorder %s73, %s75
      %p79 = scmp.eq.s32.totalorder %s18, 0
      %p80 = por %p78, %p79
      %p81 = scmp.ne.s32.totalorder %s73, %s75
      %p82 = scmp.eq.s32.totalorder %s23, 1
      %p83 = por %p81, %p82
      %p84 = scmp.ne.s32.totalorder %s75, %s76
      %p85 = scmp.eq.s32.totalorder %s23, 0
      %p86 = por %p84, %p85
      %p87 = scmp.ne.s32.totalorder %s75, %s76
      %p88 = scmp.eq.s32.totalorder %s24, 1
      %p89 = por %p87, %p88
      %p91 = scmp.ne.s32.totalorder %s76, %s90
      %p92 = scmp.eq.s32.totalorder %s24, 0
      %p93 = por %p91, %p92
      %s95 = sadd.s32 %s94, 1
      %p98 = scmp.eq.s32.totalorder %s18, 1
      %p99 = scmp.ne.s32.totalorder %s94, %s96
      %p100 = scmp.eq.s32.totalorder %s18, 0
      %p101 = por %p99, %p100
      %p102 = scmp.ne.s32.totalorder %s94, %s96
      %p103 = scmp.eq.s32.totalorder %s23, 1
      %p104 = por %p102, %p103
      %p105 = scmp.ne.s32.totalorder %s96, %s97
      %p106 = scmp.eq.s32.totalorder %s23, 0
      %p107 = por %p105, %p106
      %p108 = scmp.ne.s32.totalorder %s96, %s97
      %p109 = scmp.eq.s32.totalorder %s24, 1
      %p110 = por %p108, %p109
      %p112 = scmp.ne.s32.totalorder %s97, %s111
      %p113 = scmp.eq.s32.totalorder %s24, 0
      %p114 = por %p112, %p113
      %s116 = sadd.s32 %s115, 1
      %p119 = scmp.eq.s32.totalorder %s18, 1
      %p120 = scmp.ne.s32.totalorder %s115, %s117
      %p121 = scmp.eq.s32.totalorder %s18, 0
      %p122 = por %p120, %p121
      %p123 = scmp.ne.s32.totalorder %s115, %s117
      %p124 = scmp.eq.s32.totalorder %s23, 1
      %p125 = por %p123, %p124
      %p126 = scmp.ne.s32.totalorder %s117, %s118
      %p127 = scmp.eq.s32.totalorder %s23, 0
      %p128 = por %p126, %p127
      %p129 = scmp.ne.s32.totalorder %s117, %s118
      %p130 = scmp.eq.s32.totalorder %s24, 1
      %p131 = por %p129, %p130
      %p133 = scmp.ne.s32.totalorder %s118, %s132
      %p134 = scmp.eq.s32.totalorder %s24, 0
      %p135 = por %p133, %p134
      %s137 = sadd.s32 %s136, 1
      %p140 = scmp.eq.s32.totalorder %s18, 1
      %p141 = scmp.ne.s32.totalorder %s136, %s138
      %p142 = scmp.eq.s32.totalorder %s18, 0
      %p143 = por %p141, %p142
      %p144 = scmp.ne.s32.totalorder %s136, %s138
      %p145 = scmp.eq.s32.totalorder %s23, 1
      %p146 = por %p144, %p145
      %p147 = scmp.ne.s32.totalorder %s138, %s139
      %p148 = scmp.eq.s32.totalorder %s23, 0
      %p149 = por %p147, %p148
      %p150 = scmp.ne.s32.totalorder %s138, %s139
      %p151 = scmp.eq.s32.totalorder %s24, 1
      %p152 = por %p150, %p151
      %p154 = scmp.ne.s32.totalorder %s139, %s153
      %p155 = scmp.eq.s32.totalorder %s24, 0
      %p156 = por %p154, %p155
      %s158 = sadd.s32 %s157, 1
      %p161 = scmp.eq.s32.totalorder %s18, 1
      %p162 = scmp.ne.s32.totalorder %s157, %s159
      %p163 = scmp.eq.s32.totalorder %s18, 0
      %p164 = por %p162, %p163
      %p165 = scmp.ne.s32.totalorder %s157, %s159
      %p166 = scmp.eq.s32.totalorder %s23, 1
      %p167 = por %p165, %p166
      %p168 = scmp.ne.s32.totalorder %s159, %s160
      %p169 = scmp.eq.s32.totalorder %s23, 0
      %p170 = por %p168, %p169
      %p171 = scmp.ne.s32.totalorder %s159, %s160
      %p172 = scmp.eq.s32.totalorder %s24, 1
      %p173 = por %p171, %p172
      %p175 = scmp.ne.s32.totalorder %s160, %s174
      %p176 = scmp.eq.s32.totalorder %s24, 0
      %p177 = por %p175, %p176
      %s179 = sadd.s32 %s178, 1
      %p182 = scmp.eq.s32.totalorder %s18, 1
      %p183 = scmp.ne.s32.totalorder %s178, %s180
      %p184 = scmp.eq.s32.totalorder %s18, 0
      %p185 = por %p183, %p184
      %p186 = scmp.ne.s32.totalorder %s178, %s180
      %p187 = scmp.eq.s32.totalorder %s23, 1
      %p188 = por %p186, %p187
      %p189 = scmp.ne.s32.totalorder %s180, %s181
      %p190 = scmp.eq.s32.totalorder %s23, 0
      %p191 = por %p189, %p190
      %p192 = scmp.ne.s32.totalorder %s180, %s181
      %p193 = scmp.eq.s32.totalorder %s24, 1
      %p194 = por %p192, %p193
      %p196 = scmp.ne.s32.totalorder %s181, %s195
      %p197 = scmp.eq.s32.totalorder %s24, 0
      %p198 = por %p196, %p197
      %s199 = ssub.s32 %s18, %s25
      %p200 = scmp.eq.s32.totalorder %s199, 0
      %s202 = sadd.s32 %s201, 1
      %s203 = scalar_select %p200, %s201, %s202
      %p206 = pneg %p200
      %p207 = scmp.eq.s32.totalorder %s18, 1
      %p208 = por %p206, %p207
      %p209 = scmp.ne.s32.totalorder %s201, %s204
      %p210 = scmp.eq.s32.totalorder %s18, 0
      %p211 = por %p209, %p210
      %p212 = scmp.ne.s32.totalorder %s201, %s204
      %p213 = scmp.eq.s32.totalorder %s23, 1
      %p214 = por %p212, %p213
      %p215 = scmp.ne.s32.totalorder %s204, %s205
      %p216 = scmp.eq.s32.totalorder %s23, 0
      %p217 = por %p215, %p216
      %p218 = scmp.ne.s32.totalorder %s204, %s205
      %p219 = scmp.eq.s32.totalorder %s24, 1
      %p220 = por %p218, %p219
      %p222 = scmp.ne.s32.totalorder %s205, %s221
      %p223 = scmp.eq.s32.totalorder %s24, 0
      %p224 = por %p222, %p223
      %p225 = scmp.le.s32.totalorder 1, %s18
      %p226 = scmp.lt.s32.totalorder %s18, 3
      %p227 = pnand %p225, %p226
      %p228 = pneg %p227
      // Predicated region
      $region9: #{tpu_custom_call.1} parent=5 // pred_check
        _
      $region10: #{tpu_custom_call.1} parent=5 // pred_check_branch
        %230 = sbr.rel (%p227) target = $region12
      $region11: #{tpu_custom_call.1} parent=5 // pred_region
        %s231 = ssub.s32 %s18, 1
        // Predicated region
        $region13: #{tpu_custom_call.1} parent=11 // pred_check
          %p232 = pneg %p65
        $region14: #{tpu_custom_call.1} parent=11 // pred_check_branch
          %234 = sbr.rel (%p232) target = $region16
        $region15: #{tpu_custom_call.1} parent=11 // pred_region
          _
        $region16: #{tpu_custom_call.1} parent=11 // pred_fallthru
          _
        // Predicated region
        $region17: #{tpu_custom_call.1} parent=11 // pred_check
          %p235 = pneg %p86
        $region18: #{tpu_custom_call.1} parent=11 // pred_check_branch
          %237 = sbr.rel (%p235) target = $region20
        $region19: #{tpu_custom_call.1} parent=11 // pred_region
          _
        $region20: #{tpu_custom_call.1} parent=11 // pred_fallthru
          _
        // Predicated region
        $region21: #{tpu_custom_call.1} parent=11 // pred_check
          %p238 = pneg %p107
        $region22: #{tpu_custom_call.1} parent=11 // pred_check_branch
          %240 = sbr.rel (%p238) target = $region24
        $region23: #{tpu_custom_call.1} parent=11 // pred_region
          %s242 = ssub.s32 31744, 31744
          %243 = vsyncadd [#allocation5], %s242
          %s244 = sshll.u32 [#allocation4], 4
          %s245 = int_to_ptr.vmem [resolvable:$true] %s244
          %250 = dma.hbm_to_vmem [thread:$0]  %s3, 31744, %s245, [#allocation5], 256, 256, 16
        $region24: #{tpu_custom_call.1} parent=11 // pred_fallthru
          _
        // Predicated region
        $region25: #{tpu_custom_call.1} parent=11 // pred_check
          %p251 = pneg %p128
        $region26: #{tpu_custom_call.1} parent=11 // pred_check_branch
          %253 = sbr.rel (%p251) target = $region28
        $region27: #{tpu_custom_call.1} parent=11 // pred_region
          _
        $region28: #{tpu_custom_call.1} parent=11 // pred_fallthru
          _
        // Predicated region
        $region29: #{tpu_custom_call.1} parent=11 // pred_check
          %p254 = pneg %p149
        $region30: #{tpu_custom_call.1} parent=11 // pred_check_branch
          %256 = sbr.rel (%p254) target = $region32
        $region31: #{tpu_custom_call.1} parent=11 // pred_region
          _
        $region32: #{tpu_custom_call.1} parent=11 // pred_fallthru
          _
        // Predicated region
        $region33: #{tpu_custom_call.1} parent=11 // pred_check
          %p257 = pneg %p170
        $region34: #{tpu_custom_call.1} parent=11 // pred_check_branch
          %259 = sbr.rel (%p257) target = $region36
        $region35: #{tpu_custom_call.1} parent=11 // pred_region
          _
        $region36: #{tpu_custom_call.1} parent=11 // pred_fallthru
          _
        // Predicated region
        $region37: #{tpu_custom_call.1} parent=11 // pred_check
          %p260 = pneg %p191
        $region38: #{tpu_custom_call.1} parent=11 // pred_check_branch
          %262 = sbr.rel (%p260) target = $region40
        $region39: #{tpu_custom_call.1} parent=11 // pred_region
          _
        $region40: #{tpu_custom_call.1} parent=11 // pred_fallthru
          _
      $region12: #{tpu_custom_call.1} parent=5 // pred_fallthru
        _
      %p263 = scmp.lt.s32.totalorder %s18, 2
      // Predicated region
      $region41: #{tpu_custom_call.1} parent=5 // pred_check
        %p264 = pneg %p263
      $region42: #{tpu_custom_call.1} parent=5 // pred_check_branch
        %266 = sbr.rel (%p264) target = $region44
      $region43: #{tpu_custom_call.1} parent=5 // pred_region
        // Predicated region
        $region45: #{tpu_custom_call.1} parent=43 // pred_check
          %p267 = pneg %p38
        $region46: #{tpu_custom_call.1} parent=43 // pred_check_branch
          %269 = sbr.rel (%p267) target = $region48
        $region47: #{tpu_custom_call.1} parent=43 // pred_region
          %p270 = scmp.lt.s32.totalorder %s18, 1
          %s271 = scalar_select %p270, %s18, 1
          %s272 = smul.addr %s271, 8
          %s273 = smul.addr %s272, 4
          %s274 = scalar_lea.vmem %s0, %s273
        $region48: #{tpu_custom_call.1} parent=43 // pred_fallthru
          _
      $region44: #{tpu_custom_call.1} parent=5 // pred_fallthru
        _
      %p275 = scmp.le.s32.totalorder 1, %s18
      %p276 = scmp.lt.s32.totalorder %s18, 3
      %p277 = pnand %p275, %p276
      %p278 = pneg %p277
      // Predicated region
      $region49: #{tpu_custom_call.1} parent=5 // pred_check
        _
      $region50: #{tpu_custom_call.1} parent=5 // pred_check_branch
        %280 = sbr.rel (%p277) target = $region52
      $region51: #{tpu_custom_call.1} parent=5 // pred_region
        %s281 = ssub.s32 %s18, 1
        // Predicated region
        $region53: #{tpu_custom_call.1} parent=51 // pred_check
          %p282 = pneg %p107
        $region54: #{tpu_custom_call.1} parent=51 // pred_check_branch
          %284 = sbr.rel (%p282) target = $region56
        $region55: #{tpu_custom_call.1} parent=51 // pred_region
          %285 = dma.done [#allocation5], 31744
        $region56: #{tpu_custom_call.1} parent=51 // pred_fallthru
          _
        %p286 = scmp.lt.s32.totalorder %s23, 1
        %s287 = scalar_select %p286, %s23, 1
        %s288 = smul.addr %s287, 8
        %s289 = smul.addr %s288, 4
        %s290 = scalar_lea.vmem %s0, %s289
        %p291 = pneg %p44
        %p292 = pneg %p41
        %p293 = pneg %p65
        %p294 = pneg %p62
        %p295 = pneg %p86
        %p296 = pneg %p83
        %p297 = pneg %p107
        %p298 = pneg %p104
        %p299 = pneg %p128
        %p300 = pneg %p125
        %p301 = pneg %p149
        %p302 = pneg %p146
        %p303 = pneg %p170
        %p304 = pneg %p167
        %p305 = pneg %p191
        %p306 = pneg %p188
        %p307 = pneg %p217
        %p308 = pneg %p214
        %s309 = sand.u32 %s204, 1
        %s310 = scalar_lea.sflag [#allocation6], %s309
        %s311 = sand.u32 %s204, 1
        %s312 = smul.addr %s311, 16
        %s313 = scalar_lea.vmem [#allocation7], %s312
        %p314 = scmp.lt.s32.totalorder %s23, 1
        %s315 = scalar_select %p314, %s23, 1
        %s316 = smul.addr %s315, 8
        %s317 = smul.addr %s316, 4
        %s318 = scalar_lea.vmem %s0, %s317
        %v319 = vld [vmem:[%s318] sm:$0x77]
        %v320 = vld [vmem:[%s318 + $0x8] sm:$0x77]
        %v321 = vld [vmem:[%s318 + $0x10] sm:$0x77]
        %v322 = vld [vmem:[%s318 + $0x18] sm:$0x77]
        %vm323 = vcmask 264192
        %324 = vst.msk [vmem:[#allocation2] sm:$0x7] %vm323, 0.0
        %vm325 = vcmask 534792
        %326 = vst.msk [vmem:[#allocation2 + $0x20] sm:$0x7] %vm325, 0.0
        %331 = vrot.lane.b32.xlu0 %v319, 33
        %v332 = vpop.permute.xlu0 %331
        %333 = vrot.lane.b32.xlu0 %v320, 33
        %v334 = vpop.permute.xlu0 %333
        %335 = vrot.lane.b32.xlu0 %v321, 33
        %v336 = vpop.permute.xlu0 %335
        %337 = vrot.lane.b32.xlu0 %v322, 33
        %v338 = vpop.permute.xlu0 %337
        %v339 = vrot.slane %v332, 4
        %v340 = vrot.slane %v334, 4
        %v341 = vrot.slane %v336, 4
        %v342 = vrot.slane %v338, 4
        %vm343 = vcmask 269312
        %v344 = vsel %vm343, %v339, %v332
        %vm345 = vcmask 1043456
        %v346 = vsel %vm345, %v339, %v340
        %v347 = vsel %vm343, %v346, %v334
        %v348 = vsel %vm345, %v340, %v341
        %v349 = vsel %vm343, %v348, %v336
        %v350 = vsel %vm345, %v341, %v342
        %v351 = vsel %vm343, %v350, %v338
        %vm357 = vcmask 1042696
        %vm358 = vcmask 1046532
        %vm359 = vmor %vm358, %vm357
        %360 = vst.msk [vmem:[#allocation2] sm:$0x77] %vm359, %v344
        %361 = vst [vmem:[#allocation2 + $0x8] sm:$0x77] %v347
        %362 = vst [vmem:[#allocation2 + $0x10] sm:$0x77] %v349
        %363 = vst [vmem:[#allocation2 + $0x18] sm:$0x77] %v351
        %364 = vst.msk [vmem:[#allocation2 + $0x20] sm:$0x7] %vm323, %v342
        %v365 = vlaneseq
        %v366 = vand.u32 %v365, 127
        %v367 = vadd.s32 %v366, 128
        %v368 = vadd.s32 %v366, 256
        %v369 = vadd.s32 %v366, 384
        %v370 = vadd.s32 %v366, 512
        %v371 = vadd.s32 %v366, 640
        %v372 = vadd.s32 %v366, 768
        %v373 = vadd.s32 %v366, 896
        %v374 = vand.u32 %v366, 31
        %v375 = vand.u32 %v367, 31
        %v376 = vand.u32 %v368, 31
        %v377 = vand.u32 %v369, 31
        %v378 = vand.u32 %v370, 31
        %v379 = vand.u32 %v371, 31
        %v380 = vand.u32 %v372, 31
        %v381 = vand.u32 %v373, 31
        %vm382 = vcmp.ne.s32.totalorder %v374, 0
        %vm383 = vcmp.ne.s32.totalorder %v375, 0
        %vm384 = vcmp.ne.s32.totalorder %v376, 0
        %vm385 = vcmp.ne.s32.totalorder %v377, 0
        %vm386 = vcmp.ne.s32.totalorder %v378, 0
        %vm387 = vcmp.ne.s32.totalorder %v379, 0
        %vm388 = vcmp.ne.s32.totalorder %v380, 0
        %vm389 = vcmp.ne.s32.totalorder %v381, 0
        %v390 = vsel %vm382, 1, 0
        %v391 = vsel %vm383, 1, 0
        %v392 = vsel %vm384, 1, 0
        %v393 = vsel %vm385, 1, 0
        %v394 = vsel %vm386, 1, 0
        %v395 = vsel %vm387, 1, 0
        %v396 = vsel %vm388, 1, 0
        %v397 = vsel %vm389, 1, 0
        %v398 = vcvt.s32.f32 %v390
        %v399 = vcvt.s32.f32 %v391
        %v400 = vcvt.s32.f32 %v392
        %v401 = vcvt.s32.f32 %v393
        %v402 = vcvt.s32.f32 %v394
        %v403 = vcvt.s32.f32 %v395
        %v404 = vcvt.s32.f32 %v396
        %v405 = vcvt.s32.f32 %v397
        %vm406 = vcmp.ne.s32.totalorder %v374, 31
        %vm407 = vcmp.ne.s32.totalorder %v375, 31
        %vm408 = vcmp.ne.s32.totalorder %v376, 31
        %vm409 = vcmp.ne.s32.totalorder %v377, 31
        %vm410 = vcmp.ne.s32.totalorder %v378, 31
        %vm411 = vcmp.ne.s32.totalorder %v379, 31
        %vm412 = vcmp.ne.s32.totalorder %v380, 31
        %vm413 = vcmp.ne.s32.totalorder %v381, 31
        %v414 = vsel %vm406, 1, 0
        %v415 = vsel %vm407, 1, 0
        %v416 = vsel %vm408, 1, 0
        %v417 = vsel %vm409, 1, 0
        %v418 = vsel %vm410, 1, 0
        %v419 = vsel %vm411, 1, 0
        %v420 = vsel %vm412, 1, 0
        %v421 = vsel %vm413, 1, 0
        %v422 = vcvt.s32.f32 %v414
        %v423 = vcvt.s32.f32 %v415
        %v424 = vcvt.s32.f32 %v416
        %v425 = vcvt.s32.f32 %v417
        %v426 = vcvt.s32.f32 %v418
        %v427 = vcvt.s32.f32 %v419
        %v428 = vcvt.s32.f32 %v420
        %v429 = vcvt.s32.f32 %v421
        %v430 = vld [vmem:[#allocation2] sm:$0x77]
        %v431 = vld [vmem:[#allocation2 + $0x8] sm:$0x77]
        %v432 = vld [vmem:[#allocation2 + $0x10] sm:$0x77]
        %v433 = vld [vmem:[#allocation2 + $0x18] sm:$0x77]
        %v442 = vcombine.low %v398, %v399
        %v443 = vcombine.low %v400, %v401
        %v444 = vcombine.low %v402, %v403
        %v445 = vcombine.low %v404, %v405
        %v450 = vmul.f32 %v430, %v442
        %v451 = vmul.f32 %v431, %v443
        %v452 = vmul.f32 %v432, %v444
        %v453 = vmul.f32 %v433, %v445
        %v454 = vld [vmem:[%s1] sm:$0xff]
        %v455 = vld [vmem:[#allocation2 + $0x20] sm:$0x7]
        %457 = vrot.lane.b32.xlu0 %v454, 125
        %v458 = vpop.permute.xlu0 %457
        %v464 = vcombine.high %v430, %v430
        %v465 = vcombine.high %v431, %v431
        %v466 = vcombine.high %v432, %v432
        %v467 = vcombine.high %v433, %v433
        %468 = vrot.lane.b32.xlu0 %v430, 127
        %v469 = vpop.permute.xlu0 %468
        %470 = vrot.lane.b32.xlu0 %v464, 127
        %v471 = vpop.permute.xlu0 %470
        %472 = vrot.lane.b32.xlu0 %v431, 127
        %v473 = vpop.permute.xlu0 %472
        %474 = vrot.lane.b32.xlu0 %v465, 127
        %v475 = vpop.permute.xlu0 %474
        %476 = vrot.lane.b32.xlu0 %v432, 127
        %v477 = vpop.permute.xlu0 %476
        %478 = vrot.lane.b32.xlu0 %v466, 127
        %v479 = vpop.permute.xlu0 %478
        %480 = vrot.lane.b32.xlu0 %v433, 127
        %v481 = vpop.permute.xlu0 %480
        %482 = vrot.lane.b32.xlu0 %v467, 127
        %v483 = vpop.permute.xlu0 %482
        %484 = vrot.lane.b32.xlu0 %v455, 127
        %v485 = vpop.permute.xlu0 %484
        %vm486 = vcmask 1039360
        %v487 = vsel %vm486, %v469, %v471
        %v488 = vsel %vm486, %v471, %v473
        %v489 = vsel %vm486, %v473, %v475
        %v490 = vsel %vm486, %v475, %v477
        %v491 = vsel %vm486, %v477, %v479
        %v492 = vsel %vm486, %v479, %v481
        %v493 = vsel %vm486, %v481, %v483
        %v494 = vsel %vm486, %v483, %v485
        %vm495 = vcmask 23552
        %v496 = vsel %vm495, %v458, 0
        %vm498 = vcmask 1042432
        %v499 = vsel %vm498, %v487, 0
        %v501 = vsel %vm498, %v488, 0
        %v503 = vsel %vm498, %v489, 0
        %v505 = vsel %vm498, %v490, 0
        %v507 = vsel %vm498, %v491, 0
        %v509 = vsel %vm498, %v492, 0
        %v511 = vsel %vm498, %v493, 0
        %v513 = vsel %vm498, %v494, 0
        %515 = vmatprep.subr.mxu0 %v501
        %516 = vmatpush1.msra.mxu0 %v499
        %517 = vmatprep.subr.mxu0 0.0
        %518 = vmatpush1.msra.mxu0 0.0
        %519 = vmatprep.subr.mxu0 0.0
        %520 = vmatpush1.msra.mxu0 0.0
        %521 = vmatprep.subr.mxu0 0.0
        %522 = vmatpush1.msra.mxu0 0.0
        %523 = vmatprep.subr.mxu0 0.0
        %524 = vmatpush1.msra.mxu0 0.0
        %525 = vmatprep.subr.mxu0 0.0
        %526 = vmatpush1.msra.mxu0 0.0
        %527 = vmatprep.subr.mxu0 0.0
        %528 = vmatpush1.msra.mxu0 0.0
        %529 = vmatprep.subr.mxu0 0.0
        %530 = vmatpush1.msra.mxu0 0.0
        %531 = vmatprep.subr.mxu0 0.0
        %532 = vmatpush1.msra.mxu0 0.0
        %533 = vmatprep.subr.mxu0 0.0
        %534 = vmatpush1.msra.mxu0 0.0
        %535 = vmatprep.subr.mxu0 0.0
        %536 = vmatpush1.msra.mxu0 0.0
        %537 = vmatprep.subr.mxu0 0.0
        %538 = vmatpush1.msra.mxu0 0.0
        %539 = vmatprep.subr.mxu0 0.0
        %540 = vmatpush1.msra.mxu0 0.0
        %541 = vmatprep.subr.mxu0 0.0
        %542 = vmatpush1.msra.mxu0 0.0
        %543 = vmatprep.subr.mxu0 0.0
        %544 = vmatpush1.msra.mxu0 0.0
        %545 = vmatprep.subr.mxu0 0.0
        %546 = vmatpush1.msra.mxu0 0.0
        %547 = vmatprep.subr.mxu0 0.0
        %548 = vmatpush1.msra.mxu0 0.0
        %549 = vmatprep.subr.mxu0 0.0
        %550 = vmatpush1.msra.mxu0 0.0
        %551 = vmatprep.subr.mxu0 0.0
        %552 = vmatpush1.msra.mxu0 0.0
        %553 = vmatprep.subr.mxu0 0.0
        %554 = vmatpush1.msra.mxu0 0.0
        %555 = vmatprep.subr.mxu0 0.0
        %556 = vmatpush1.msra.mxu0 0.0
        %557 = vmatprep.subr.mxu0 0.0
        %558 = vmatpush1.msra.mxu0 0.0
        %559 = vmatprep.subr.mxu0 0.0
        %560 = vmatpush1.msra.mxu0 0.0
        %561 = vmatprep.subr.mxu0 0.0
        %562 = vmatpush1.msra.mxu0 0.0
        %563 = vmatprep.subr.mxu0 0.0
        %564 = vmatpush1.msra.mxu0 0.0
        %565 = vmatprep.subr.mxu0 0.0
        %566 = vmatpush1.msra.mxu0 0.0
        %567 = vmatprep.subr.mxu0 0.0
        %568 = vmatpush1.msra.mxu0 0.0
        %569 = vmatprep.subr.mxu0 0.0
        %570 = vmatpush1.msra.mxu0 0.0
        %571 = vmatprep.subr.mxu0 0.0
        %572 = vmatpush1.msra.mxu0 0.0
        %573 = vmatprep.subr.mxu0 0.0
        %574 = vmatpush1.msra.mxu0 0.0
        %575 = vmatprep.subr.mxu0 0.0
        %576 = vmatpush1.msra.mxu0 0.0
        %577 = vmatprep.subr.mxu0 0.0
        %578 = vmatpush1.msra.mxu0 0.0
        %579 = vmatprep.mubr.f32.mxu0 0.0
        %580 = vmatmul.mubr.f32.gmra.mrb[0].mxu0 %v496
        %v581 = vpop.f32.mrb[0].mxu0
        %v582 = vadd.f32 0.0, %v581
        %v583 = vpop.f32.mrb[0].mxu0
        %v584 = vadd.f32 0.0, %v583
        %585 = vdwg.mxu0
        %586 = vmatprep.subr.mxu0 %v505
        %587 = vmatpush1.msra.mxu0 %v503
        %588 = vmatprep.subr.mxu0 0.0
        %589 = vmatpush1.msra.mxu0 0.0
        %590 = vmatprep.subr.mxu0 0.0
        %591 = vmatpush1.msra.mxu0 0.0
        %592 = vmatprep.subr.mxu0 0.0
        %593 = vmatpush1.msra.mxu0 0.0
        %594 = vmatprep.subr.mxu0 0.0
        %595 = vmatpush1.msra.mxu0 0.0
        %596 = vmatprep.subr.mxu0 0.0
        %597 = vmatpush1.msra.mxu0 0.0
        %598 = vmatprep.subr.mxu0 0.0
        %599 = vmatpush1.msra.mxu0 0.0
        %600 = vmatprep.subr.mxu0 0.0
        %601 = vmatpush1.msra.mxu0 0.0
        %602 = vmatprep.subr.mxu0 0.0
        %603 = vmatpush1.msra.mxu0 0.0
        %604 = vmatprep.subr.mxu0 0.0
        %605 = vmatpush1.msra.mxu0 0.0
        %606 = vmatprep.subr.mxu0 0.0
        %607 = vmatpush1.msra.mxu0 0.0
        %608 = vmatprep.subr.mxu0 0.0
        %609 = vmatpush1.msra.mxu0 0.0
        %610 = vmatprep.subr.mxu0 0.0
        %611 = vmatpush1.msra.mxu0 0.0
        %612 = vmatprep.subr.mxu0 0.0
        %613 = vmatpush1.msra.mxu0 0.0
        %614 = vmatprep.subr.mxu0 0.0
        %615 = vmatpush1.msra.mxu0 0.0
        %616 = vmatprep.subr.mxu0 0.0
        %617 = vmatpush1.msra.mxu0 0.0
        %618 = vmatprep.subr.mxu0 0.0
        %619 = vmatpush1.msra.mxu0 0.0
        %620 = vmatprep.subr.mxu0 0.0
        %621 = vmatpush1.msra.mxu0 0.0
        %622 = vmatprep.subr.mxu0 0.0
        %623 = vmatpush1.msra.mxu0 0.0
        %624 = vmatprep.subr.mxu0 0.0
        %625 = vmatpush1.msra.mxu0 0.0
        %626 = vmatprep.subr.mxu0 0.0
        %627 = vmatpush1.msra.mxu0 0.0
        %628 = vmatprep.subr.mxu0 0.0
        %629 = vmatpush1.msra.mxu0 0.0
        %630 = vmatprep.subr.mxu0 0.0
        %631 = vmatpush1.msra.mxu0 0.0
        %632 = vmatprep.subr.mxu0 0.0
        %633 = vmatpush1.msra.mxu0 0.0
        %634 = vmatprep.subr.mxu0 0.0
        %635 = vmatpush1.msra.mxu0 0.0
        %636 = vmatprep.subr.mxu0 0.0
        %637 = vmatpush1.msra.mxu0 0.0
        %638 = vmatprep.subr.mxu0 0.0
        %639 = vmatpush1.msra.mxu0 0.0
        %640 = vmatprep.subr.mxu0 0.0
        %641 = vmatpush1.msra.mxu0 0.0
        %642 = vmatprep.subr.mxu0 0.0
        %643 = vmatpush1.msra.mxu0 0.0
        %644 = vmatprep.subr.mxu0 0.0
        %645 = vmatpush1.msra.mxu0 0.0
        %646 = vmatprep.subr.mxu0 0.0
        %647 = vmatpush1.msra.mxu0 0.0
        %648 = vmatprep.subr.mxu0 0.0
        %649 = vmatpush1.msra.mxu0 0.0
        %650 = vmatprep.mubr.f32.mxu0 0.0
        %651 = vmatmul.mubr.f32.gmra.mrb[0].mxu0 %v496
        %v652 = vpop.f32.mrb[0].mxu0
        %v653 = vadd.f32 0.0, %v652
        %v654 = vpop.f32.mrb[0].mxu0
        %v655 = vadd.f32 0.0, %v654
        %656 = vdwg.mxu0
        %657 = vmatprep.subr.mxu0 %v509
        %658 = vmatpush1.msra.mxu0 %v507
        %659 = vmatprep.subr.mxu0 0.0
        %660 = vmatpush1.msra.mxu0 0.0
        %661 = vmatprep.subr.mxu0 0.0
        %662 = vmatpush1.msra.mxu0 0.0
        %663 = vmatprep.subr.mxu0 0.0
        %664 = vmatpush1.msra.mxu0 0.0
        %665 = vmatprep.subr.mxu0 0.0
        %666 = vmatpush1.msra.mxu0 0.0
        %667 = vmatprep.subr.mxu0 0.0
        %668 = vmatpush1.msra.mxu0 0.0
        %669 = vmatprep.subr.mxu0 0.0
        %670 = vmatpush1.msra.mxu0 0.0
        %671 = vmatprep.subr.mxu0 0.0
        %672 = vmatpush1.msra.mxu0 0.0
        %673 = vmatprep.subr.mxu0 0.0
        %674 = vmatpush1.msra.mxu0 0.0
        %675 = vmatprep.subr.mxu0 0.0
        %676 = vmatpush1.msra.mxu0 0.0
        %677 = vmatprep.subr.mxu0 0.0
        %678 = vmatpush1.msra.mxu0 0.0
        %679 = vmatprep.subr.mxu0 0.0
        %680 = vmatpush1.msra.mxu0 0.0
        %681 = vmatprep.subr.mxu0 0.0
        %682 = vmatpush1.msra.mxu0 0.0
        %683 = vmatprep.subr.mxu0 0.0
        %684 = vmatpush1.msra.mxu0 0.0
        %685 = vmatprep.subr.mxu0 0.0
        %686 = vmatpush1.msra.mxu0 0.0
        %687 = vmatprep.subr.mxu0 0.0
        %688 = vmatpush1.msra.mxu0 0.0
        %689 = vmatprep.subr.mxu0 0.0
        %690 = vmatpush1.msra.mxu0 0.0
        %691 = vmatprep.subr.mxu0 0.0
        %692 = vmatpush1.msra.mxu0 0.0
        %693 = vmatprep.subr.mxu0 0.0
        %694 = vmatpush1.msra.mxu0 0.0
        %695 = vmatprep.subr.mxu0 0.0
        %696 = vmatpush1.msra.mxu0 0.0
        %697 = vmatprep.subr.mxu0 0.0
        %698 = vmatpush1.msra.mxu0 0.0
        %699 = vmatprep.subr.mxu0 0.0
        %700 = vmatpush1.msra.mxu0 0.0
        %701 = vmatprep.subr.mxu0 0.0
        %702 = vmatpush1.msra.mxu0 0.0
        %703 = vmatprep.subr.mxu0 0.0
        %704 = vmatpush1.msra.mxu0 0.0
        %705 = vmatprep.subr.mxu0 0.0
        %706 = vmatpush1.msra.mxu0 0.0
        %707 = vmatprep.subr.mxu0 0.0
        %708 = vmatpush1.msra.mxu0 0.0
        %709 = vmatprep.subr.mxu0 0.0
        %710 = vmatpush1.msra.mxu0 0.0
        %711 = vmatprep.subr.mxu0 0.0
        %712 = vmatpush1.msra.mxu0 0.0
        %713 = vmatprep.subr.mxu0 0.0
        %714 = vmatpush1.msra.mxu0 0.0
        %715 = vmatprep.subr.mxu0 0.0
        %716 = vmatpush1.msra.mxu0 0.0
        %717 = vmatprep.subr.mxu0 0.0
        %718 = vmatpush1.msra.mxu0 0.0
        %719 = vmatprep.subr.mxu0 0.0
        %720 = vmatpush1.msra.mxu0 0.0
        %721 = vmatprep.mubr.f32.mxu0 0.0
        %722 = vmatmul.mubr.f32.gmra.mrb[0].mxu0 %v496
        %v723 = vpop.f32.mrb[0].mxu0
        %v724 = vadd.f32 0.0, %v723
        %v725 = vpop.f32.mrb[0].mxu0
        %v726 = vadd.f32 0.0, %v725
        %727 = vdwg.mxu0
        %728 = vmatprep.subr.mxu0 %v513
        %729 = vmatpush1.msra.mxu0 %v511
        %730 = vmatprep.subr.mxu0 0.0
        %731 = vmatpush1.msra.mxu0 0.0
        %732 = vmatprep.subr.mxu0 0.0
        %733 = vmatpush1.msra.mxu0 0.0
        %734 = vmatprep.subr.mxu0 0.0
        %735 = vmatpush1.msra.mxu0 0.0
        %736 = vmatprep.subr.mxu0 0.0
        %737 = vmatpush1.msra.mxu0 0.0
        %738 = vmatprep.subr.mxu0 0.0
        %739 = vmatpush1.msra.mxu0 0.0
        %740 = vmatprep.subr.mxu0 0.0
        %741 = vmatpush1.msra.mxu0 0.0
        %742 = vmatprep.subr.mxu0 0.0
        %743 = vmatpush1.msra.mxu0 0.0
        %744 = vmatprep.subr.mxu0 0.0
        %745 = vmatpush1.msra.mxu0 0.0
        %746 = vmatprep.subr.mxu0 0.0
        %747 = vmatpush1.msra.mxu0 0.0
        %748 = vmatprep.subr.mxu0 0.0
        %749 = vmatpush1.msra.mxu0 0.0
        %750 = vmatprep.subr.mxu0 0.0
        %751 = vmatpush1.msra.mxu0 0.0
        %752 = vmatprep.subr.mxu0 0.0
        %753 = vmatpush1.msra.mxu0 0.0
        %754 = vmatprep.subr.mxu0 0.0
        %755 = vmatpush1.msra.mxu0 0.0
        %756 = vmatprep.subr.mxu0 0.0
        %757 = vmatpush1.msra.mxu0 0.0
        %758 = vmatprep.subr.mxu0 0.0
        %759 = vmatpush1.msra.mxu0 0.0
        %760 = vmatprep.subr.mxu0 0.0
        %761 = vmatpush1.msra.mxu0 0.0
        %762 = vmatprep.subr.mxu0 0.0
        %763 = vmatpush1.msra.mxu0 0.0
        %764 = vmatprep.subr.mxu0 0.0
        %765 = vmatpush1.msra.mxu0 0.0
        %766 = vmatprep.subr.mxu0 0.0
        %767 = vmatpush1.msra.mxu0 0.0
        %768 = vmatprep.subr.mxu0 0.0
        %769 = vmatpush1.msra.mxu0 0.0
        %770 = vmatprep.subr.mxu0 0.0
        %771 = vmatpush1.msra.mxu0 0.0
        %772 = vmatprep.subr.mxu0 0.0
        %773 = vmatpush1.msra.mxu0 0.0
        %774 = vmatprep.subr.mxu0 0.0
        %775 = vmatpush1.msra.mxu0 0.0
        %776 = vmatprep.subr.mxu0 0.0
        %777 = vmatpush1.msra.mxu0 0.0
        %778 = vmatprep.subr.mxu0 0.0
        %779 = vmatpush1.msra.mxu0 0.0
        %780 = vmatprep.subr.mxu0 0.0
        %781 = vmatpush1.msra.mxu0 0.0
        %782 = vmatprep.subr.mxu0 0.0
        %783 = vmatpush1.msra.mxu0 0.0
        %784 = vmatprep.subr.mxu0 0.0
        %785 = vmatpush1.msra.mxu0 0.0
        %786 = vmatprep.subr.mxu0 0.0
        %787 = vmatpush1.msra.mxu0 0.0
        %788 = vmatprep.subr.mxu0 0.0
        %789 = vmatpush1.msra.mxu0 0.0
        %790 = vmatprep.subr.mxu0 0.0
        %791 = vmatpush1.msra.mxu0 0.0
        %792 = vmatprep.mubr.f32.mxu0 0.0
        %793 = vmatmul.mubr.f32.gmra.mrb[0].mxu0 %v496
        %v794 = vpop.f32.mrb[0].mxu0
        %v795 = vadd.f32 0.0, %v794
        %v796 = vpop.f32.mrb[0].mxu0
        %v797 = vadd.f32 0.0, %v796
        %798 = vdwg.mxu0
        %v803 = vcombine.high %v450, %v450
        %v804 = vcombine.high %v451, %v451
        %v805 = vcombine.high %v452, %v452
        %v806 = vcombine.high %v453, %v453
        %v807 = vsel %vm495, %v454, 0
        %v809 = vsel %vm498, %v450, 0
        %v811 = vsel %vm498, %v803, 0
        %v813 = vsel %vm498, %v451, 0
        %v815 = vsel %vm498, %v804, 0
        %v817 = vsel %vm498, %v452, 0
        %v819 = vsel %vm498, %v805, 0
        %v821 = vsel %vm498, %v453, 0
        %v823 = vsel %vm498, %v806, 0
        %825 = vmatprep.subr.mxu0 %v811
        %826 = vmatpush1.msra.mxu0 %v809
        %827 = vmatprep.subr.mxu0 0.0
        %828 = vmatpush1.msra.mxu0 0.0
        %829 = vmatprep.subr.mxu0 0.0
        %830 = vmatpush1.msra.mxu0 0.0
        %831 = vmatprep.subr.mxu0 0.0
        %832 = vmatpush1.msra.mxu0 0.0
        %833 = vmatprep.subr.mxu0 0.0
        %834 = vmatpush1.msra.mxu0 0.0
        %835 = vmatprep.subr.mxu0 0.0
        %836 = vmatpush1.msra.mxu0 0.0
        %837 = vmatprep.subr.mxu0 0.0
        %838 = vmatpush1.msra.mxu0 0.0
        %839 = vmatprep.subr.mxu0 0.0
        %840 = vmatpush1.msra.mxu0 0.0
        %841 = vmatprep.subr.mxu0 0.0
        %842 = vmatpush1.msra.mxu0 0.0
        %843 = vmatprep.subr.mxu0 0.0
        %844 = vmatpush1.msra.mxu0 0.0
        %845 = vmatprep.subr.mxu0 0.0
        %846 = vmatpush1.msra.mxu0 0.0
        %847 = vmatprep.subr.mxu0 0.0
        %848 = vmatpush1.msra.mxu0 0.0
        %849 = vmatprep.subr.mxu0 0.0
        %850 = vmatpush1.msra.mxu0 0.0
        %851 = vmatprep.subr.mxu0 0.0
        %852 = vmatpush1.msra.mxu0 0.0
        %853 = vmatprep.subr.mxu0 0.0
        %854 = vmatpush1.msra.mxu0 0.0
        %855 = vmatprep.subr.mxu0 0.0
        %856 = vmatpush1.msra.mxu0 0.0
        %857 = vmatprep.subr.mxu0 0.0
        %858 = vmatpush1.msra.mxu0 0.0
        %859 = vmatprep.subr.mxu0 0.0
        %860 = vmatpush1.msra.mxu0 0.0
        %861 = vmatprep.subr.mxu0 0.0
        %862 = vmatpush1.msra.mxu0 0.0
        %863 = vmatprep.subr.mxu0 0.0
        %864 = vmatpush1.msra.mxu0 0.0
        %865 = vmatprep.subr.mxu0 0.0
        %866 = vmatpush1.msra.mxu0 0.0
        %867 = vmatprep.subr.mxu0 0.0
        %868 = vmatpush1.msra.mxu0 0.0
        %869 = vmatprep.subr.mxu0 0.0
        %870 = vmatpush1.msra.mxu0 0.0
        %871 = vmatprep.subr.mxu0 0.0
        %872 = vmatpush1.msra.mxu0 0.0
        %873 = vmatprep.subr.mxu0 0.0
        %874 = vmatpush1.msra.mxu0 0.0
        %875 = vmatprep.subr.mxu0 0.0
        %876 = vmatpush1.msra.mxu0 0.0
        %877 = vmatprep.subr.mxu0 0.0
        %878 = vmatpush1.msra.mxu0 0.0
        %879 = vmatprep.subr.mxu0 0.0
        %880 = vmatpush1.msra.mxu0 0.0
        %881 = vmatprep.subr.mxu0 0.0
        %882 = vmatpush1.msra.mxu0 0.0
        %883 = vmatprep.subr.mxu0 0.0
        %884 = vmatpush1.msra.mxu0 0.0
        %885 = vmatprep.subr.mxu0 0.0
        %886 = vmatpush1.msra.mxu0 0.0
        %887 = vmatprep.subr.mxu0 0.0
        %888 = vmatpush1.msra.mxu0 0.0
        %889 = vmatprep.mubr.f32.mxu0 0.0
        %890 = vmatmul.mubr.f32.gmra.mrb[0].mxu0 %v807
        %v891 = vpop.f32.mrb[0].mxu0
        %v892 = vadd.f32 %v582, %v891
        %v893 = vpop.f32.mrb[0].mxu0
        %v894 = vadd.f32 %v584, %v893
        %895 = vdwg.mxu0
        %896 = vmatprep.subr.mxu0 %v815
        %897 = vmatpush1.msra.mxu0 %v813
        %898 = vmatprep.subr.mxu0 0.0
        %899 = vmatpush1.msra.mxu0 0.0
        %900 = vmatprep.subr.mxu0 0.0
        %901 = vmatpush1.msra.mxu0 0.0
        %902 = vmatprep.subr.mxu0 0.0
        %903 = vmatpush1.msra.mxu0 0.0
        %904 = vmatprep.subr.mxu0 0.0
        %905 = vmatpush1.msra.mxu0 0.0
        %906 = vmatprep.subr.mxu0 0.0
        %907 = vmatpush1.msra.mxu0 0.0
        %908 = vmatprep.subr.mxu0 0.0
        %909 = vmatpush1.msra.mxu0 0.0
        %910 = vmatprep.subr.mxu0 0.0
        %911 = vmatpush1.msra.mxu0 0.0
        %912 = vmatprep.subr.mxu0 0.0
        %913 = vmatpush1.msra.mxu0 0.0
        %914 = vmatprep.subr.mxu0 0.0
        %915 = vmatpush1.msra.mxu0 0.0
        %916 = vmatprep.subr.mxu0 0.0
        %917 = vmatpush1.msra.mxu0 0.0
        %918 = vmatprep.subr.mxu0 0.0
        %919 = vmatpush1.msra.mxu0 0.0
        %920 = vmatprep.subr.mxu0 0.0
        %921 = vmatpush1.msra.mxu0 0.0
        %922 = vmatprep.subr.mxu0 0.0
        %923 = vmatpush1.msra.mxu0 0.0
        %924 = vmatprep.subr.mxu0 0.0
        %925 = vmatpush1.msra.mxu0 0.0
        %926 = vmatprep.subr.mxu0 0.0
        %927 = vmatpush1.msra.mxu0 0.0
        %928 = vmatprep.subr.mxu0 0.0
        %929 = vmatpush1.msra.mxu0 0.0
        %930 = vmatprep.subr.mxu0 0.0
        %931 = vmatpush1.msra.mxu0 0.0
        %932 = vmatprep.subr.mxu0 0.0
        %933 = vmatpush1.msra.mxu0 0.0
        %934 = vmatprep.subr.mxu0 0.0
        %935 = vmatpush1.msra.mxu0 0.0
        %936 = vmatprep.subr.mxu0 0.0
        %937 = vmatpush1.msra.mxu0 0.0
        %938 = vmatprep.subr.mxu0 0.0
        %939 = vmatpush1.msra.mxu0 0.0
        %940 = vmatprep.subr.mxu0 0.0
        %941 = vmatpush1.msra.mxu0 0.0
        %942 = vmatprep.subr.mxu0 0.0
        %943 = vmatpush1.msra.mxu0 0.0
        %944 = vmatprep.subr.mxu0 0.0
        %945 = vmatpush1.msra.mxu0 0.0
        %946 = vmatprep.subr.mxu0 0.0
        %947 = vmatpush1.msra.mxu0 0.0
        %948 = vmatprep.subr.mxu0 0.0
        %949 = vmatpush1.msra.mxu0 0.0
        %950 = vmatprep.subr.mxu0 0.0
        %951 = vmatpush1.msra.mxu0 0.0
        %952 = vmatprep.subr.mxu0 0.0
        %953 = vmatpush1.msra.mxu0 0.0
        %954 = vmatprep.subr.mxu0 0.0
        %955 = vmatpush1.msra.mxu0 0.0
        %956 = vmatprep.subr.mxu0 0.0
        %957 = vmatpush1.msra.mxu0 0.0
        %958 = vmatprep.subr.mxu0 0.0
        %959 = vmatpush1.msra.mxu0 0.0
        %960 = vmatprep.mubr.f32.mxu0 0.0
        %961 = vmatmul.mubr.f32.gmra.mrb[0].mxu0 %v807
        %v962 = vpop.f32.mrb[0].mxu0
        %v963 = vadd.f32 %v653, %v962
        %v964 = vpop.f32.mrb[0].mxu0
        %v965 = vadd.f32 %v655, %v964
        %966 = vdwg.mxu0
        %967 = vmatprep.subr.mxu0 %v819
        %968 = vmatpush1.msra.mxu0 %v817
        %969 = vmatprep.subr.mxu0 0.0
        %970 = vmatpush1.msra.mxu0 0.0
        %971 = vmatprep.subr.mxu0 0.0
        %972 = vmatpush1.msra.mxu0 0.0
        %973 = vmatprep.subr.mxu0 0.0
        %974 = vmatpush1.msra.mxu0 0.0
        %975 = vmatprep.subr.mxu0 0.0
        %976 = vmatpush1.msra.mxu0 0.0
        %977 = vmatprep.subr.mxu0 0.0
        %978 = vmatpush1.msra.mxu0 0.0
        %979 = vmatprep.subr.mxu0 0.0
        %980 = vmatpush1.msra.mxu0 0.0
        %981 = vmatprep.subr.mxu0 0.0
        %982 = vmatpush1.msra.mxu0 0.0
        %983 = vmatprep.subr.mxu0 0.0
        %984 = vmatpush1.msra.mxu0 0.0
        %985 = vmatprep.subr.mxu0 0.0
        %986 = vmatpush1.msra.mxu0 0.0
        %987 = vmatprep.subr.mxu0 0.0
        %988 = vmatpush1.msra.mxu0 0.0
        %989 = vmatprep.subr.mxu0 0.0
        %990 = vmatpush1.msra.mxu0 0.0
        %991 = vmatprep.subr.mxu0 0.0
        %992 = vmatpush1.msra.mxu0 0.0
        %993 = vmatprep.subr.mxu0 0.0
        %994 = vmatpush1.msra.mxu0 0.0
        %995 = vmatprep.subr.mxu0 0.0
        %996 = vmatpush1.msra.mxu0 0.0
        %997 = vmatprep.subr.mxu0 0.0
        %998 = vmatpush1.msra.mxu0 0.0
        %999 = vmatprep.subr.mxu0 0.0
        %1000 = vmatpush1.msra.mxu0 0.0
        %1001 = vmatprep.subr.mxu0 0.0
        %1002 = vmatpush1.msra.mxu0 0.0
        %1003 = vmatprep.subr.mxu0 0.0
        %1004 = vmatpush1.msra.mxu0 0.0
        %1005 = vmatprep.subr.mxu0 0.0
        %1006 = vmatpush1.msra.mxu0 0.0
        %1007 = vmatprep.subr.mxu0 0.0
        %1008 = vmatpush1.msra.mxu0 0.0
        %1009 = vmatprep.subr.mxu0 0.0
        %1010 = vmatpush1.msra.mxu0 0.0
        %1011 = vmatprep.subr.mxu0 0.0
        %1012 = vmatpush1.msra.mxu0 0.0
        %1013 = vmatprep.subr.mxu0 0.0
        %1014 = vmatpush1.msra.mxu0 0.0
        %1015 = vmatprep.subr.mxu0 0.0
        %1016 = vmatpush1.msra.mxu0 0.0
        %1017 = vmatprep.subr.mxu0 0.0
        %1018 = vmatpush1.msra.mxu0 0.0
        %1019 = vmatprep.subr.mxu0 0.0
        %1020 = vmatpush1.msra.mxu0 0.0
        %1021 = vmatprep.subr.mxu0 0.0
        %1022 = vmatpush1.msra.mxu0 0.0
        %1023 = vmatprep.subr.mxu0 0.0
        %1024 = vmatpush1.msra.mxu0 0.0
        %1025 = vmatprep.subr.mxu0 0.0
        %1026 = vmatpush1.msra.mxu0 0.0
        %1027 = vmatprep.subr.mxu0 0.0
        %1028 = vmatpush1.msra.mxu0 0.0
        %1029 = vmatprep.subr.mxu0 0.0
        %1030 = vmatpush1.msra.mxu0 0.0
        %1031 = vmatprep.mubr.f32.mxu0 0.0
        %1032 = vmatmul.mubr.f32.gmra.mrb[0].mxu0 %v807
        %v1033 = vpop.f32.mrb[0].mxu0
        %v1034 = vadd.f32 %v724, %v1033
        %v1035 = vpop.f32.mrb[0].mxu0
        %v1036 = vadd.f32 %v726, %v1035
        %1037 = vdwg.mxu0
        %1038 = vmatprep.subr.mxu0 %v823
        %1039 = vmatpush1.msra.mxu0 %v821
        %1040 = vmatprep.subr.mxu0 0.0
        %1041 = vmatpush1.msra.mxu0 0.0
        %1042 = vmatprep.subr.mxu0 0.0
        %1043 = vmatpush1.msra.mxu0 0.0
        %1044 = vmatprep.subr.mxu0 0.0
        %1045 = vmatpush1.msra.mxu0 0.0
        %1046 = vmatprep.subr.mxu0 0.0
        %1047 = vmatpush1.msra.mxu0 0.0
        %1048 = vmatprep.subr.mxu0 0.0
        %1049 = vmatpush1.msra.mxu0 0.0
        %1050 = vmatprep.subr.mxu0 0.0
        %1051 = vmatpush1.msra.mxu0 0.0
        %1052 = vmatprep.subr.mxu0 0.0
        %1053 = vmatpush1.msra.mxu0 0.0
        %1054 = vmatprep.subr.mxu0 0.0
        %1055 = vmatpush1.msra.mxu0 0.0
        %1056 = vmatprep.subr.mxu0 0.0
        %1057 = vmatpush1.msra.mxu0 0.0
        %1058 = vmatprep.subr.mxu0 0.0
        %1059 = vmatpush1.msra.mxu0 0.0
        %1060 = vmatprep.subr.mxu0 0.0
        %1061 = vmatpush1.msra.mxu0 0.0
        %1062 = vmatprep.subr.mxu0 0.0
        %1063 = vmatpush1.msra.mxu0 0.0
        %1064 = vmatprep.subr.mxu0 0.0
        %1065 = vmatpush1.msra.mxu0 0.0
        %1066 = vmatprep.subr.mxu0 0.0
        %1067 = vmatpush1.msra.mxu0 0.0
        %1068 = vmatprep.subr.mxu0 0.0
        %1069 = vmatpush1.msra.mxu0 0.0
        %1070 = vmatprep.subr.mxu0 0.0
        %1071 = vmatpush1.msra.mxu0 0.0
        %1072 = vmatprep.subr.mxu0 0.0
        %1073 = vmatpush1.msra.mxu0 0.0
        %1074 = vmatprep.subr.mxu0 0.0
        %1075 = vmatpush1.msra.mxu0 0.0
        %1076 = vmatprep.subr.mxu0 0.0
        %1077 = vmatpush1.msra.mxu0 0.0
        %1078 = vmatprep.subr.mxu0 0.0
        %1079 = vmatpush1.msra.mxu0 0.0
        %1080 = vmatprep.subr.mxu0 0.0
        %1081 = vmatpush1.msra.mxu0 0.0
        %1082 = vmatprep.subr.mxu0 0.0
        %1083 = vmatpush1.msra.mxu0 0.0
        %1084 = vmatprep.subr.mxu0 0.0
        %1085 = vmatpush1.msra.mxu0 0.0
        %1086 = vmatprep.subr.mxu0 0.0
        %1087 = vmatpush1.msra.mxu0 0.0
        %1088 = vmatprep.subr.mxu0 0.0
        %1089 = vmatpush1.msra.mxu0 0.0
        %1090 = vmatprep.subr.mxu0 0.0
        %1091 = vmatpush1.msra.mxu0 0.0
        %1092 = vmatprep.subr.mxu0 0.0
        %1093 = vmatpush1.msra.mxu0 0.0
        %1094 = vmatprep.subr.mxu0 0.0
        %1095 = vmatpush1.msra.mxu0 0.0
        %1096 = vmatprep.subr.mxu0 0.0
        %1097 = vmatpush1.msra.mxu0 0.0
        %1098 = vmatprep.subr.mxu0 0.0
        %1099 = vmatpush1.msra.mxu0 0.0
        %1100 = vmatprep.subr.mxu0 0.0
        %1101 = vmatpush1.msra.mxu0 0.0
        %1102 = vmatprep.mubr.f32.mxu0 0.0
        %1103 = vmatmul.mubr.f32.gmra.mrb[0].mxu0 %v807
        %v1104 = vpop.f32.mrb[0].mxu0
        %v1105 = vadd.f32 %v795, %v1104
        %v1106 = vpop.f32.mrb[0].mxu0
        %v1107 = vadd.f32 %v797, %v1106
        %1108 = vdwg.mxu0
        %v1109 = vld [vmem:[#allocation2] sm:$0x77]
        %v1110 = vld [vmem:[#allocation2 + $0x8] sm:$0x77]
        %v1111 = vld [vmem:[#allocation2 + $0x10] sm:$0x77]
        %v1112 = vld [vmem:[#allocation2 + $0x18] sm:$0x77]
        %v1113 = vld [vmem:[#allocation2 + $0x20] sm:$0x7]
        %v1122 = vcombine.low %v422, %v423
        %v1123 = vcombine.low %v424, %v425
        %v1124 = vcombine.low %v426, %v427
        %v1125 = vcombine.low %v428, %v429
        %1126 = vrot.lane.b32.xlu0 %v1122, 2
        %v1127 = vpop.permute.xlu0 %1126
        %1128 = vrot.lane.b32.xlu0 %v1123, 2
        %v1129 = vpop.permute.xlu0 %1128
        %1130 = vrot.lane.b32.xlu0 %v1124, 2
        %v1131 = vpop.permute.xlu0 %1130
        %1132 = vrot.lane.b32.xlu0 %v1125, 2
        %v1133 = vpop.permute.xlu0 %1132
        %v1134 = vrot.slane %v1127, 4
        %v1135 = vrot.slane %v1129, 4
        %v1136 = vrot.slane %v1131, 4
        %v1137 = vrot.slane %v1133, 4
        %vm1138 = vcmask 15360
        %v1139 = vsel %vm1138, %v1134, %v1127
        %v1140 = vsel %vm345, %v1134, %v1135
        %v1141 = vsel %vm1138, %v1140, %v1129
        %v1142 = vsel %vm345, %v1135, %v1136
        %v1143 = vsel %vm1138, %v1142, %v1131
        %v1144 = vsel %vm345, %v1136, %v1137
        %v1145 = vsel %vm1138, %v1144, %v1133
        %v1151 = vmul.f32 %v1109, %v1139
        %v1152 = vmul.f32 %v1110, %v1141
        %v1153 = vmul.f32 %v1111, %v1143
        %v1154 = vmul.f32 %v1112, %v1145
        %v1155 = vmul.f32 %v1113, %v1137
        %v1156 = vld [vmem:[%s1] sm:$0xff]
        %1158 = vrot.lane.b32.xlu0 %v1156, 122
        %v1159 = vpop.permute.xlu0 %1158
        %v1165 = vcombine.high %v1151, %v1151
        %v1166 = vcombine.high %v1152, %v1152
        %v1167 = vcombine.high %v1153, %v1153
        %v1168 = vcombine.high %v1154, %v1154
        %1169 = vrot.lane.b32.xlu0 %v1151, 126
        %v1170 = vpop.permute.xlu0 %1169
        %1171 = vrot.lane.b32.xlu0 %v1165, 126
        %v1172 = vpop.permute.xlu0 %1171
        %1173 = vrot.lane.b32.xlu0 %v1152, 126
        %v1174 = vpop.permute.xlu0 %1173
        %1175 = vrot.lane.b32.xlu0 %v1166, 126
        %v1176 = vpop.permute.xlu0 %1175
        %1177 = vrot.lane.b32.xlu0 %v1153, 126
        %v1178 = vpop.permute.xlu0 %1177
        %1179 = vrot.lane.b32.xlu0 %v1167, 126
        %v1180 = vpop.permute.xlu0 %1179
        %1181 = vrot.lane.b32.xlu0 %v1154, 126
        %v1182 = vpop.permute.xlu0 %1181
        %1183 = vrot.lane.b32.xlu0 %v1168, 126
        %v1184 = vpop.permute.xlu0 %1183
        %1185 = vrot.lane.b32.xlu0 %v1155, 126
        %v1186 = vpop.permute.xlu0 %1185
        %vm1187 = vcmask 1031168
        %v1188 = vsel %vm1187, %v1170, %v1172
        %v1189 = vsel %vm1187, %v1172, %v1174
        %v1190 = vsel %vm1187, %v1174, %v1176
        %v1191 = vsel %vm1187, %v1176, %v1178
        %v1192 = vsel %vm1187, %v1178, %v1180
        %v1193 = vsel %vm1187, %v1180, %v1182
        %v1194 = vsel %vm1187, %v1182, %v1184
        %v1195 = vsel %vm1187, %v1184, %v1186
        %v1196 = vsel %vm495, %v1159, 0
        %v1198 = vsel %vm498, %v1188, 0
        %v1200 = vsel %vm498, %v1189, 0
        %v1202 = vsel %vm498, %v1190, 0
        %v1204 = vsel %vm498, %v1191, 0
        %v1206 = vsel %vm498, %v1192, 0
        %v1208 = vsel %vm498, %v1193, 0
        %v1210 = vsel %vm498, %v1194, 0
        %v1212 = vsel %vm498, %v1195, 0
        %1214 = vmatprep.subr.mxu0 %v1200
        %1215 = vmatpush1.msra.mxu0 %v1198
        %1216 = vmatprep.subr.mxu0 0.0
        %1217 = vmatpush1.msra.mxu0 0.0
        %1218 = vmatprep.subr.mxu0 0.0
        %1219 = vmatpush1.msra.mxu0 0.0
        %1220 = vmatprep.subr.mxu0 0.0
        %1221 = vmatpush1.msra.mxu0 0.0
        %1222 = vmatprep.subr.mxu0 0.0
        %1223 = vmatpush1.msra.mxu0 0.0
        %1224 = vmatprep.subr.mxu0 0.0
        %1225 = vmatpush1.msra.mxu0 0.0
        %1226 = vmatprep.subr.mxu0 0.0
        %1227 = vmatpush1.msra.mxu0 0.0
        %1228 = vmatprep.subr.mxu0 0.0
        %1229 = vmatpush1.msra.mxu0 0.0
        %1230 = vmatprep.subr.mxu0 0.0
        %1231 = vmatpush1.msra.mxu0 0.0
        %1232 = vmatprep.subr.mxu0 0.0
        %1233 = vmatpush1.msra.mxu0 0.0
        %1234 = vmatprep.subr.mxu0 0.0
        %1235 = vmatpush1.msra.mxu0 0.0
        %1236 = vmatprep.subr.mxu0 0.0
        %1237 = vmatpush1.msra.mxu0 0.0
        %1238 = vmatprep.subr.mxu0 0.0
        %1239 = vmatpush1.msra.mxu0 0.0
        %1240 = vmatprep.subr.mxu0 0.0
        %1241 = vmatpush1.msra.mxu0 0.0
        %1242 = vmatprep.subr.mxu0 0.0
        %1243 = vmatpush1.msra.mxu0 0.0
        %1244 = vmatprep.subr.mxu0 0.0
        %1245 = vmatpush1.msra.mxu0 0.0
        %1246 = vmatprep.subr.mxu0 0.0
        %1247 = vmatpush1.msra.mxu0 0.0
        %1248 = vmatprep.subr.mxu0 0.0
        %1249 = vmatpush1.msra.mxu0 0.0
        %1250 = vmatprep.subr.mxu0 0.0
        %1251 = vmatpush1.msra.mxu0 0.0
        %1252 = vmatprep.subr.mxu0 0.0
        %1253 = vmatpush1.msra.mxu0 0.0
        %1254 = vmatprep.subr.mxu0 0.0
        %1255 = vmatpush1.msra.mxu0 0.0
        %1256 = vmatprep.subr.mxu0 0.0
        %1257 = vmatpush1.msra.mxu0 0.0
        %1258 = vmatprep.subr.mxu0 0.0
        %1259 = vmatpush1.msra.mxu0 0.0
        %1260 = vmatprep.subr.mxu0 0.0
        %1261 = vmatpush1.msra.mxu0 0.0
        %1262 = vmatprep.subr.mxu0 0.0
        %1263 = vmatpush1.msra.mxu0 0.0
        %1264 = vmatprep.subr.mxu0 0.0
        %1265 = vmatpush1.msra.mxu0 0.0
        %1266 = vmatprep.subr.mxu0 0.0
        %1267 = vmatpush1.msra.mxu0 0.0
        %1268 = vmatprep.subr.mxu0 0.0
        %1269 = vmatpush1.msra.mxu0 0.0
        %1270 = vmatprep.subr.mxu0 0.0
        %1271 = vmatpush1.msra.mxu0 0.0
        %1272 = vmatprep.subr.mxu0 0.0
        %1273 = vmatpush1.msra.mxu0 0.0
        %1274 = vmatprep.subr.mxu0 0.0
        %1275 = vmatpush1.msra.mxu0 0.0
        %1276 = vmatprep.subr.mxu0 0.0
        %1277 = vmatpush1.msra.mxu0 0.0
        %1278 = vmatprep.mubr.f32.mxu0 0.0
        %1279 = vmatmul.mubr.f32.gmra.mrb[0].mxu0 %v1196
        %v1280 = vpop.f32.mrb[0].mxu0
        %v1281 = vadd.f32 0.0, %v1280
        %v1282 = vpop.f32.mrb[0].mxu0
        %v1283 = vadd.f32 0.0, %v1282
        %1284 = vdwg.mxu0
        %1285 = vmatprep.subr.mxu0 %v1204
        %1286 = vmatpush1.msra.mxu0 %v1202
        %1287 = vmatprep.subr.mxu0 0.0
        %1288 = vmatpush1.msra.mxu0 0.0
        %1289 = vmatprep.subr.mxu0 0.0
        %1290 = vmatpush1.msra.mxu0 0.0
        %1291 = vmatprep.subr.mxu0 0.0
        %1292 = vmatpush1.msra.mxu0 0.0
        %1293 = vmatprep.subr.mxu0 0.0
        %1294 = vmatpush1.msra.mxu0 0.0
        %1295 = vmatprep.subr.mxu0 0.0
        %1296 = vmatpush1.msra.mxu0 0.0
        %1297 = vmatprep.subr.mxu0 0.0
        %1298 = vmatpush1.msra.mxu0 0.0
        %1299 = vmatprep.subr.mxu0 0.0
        %1300 = vmatpush1.msra.mxu0 0.0
        %1301 = vmatprep.subr.mxu0 0.0
        %1302 = vmatpush1.msra.mxu0 0.0
        %1303 = vmatprep.subr.mxu0 0.0
        %1304 = vmatpush1.msra.mxu0 0.0
        %1305 = vmatprep.subr.mxu0 0.0
        %1306 = vmatpush1.msra.mxu0 0.0
        %1307 = vmatprep.subr.mxu0 0.0
        %1308 = vmatpush1.msra.mxu0 0.0
        %1309 = vmatprep.subr.mxu0 0.0
        %1310 = vmatpush1.msra.mxu0 0.0
        %1311 = vmatprep.subr.mxu0 0.0
        %1312 = vmatpush1.msra.mxu0 0.0
        %1313 = vmatprep.subr.mxu0 0.0
        %1314 = vmatpush1.msra.mxu0 0.0
        %1315 = vmatprep.subr.mxu0 0.0
        %1316 = vmatpush1.msra.mxu0 0.0
        %1317 = vmatprep.subr.mxu0 0.0
        %1318 = vmatpush1.msra.mxu0 0.0
        %1319 = vmatprep.subr.mxu0 0.0
        %1320 = vmatpush1.msra.mxu0 0.0
        %1321 = vmatprep.subr.mxu0 0.0
        %1322 = vmatpush1.msra.mxu0 0.0
        %1323 = vmatprep.subr.mxu0 0.0
        %1324 = vmatpush1.msra.mxu0 0.0
        %1325 = vmatprep.subr.mxu0 0.0
        %1326 = vmatpush1.msra.mxu0 0.0
        %1327 = vmatprep.subr.mxu0 0.0
        %1328 = vmatpush1.msra.mxu0 0.0
        %1329 = vmatprep.subr.mxu0 0.0
        %1330 = vmatpush1.msra.mxu0 0.0
        %1331 = vmatprep.subr.mxu0 0.0
        %1332 = vmatpush1.msra.mxu0 0.0
        %1333 = vmatprep.subr.mxu0 0.0
        %1334 = vmatpush1.msra.mxu0 0.0
        %1335 = vmatprep.subr.mxu0 0.0
        %1336 = vmatpush1.msra.mxu0 0.0
        %1337 = vmatprep.subr.mxu0 0.0
        %1338 = vmatpush1.msra.mxu0 0.0
        %1339 = vmatprep.subr.mxu0 0.0
        %1340 = vmatpush1.msra.mxu0 0.0
        %1341 = vmatprep.subr.mxu0 0.0
        %1342 = vmatpush1.msra.mxu0 0.0
        %1343 = vmatprep.subr.mxu0 0.0
        %1344 = vmatpush1.msra.mxu0 0.0
        %1345 = vmatprep.subr.mxu0 0.0
        %1346 = vmatpush1.msra.mxu0 0.0
        %1347 = vmatprep.subr.mxu0 0.0
        %1348 = vmatpush1.msra.mxu0 0.0
        %1349 = vmatprep.mubr.f32.mxu0 0.0
        %1350 = vmatmul.mubr.f32.gmra.mrb[0].mxu0 %v1196
        %v1351 = vpop.f32.mrb[0].mxu0
        %v1352 = vadd.f32 0.0, %v1351
        %v1353 = vpop.f32.mrb[0].mxu0
        %v1354 = vadd.f32 0.0, %v1353
        %1355 = vdwg.mxu0
        %1356 = vmatprep.subr.mxu0 %v1208
        %1357 = vmatpush1.msra.mxu0 %v1206
        %1358 = vmatprep.subr.mxu0 0.0
        %1359 = vmatpush1.msra.mxu0 0.0
        %1360 = vmatprep.subr.mxu0 0.0
        %1361 = vmatpush1.msra.mxu0 0.0
        %1362 = vmatprep.subr.mxu0 0.0
        %1363 = vmatpush1.msra.mxu0 0.0
        %1364 = vmatprep.subr.mxu0 0.0
        %1365 = vmatpush1.msra.mxu0 0.0
        %1366 = vmatprep.subr.mxu0 0.0
        %1367 = vmatpush1.msra.mxu0 0.0
        %1368 = vmatprep.subr.mxu0 0.0
        %1369 = vmatpush1.msra.mxu0 0.0
        %1370 = vmatprep.subr.mxu0 0.0
        %1371 = vmatpush1.msra.mxu0 0.0
        %1372 = vmatprep.subr.mxu0 0.0
        %1373 = vmatpush1.msra.mxu0 0.0
        %1374 = vmatprep.subr.mxu0 0.0
        %1375 = vmatpush1.msra.mxu0 0.0
        %1376 = vmatprep.subr.mxu0 0.0
        %1377 = vmatpush1.msra.mxu0 0.0
        %1378 = vmatprep.subr.mxu0 0.0
        %1379 = vmatpush1.msra.mxu0 0.0
        %1380 = vmatprep.subr.mxu0 0.0
        %1381 = vmatpush1.msra.mxu0 0.0
        %1382 = vmatprep.subr.mxu0 0.0
        %1383 = vmatpush1.msra.mxu0 0.0
        %1384 = vmatprep.subr.mxu0 0.0
        %1385 = vmatpush1.msra.mxu0 0.0
        %1386 = vmatprep.subr.mxu0 0.0
        %1387 = vmatpush1.msra.mxu0 0.0
        %1388 = vmatprep.subr.mxu0 0.0
        %1389 = vmatpush1.msra.mxu0 0.0
        %1390 = vmatprep.subr.mxu0 0.0
        %1391 = vmatpush1.msra.mxu0 0.0
        %1392 = vmatprep.subr.mxu0 0.0
        %1393 = vmatpush1.msra.mxu0 0.0
        %1394 = vmatprep.subr.mxu0 0.0
        %1395 = vmatpush1.msra.mxu0 0.0
        %1396 = vmatprep.subr.mxu0 0.0
        %1397 = vmatpush1.msra.mxu0 0.0
        %1398 = vmatprep.subr.mxu0 0.0
        %1399 = vmatpush1.msra.mxu0 0.0
        %1400 = vmatprep.subr.mxu0 0.0
        %1401 = vmatpush1.msra.mxu0 0.0
        %1402 = vmatprep.subr.mxu0 0.0
        %1403 = vmatpush1.msra.mxu0 0.0
        %1404 = vmatprep.subr.mxu0 0.0
        %1405 = vmatpush1.msra.mxu0 0.0
        %1406 = vmatprep.subr.mxu0 0.0
        %1407 = vmatpush1.msra.mxu0 0.0
        %1408 = vmatprep.subr.mxu0 0.0
        %1409 = vmatpush1.msra.mxu0 0.0
        %1410 = vmatprep.subr.mxu0 0.0
        %1411 = vmatpush1.msra.mxu0 0.0
        %1412 = vmatprep.subr.mxu0 0.0
        %1413 = vmatpush1.msra.mxu0 0.0
        %1414 = vmatprep.subr.mxu0 0.0
        %1415 = vmatpush1.msra.mxu0 0.0
        %1416 = vmatprep.subr.mxu0 0.0
        %1417 = vmatpush1.msra.mxu0 0.0
        %1418 = vmatprep.subr.mxu0 0.0
        %1419 = vmatpush1.msra.mxu0 0.0
        %1420 = vmatprep.mubr.f32.mxu0 0.0
        %1421 = vmatmul.mubr.f32.gmra.mrb[0].mxu0 %v1196
        %v1422 = vpop.f32.mrb[0].mxu0
        %v1423 = vadd.f32 0.0, %v1422
        %v1424 = vpop.f32.mrb[0].mxu0
        %v1425 = vadd.f32 0.0, %v1424
        %1426 = vdwg.mxu0
        %1427 = vmatprep.subr.mxu0 %v1212
        %1428 = vmatpush1.msra.mxu0 %v1210
        %1429 = vmatprep.subr.mxu0 0.0
        %1430 = vmatpush1.msra.mxu0 0.0
        %1431 = vmatprep.subr.mxu0 0.0
        %1432 = vmatpush1.msra.mxu0 0.0
        %1433 = vmatprep.subr.mxu0 0.0
        %1434 = vmatpush1.msra.mxu0 0.0
        %1435 = vmatprep.subr.mxu0 0.0
        %1436 = vmatpush1.msra.mxu0 0.0
        %1437 = vmatprep.subr.mxu0 0.0
        %1438 = vmatpush1.msra.mxu0 0.0
        %1439 = vmatprep.subr.mxu0 0.0
        %1440 = vmatpush1.msra.mxu0 0.0
        %1441 = vmatprep.subr.mxu0 0.0
        %1442 = vmatpush1.msra.mxu0 0.0
        %1443 = vmatprep.subr.mxu0 0.0
        %1444 = vmatpush1.msra.mxu0 0.0
        %1445 = vmatprep.subr.mxu0 0.0
        %1446 = vmatpush1.msra.mxu0 0.0
        %1447 = vmatprep.subr.mxu0 0.0
        %1448 = vmatpush1.msra.mxu0 0.0
        %1449 = vmatprep.subr.mxu0 0.0
        %1450 = vmatpush1.msra.mxu0 0.0
        %1451 = vmatprep.subr.mxu0 0.0
        %1452 = vmatpush1.msra.mxu0 0.0
        %1453 = vmatprep.subr.mxu0 0.0
        %1454 = vmatpush1.msra.mxu0 0.0
        %1455 = vmatprep.subr.mxu0 0.0
        %1456 = vmatpush1.msra.mxu0 0.0
        %1457 = vmatprep.subr.mxu0 0.0
        %1458 = vmatpush1.msra.mxu0 0.0
        %1459 = vmatprep.subr.mxu0 0.0
        %1460 = vmatpush1.msra.mxu0 0.0
        %1461 = vmatprep.subr.mxu0 0.0
        %1462 = vmatpush1.msra.mxu0 0.0
        %1463 = vmatprep.subr.mxu0 0.0
        %1464 = vmatpush1.msra.mxu0 0.0
        %1465 = vmatprep.subr.mxu0 0.0
        %1466 = vmatpush1.msra.mxu0 0.0
        %1467 = vmatprep.subr.mxu0 0.0
        %1468 = vmatpush1.msra.mxu0 0.0
        %1469 = vmatprep.subr.mxu0 0.0
        %1470 = vmatpush1.msra.mxu0 0.0
        %1471 = vmatprep.subr.mxu0 0.0
        %1472 = vmatpush1.msra.mxu0 0.0
        %1473 = vmatprep.subr.mxu0 0.0
        %1474 = vmatpush1.msra.mxu0 0.0
        %1475 = vmatprep.subr.mxu0 0.0
        %1476 = vmatpush1.msra.mxu0 0.0
        %1477 = vmatprep.subr.mxu0 0.0
        %1478 = vmatpush1.msra.mxu0 0.0
        %1479 = vmatprep.subr.mxu0 0.0
        %1480 = vmatpush1.msra.mxu0 0.0
        %1481 = vmatprep.subr.mxu0 0.0
        %1482 = vmatpush1.msra.mxu0 0.0
        %1483 = vmatprep.subr.mxu0 0.0
        %1484 = vmatpush1.msra.mxu0 0.0
        %1485 = vmatprep.subr.mxu0 0.0
        %1486 = vmatpush1.msra.mxu0 0.0
        %1487 = vmatprep.subr.mxu0 0.0
        %1488 = vmatpush1.msra.mxu0 0.0
        %1489 = vmatprep.subr.mxu0 0.0
        %1490 = vmatpush1.msra.mxu0 0.0
        %1491 = vmatprep.mubr.f32.mxu0 0.0
        %1492 = vmatmul.mubr.f32.gmra.mrb[0].mxu0 %v1196
        %v1493 = vpop.f32.mrb[0].mxu0
        %v1494 = vadd.f32 0.0, %v1493
        %v1495 = vpop.f32.mrb[0].mxu0
        %v1496 = vadd.f32 0.0, %v1495
        %1497 = vdwg.mxu0
        %v1498 = vadd.f32 %v892, %v1281
        %v1499 = vadd.f32 %v894, %v1283
        %v1500 = vadd.f32 %v963, %v1352
        %v1501 = vadd.f32 %v965, %v1354
        %v1502 = vadd.f32 %v1034, %v1423
        %v1503 = vadd.f32 %v1036, %v1425
        %v1504 = vadd.f32 %v1105, %v1494
        %v1505 = vadd.f32 %v1107, %v1496
        %v1506 = vld [vmem:[#allocation2] sm:$0x77]
        %v1507 = vld [vmem:[#allocation2 + $0x8] sm:$0x77]
        %v1508 = vld [vmem:[#allocation2 + $0x10] sm:$0x77]
        %v1509 = vld [vmem:[#allocation2 + $0x18] sm:$0x77]
        %v1510 = vld [vmem:[#allocation2 + $0x20] sm:$0x7]
        %1511 = vrot.lane.b32.xlu0 %v442, 32
        %v1512 = vpop.permute.xlu0 %1511
        %1513 = vrot.lane.b32.xlu0 %v443, 32
        %v1514 = vpop.permute.xlu0 %1513
        %1515 = vrot.lane.b32.xlu0 %v444, 32
        %v1516 = vpop.permute.xlu0 %1515
        %1517 = vrot.lane.b32.xlu0 %v445, 32
        %v1518 = vpop.permute.xlu0 %1517
        %v1519 = vrot.slane %v1512, 4
        %v1520 = vrot.slane %v1514, 4
        %v1521 = vrot.slane %v1516, 4
        %v1522 = vrot.slane %v1518, 4
        %vm1523 = vcmask 261120
        %v1524 = vsel %vm1523, %v1519, %v1512
        %v1525 = vsel %vm345, %v1519, %v1520
        %v1526 = vsel %vm1523, %v1525, %v1514
        %v1527 = vsel %vm345, %v1520, %v1521
        %v1528 = vsel %vm1523, %v1527, %v1516
        %v1529 = vsel %vm345, %v1521, %v1522
        %v1530 = vsel %vm1523, %v1529, %v1518
        %v1536 = vmul.f32 %v1506, %v1524
        %v1537 = vmul.f32 %v1507, %v1526
        %v1538 = vmul.f32 %v1508, %v1528
        %v1539 = vmul.f32 %v1509, %v1530
        %v1540 = vmul.f32 %v1510, %v1522
        %v1541 = vld [vmem:[%s1] sm:$0xff]
        %1543 = vrot.lane.b32.xlu0 %v1541, 119
        %v1544 = vpop.permute.xlu0 %1543
        %v1550 = vcombine.high %v1536, %v1536
        %v1551 = vcombine.high %v1537, %v1537
        %v1552 = vcombine.high %v1538, %v1538
        %v1553 = vcombine.high %v1539, %v1539
        %1554 = vrot.lane.b32.xlu0 %v1536, 96
        %v1555 = vpop.permute.xlu0 %1554
        %1556 = vrot.lane.b32.xlu0 %v1550, 96
        %v1557 = vpop.permute.xlu0 %1556
        %1558 = vrot.lane.b32.xlu0 %v1537, 96
        %v1559 = vpop.permute.xlu0 %1558
        %1560 = vrot.lane.b32.xlu0 %v1551, 96
        %v1561 = vpop.permute.xlu0 %1560
        %1562 = vrot.lane.b32.xlu0 %v1538, 96
        %v1563 = vpop.permute.xlu0 %1562
        %1564 = vrot.lane.b32.xlu0 %v1552, 96
        %v1565 = vpop.permute.xlu0 %1564
        %1566 = vrot.lane.b32.xlu0 %v1539, 96
        %v1567 = vpop.permute.xlu0 %1566
        %1568 = vrot.lane.b32.xlu0 %v1553, 96
        %v1569 = vpop.permute.xlu0 %1568
        %1570 = vrot.lane.b32.xlu0 %v1540, 96
        %v1571 = vpop.permute.xlu0 %1570
        %vm1572 = vcmask 785408
        %v1573 = vsel %vm1572, %v1555, %v1557
        %v1574 = vsel %vm1572, %v1557, %v1559
        %v1575 = vsel %vm1572, %v1559, %v1561
        %v1576 = vsel %vm1572, %v1561, %v1563
        %v1577 = vsel %vm1572, %v1563, %v1565
        %v1578 = vsel %vm1572, %v1565, %v1567
        %v1579 = vsel %vm1572, %v1567, %v1569
        %v1580 = vsel %vm1572, %v1569, %v1571
        %v1581 = vsel %vm495, %v1544, 0
        %v1583 = vsel %vm498, %v1573, 0
        %v1585 = vsel %vm498, %v1574, 0
        %v1587 = vsel %vm498, %v1575, 0
        %v1589 = vsel %vm498, %v1576, 0
        %v1591 = vsel %vm498, %v1577, 0
        %v1593 = vsel %vm498, %v1578, 0
        %v1595 = vsel %vm498, %v1579, 0
        %v1597 = vsel %vm498, %v1580, 0
        %1599 = vmatprep.subr.mxu0 %v1585
        %1600 = vmatpush1.msra.mxu0 %v1583
        %1601 = vmatprep.subr.mxu0 0.0
        %1602 = vmatpush1.msra.mxu0 0.0
        %1603 = vmatprep.subr.mxu0 0.0
        %1604 = vmatpush1.msra.mxu0 0.0
        %1605 = vmatprep.subr.mxu0 0.0
        %1606 = vmatpush1.msra.mxu0 0.0
        %1607 = vmatprep.subr.mxu0 0.0
        %1608 = vmatpush1.msra.mxu0 0.0
        %1609 = vmatprep.subr.mxu0 0.0
        %1610 = vmatpush1.msra.mxu0 0.0
        %1611 = vmatprep.subr.mxu0 0.0
        %1612 = vmatpush1.msra.mxu0 0.0
        %1613 = vmatprep.subr.mxu0 0.0
        %1614 = vmatpush1.msra.mxu0 0.0
        %1615 = vmatprep.subr.mxu0 0.0
        %1616 = vmatpush1.msra.mxu0 0.0
        %1617 = vmatprep.subr.mxu0 0.0
        %1618 = vmatpush1.msra.mxu0 0.0
        %1619 = vmatprep.subr.mxu0 0.0
        %1620 = vmatpush1.msra.mxu0 0.0
        %1621 = vmatprep.subr.mxu0 0.0
        %1622 = vmatpush1.msra.mxu0 0.0
        %1623 = vmatprep.subr.mxu0 0.0
        %1624 = vmatpush1.msra.mxu0 0.0
        %1625 = vmatprep.subr.mxu0 0.0
        %1626 = vmatpush1.msra.mxu0 0.0
        %1627 = vmatprep.subr.mxu0 0.0
        %1628 = vmatpush1.msra.mxu0 0.0
        %1629 = vmatprep.subr.mxu0 0.0
        %1630 = vmatpush1.msra.mxu0 0.0
        %1631 = vmatprep.subr.mxu0 0.0
        %1632 = vmatpush1.msra.mxu0 0.0
        %1633 = vmatprep.subr.mxu0 0.0
        %1634 = vmatpush1.msra.mxu0 0.0
        %1635 = vmatprep.subr.mxu0 0.0
        %1636 = vmatpush1.msra.mxu0 0.0
        %1637 = vmatprep.subr.mxu0 0.0
        %1638 = vmatpush1.msra.mxu0 0.0
        %1639 = vmatprep.subr.mxu0 0.0
        %1640 = vmatpush1.msra.mxu0 0.0
        %1641 = vmatprep.subr.mxu0 0.0
        %1642 = vmatpush1.msra.mxu0 0.0
        %1643 = vmatprep.subr.mxu0 0.0
        %1644 = vmatpush1.msra.mxu0 0.0
        %1645 = vmatprep.subr.mxu0 0.0
        %1646 = vmatpush1.msra.mxu0 0.0
        %1647 = vmatprep.subr.mxu0 0.0
        %1648 = vmatpush1.msra.mxu0 0.0
        %1649 = vmatprep.subr.mxu0 0.0
        %1650 = vmatpush1.msra.mxu0 0.0
        %1651 = vmatprep.subr.mxu0 0.0
        %1652 = vmatpush1.msra.mxu0 0.0
        %1653 = vmatprep.subr.mxu0 0.0
        %1654 = vmatpush1.msra.mxu0 0.0
        %1655 = vmatprep.subr.mxu0 0.0
        %1656 = vmatpush1.msra.mxu0 0.0
        %1657 = vmatprep.subr.mxu0 0.0
        %1658 = vmatpush1.msra.mxu0 0.0
        %1659 = vmatprep.subr.mxu0 0.0
        %1660 = vmatpush1.msra.mxu0 0.0
        %1661 = vmatprep.subr.mxu0 0.0
        %1662 = vmatpush1.msra.mxu0 0.0
        %1663 = vmatprep.mubr.f32.mxu0 0.0
        %1664 = vmatmul.mubr.f32.gmra.mrb[0].mxu0 %v1581
        %v1665 = vpop.f32.mrb[0].mxu0
        %v1666 = vadd.f32 0.0, %v1665
        %v1667 = vpop.f32.mrb[0].mxu0
        %v1668 = vadd.f32 0.0, %v1667
        %1669 = vdwg.mxu0
        %1670 = vmatprep.subr.mxu0 %v1589
        %1671 = vmatpush1.msra.mxu0 %v1587
        %1672 = vmatprep.subr.mxu0 0.0
        %1673 = vmatpush1.msra.mxu0 0.0
        %1674 = vmatprep.subr.mxu0 0.0
        %1675 = vmatpush1.msra.mxu0 0.0
        %1676 = vmatprep.subr.mxu0 0.0
        %1677 = vmatpush1.msra.mxu0 0.0
        %1678 = vmatprep.subr.mxu0 0.0
        %1679 = vmatpush1.msra.mxu0 0.0
        %1680 = vmatprep.subr.mxu0 0.0
        %1681 = vmatpush1.msra.mxu0 0.0
        %1682 = vmatprep.subr.mxu0 0.0
        %1683 = vmatpush1.msra.mxu0 0.0
        %1684 = vmatprep.subr.mxu0 0.0
        %1685 = vmatpush1.msra.mxu0 0.0
        %1686 = vmatprep.subr.mxu0 0.0
        %1687 = vmatpush1.msra.mxu0 0.0
        %1688 = vmatprep.subr.mxu0 0.0
        %1689 = vmatpush1.msra.mxu0 0.0
        %1690 = vmatprep.subr.mxu0 0.0
        %1691 = vmatpush1.msra.mxu0 0.0
        %1692 = vmatprep.subr.mxu0 0.0
        %1693 = vmatpush1.msra.mxu0 0.0
        %1694 = vmatprep.subr.mxu0 0.0
        %1695 = vmatpush1.msra.mxu0 0.0
        %1696 = vmatprep.subr.mxu0 0.0
        %1697 = vmatpush1.msra.mxu0 0.0
        %1698 = vmatprep.subr.mxu0 0.0
        %1699 = vmatpush1.msra.mxu0 0.0
        %1700 = vmatprep.subr.mxu0 0.0
        %1701 = vmatpush1.msra.mxu0 0.0
        %1702 = vmatprep.subr.mxu0 0.0
        %1703 = vmatpush1.msra.mxu0 0.0
        %1704 = vmatprep.subr.mxu0 0.0
        %1705 = vmatpush1.msra.mxu0 0.0
        %1706 = vmatprep.subr.mxu0 0.0
        %1707 = vmatpush1.msra.mxu0 0.0
        %1708 = vmatprep.subr.mxu0 0.0
        %1709 = vmatpush1.msra.mxu0 0.0
        %1710 = vmatprep.subr.mxu0 0.0
        %1711 = vmatpush1.msra.mxu0 0.0
        %1712 = vmatprep.subr.mxu0 0.0
        %1713 = vmatpush1.msra.mxu0 0.0
        %1714 = vmatprep.subr.mxu0 0.0
        %1715 = vmatpush1.msra.mxu0 0.0
        %1716 = vmatprep.subr.mxu0 0.0
        %1717 = vmatpush1.msra.mxu0 0.0
        %1718 = vmatprep.subr.mxu0 0.0
        %1719 = vmatpush1.msra.mxu0 0.0
        %1720 = vmatprep.subr.mxu0 0.0
        %1721 = vmatpush1.msra.mxu0 0.0
        %1722 = vmatprep.subr.mxu0 0.0
        %1723 = vmatpush1.msra.mxu0 0.0
        %1724 = vmatprep.subr.mxu0 0.0
        %1725 = vmatpush1.msra.mxu0 0.0
        %1726 = vmatprep.subr.mxu0 0.0
        %1727 = vmatpush1.msra.mxu0 0.0
        %1728 = vmatprep.subr.mxu0 0.0
        %1729 = vmatpush1.msra.mxu0 0.0
        %1730 = vmatprep.subr.mxu0 0.0
        %1731 = vmatpush1.msra.mxu0 0.0
        %1732 = vmatprep.subr.mxu0 0.0
        %1733 = vmatpush1.msra.mxu0 0.0
        %1734 = vmatprep.mubr.f32.mxu0 0.0
        %1735 = vmatmul.mubr.f32.gmra.mrb[0].mxu0 %v1581
        %v1736 = vpop.f32.mrb[0].mxu0
        %v1737 = vadd.f32 0.0, %v1736
        %v1738 = vpop.f32.mrb[0].mxu0
        %v1739 = vadd.f32 0.0, %v1738
        %1740 = vdwg.mxu0
        %1741 = vmatprep.subr.mxu0 %v1593
        %1742 = vmatpush1.msra.mxu0 %v1591
        %1743 = vmatprep.subr.mxu0 0.0
        %1744 = vmatpush1.msra.mxu0 0.0
        %1745 = vmatprep.subr.mxu0 0.0
        %1746 = vmatpush1.msra.mxu0 0.0
        %1747 = vmatprep.subr.mxu0 0.0
        %1748 = vmatpush1.msra.mxu0 0.0
        %1749 = vmatprep.subr.mxu0 0.0
        %1750 = vmatpush1.msra.mxu0 0.0
        %1751 = vmatprep.subr.mxu0 0.0
        %1752 = vmatpush1.msra.mxu0 0.0
        %1753 = vmatprep.subr.mxu0 0.0
        %1754 = vmatpush1.msra.mxu0 0.0
        %1755 = vmatprep.subr.mxu0 0.0
        %1756 = vmatpush1.msra.mxu0 0.0
        %1757 = vmatprep.subr.mxu0 0.0
        %1758 = vmatpush1.msra.mxu0 0.0
        %1759 = vmatprep.subr.mxu0 0.0
        %1760 = vmatpush1.msra.mxu0 0.0
        %1761 = vmatprep.subr.mxu0 0.0
        %1762 = vmatpush1.msra.mxu0 0.0
        %1763 = vmatprep.subr.mxu0 0.0
        %1764 = vmatpush1.msra.mxu0 0.0
        %1765 = vmatprep.subr.mxu0 0.0
        %1766 = vmatpush1.msra.mxu0 0.0
        %1767 = vmatprep.subr.mxu0 0.0
        %1768 = vmatpush1.msra.mxu0 0.0
        %1769 = vmatprep.subr.mxu0 0.0
        %1770 = vmatpush1.msra.mxu0 0.0
        %1771 = vmatprep.subr.mxu0 0.0
        %1772 = vmatpush1.msra.mxu0 0.0
        %1773 = vmatprep.subr.mxu0 0.0
        %1774 = vmatpush1.msra.mxu0 0.0
        %1775 = vmatprep.subr.mxu0 0.0
        %1776 = vmatpush1.msra.mxu0 0.0
        %1777 = vmatprep.subr.mxu0 0.0
        %1778 = vmatpush1.msra.mxu0 0.0
        %1779 = vmatprep.subr.mxu0 0.0
        %1780 = vmatpush1.msra.mxu0 0.0
        %1781 = vmatprep.subr.mxu0 0.0
        %1782 = vmatpush1.msra.mxu0 0.0
        %1783 = vmatprep.subr.mxu0 0.0
        %1784 = vmatpush1.msra.mxu0 0.0
        %1785 = vmatprep.subr.mxu0 0.0
        %1786 = vmatpush1.msra.mxu0 0.0
        %1787 = vmatprep.subr.mxu0 0.0
        %1788 = vmatpush1.msra.mxu0 0.0
        %1789 = vmatprep.subr.mxu0 0.0
        %1790 = vmatpush1.msra.mxu0 0.0
        %1791 = vmatprep.subr.mxu0 0.0
        %1792 = vmatpush1.msra.mxu0 0.0
        %1793 = vmatprep.subr.mxu0 0.0
        %1794 = vmatpush1.msra.mxu0 0.0
        %1795 = vmatprep.subr.mxu0 0.0
        %1796 = vmatpush1.msra.mxu0 0.0
        %1797 = vmatprep.subr.mxu0 0.0
        %1798 = vmatpush1.msra.mxu0 0.0
        %1799 = vmatprep.subr.mxu0 0.0
        %1800 = vmatpush1.msra.mxu0 0.0
        %1801 = vmatprep.subr.mxu0 0.0
        %1802 = vmatpush1.msra.mxu0 0.0
        %1803 = vmatprep.subr.mxu0 0.0
        %1804 = vmatpush1.msra.mxu0 0.0
        %1805 = vmatprep.mubr.f32.mxu0 0.0
        %1806 = vmatmul.mubr.f32.gmra.mrb[0].mxu0 %v1581
        %v1807 = vpop.f32.mrb[0].mxu0
        %v1808 = vadd.f32 0.0, %v1807
        %v1809 = vpop.f32.mrb[0].mxu0
        %v1810 = vadd.f32 0.0, %v1809
        %1811 = vdwg.mxu0
        %1812 = vmatprep.subr.mxu0 %v1597
        %1813 = vmatpush1.msra.mxu0 %v1595
        %1814 = vmatprep.subr.mxu0 0.0
        %1815 = vmatpush1.msra.mxu0 0.0
        %1816 = vmatprep.subr.mxu0 0.0
        %1817 = vmatpush1.msra.mxu0 0.0
        %1818 = vmatprep.subr.mxu0 0.0
        %1819 = vmatpush1.msra.mxu0 0.0
        %1820 = vmatprep.subr.mxu0 0.0
        %1821 = vmatpush1.msra.mxu0 0.0
        %1822 = vmatprep.subr.mxu0 0.0
        %1823 = vmatpush1.msra.mxu0 0.0
        %1824 = vmatprep.subr.mxu0 0.0
        %1825 = vmatpush1.msra.mxu0 0.0
        %1826 = vmatprep.subr.mxu0 0.0
        %1827 = vmatpush1.msra.mxu0 0.0
        %1828 = vmatprep.subr.mxu0 0.0
        %1829 = vmatpush1.msra.mxu0 0.0
        %1830 = vmatprep.subr.mxu0 0.0
        %1831 = vmatpush1.msra.mxu0 0.0
        %1832 = vmatprep.subr.mxu0 0.0
        %1833 = vmatpush1.msra.mxu0 0.0
        %1834 = vmatprep.subr.mxu0 0.0
        %1835 = vmatpush1.msra.mxu0 0.0
        %1836 = vmatprep.subr.mxu0 0.0
        %1837 = vmatpush1.msra.mxu0 0.0
        %1838 = vmatprep.subr.mxu0 0.0
        %1839 = vmatpush1.msra.mxu0 0.0
        %1840 = vmatprep.subr.mxu0 0.0
        %1841 = vmatpush1.msra.mxu0 0.0
        %1842 = vmatprep.subr.mxu0 0.0
        %1843 = vmatpush1.msra.mxu0 0.0
        %1844 = vmatprep.subr.mxu0 0.0
        %1845 = vmatpush1.msra.mxu0 0.0
        %1846 = vmatprep.subr.mxu0 0.0
        %1847 = vmatpush1.msra.mxu0 0.0
        %1848 = vmatprep.subr.mxu0 0.0
        %1849 = vmatpush1.msra.mxu0 0.0
        %1850 = vmatprep.subr.mxu0 0.0
        %1851 = vmatpush1.msra.mxu0 0.0
        %1852 = vmatprep.subr.mxu0 0.0
        %1853 = vmatpush1.msra.mxu0 0.0
        %1854 = vmatprep.subr.mxu0 0.0
        %1855 = vmatpush1.msra.mxu0 0.0
        %1856 = vmatprep.subr.mxu0 0.0
        %1857 = vmatpush1.msra.mxu0 0.0
        %1858 = vmatprep.subr.mxu0 0.0
        %1859 = vmatpush1.msra.mxu0 0.0
        %1860 = vmatprep.subr.mxu0 0.0
        %1861 = vmatpush1.msra.mxu0 0.0
        %1862 = vmatprep.subr.mxu0 0.0
        %1863 = vmatpush1.msra.mxu0 0.0
        %1864 = vmatprep.subr.mxu0 0.0
        %1865 = vmatpush1.msra.mxu0 0.0
        %1866 = vmatprep.subr.mxu0 0.0
        %1867 = vmatpush1.msra.mxu0 0.0
        %1868 = vmatprep.subr.mxu0 0.0
        %1869 = vmatpush1.msra.mxu0 0.0
        %1870 = vmatprep.subr.mxu0 0.0
        %1871 = vmatpush1.msra.mxu0 0.0
        %1872 = vmatprep.subr.mxu0 0.0
        %1873 = vmatpush1.msra.mxu0 0.0
        %1874 = vmatprep.subr.mxu0 0.0
        %1875 = vmatpush1.msra.mxu0 0.0
        %1876 = vmatprep.mubr.f32.mxu0 0.0
        %1877 = vmatmul.mubr.f32.gmra.mrb[0].mxu0 %v1581
        %v1878 = vpop.f32.mrb[0].mxu0
        %v1879 = vadd.f32 0.0, %v1878
        %v1880 = vpop.f32.mrb[0].mxu0
        %v1881 = vadd.f32 0.0, %v1880
        %1882 = vdwg.mxu0
        %v1883 = vadd.f32 %v1498, %v1666
        %v1884 = vadd.f32 %v1499, %v1668
        %v1885 = vadd.f32 %v1500, %v1737
        %v1886 = vadd.f32 %v1501, %v1739
        %v1887 = vadd.f32 %v1502, %v1808
        %v1888 = vadd.f32 %v1503, %v1810
        %v1889 = vadd.f32 %v1504, %v1879
        %v1890 = vadd.f32 %v1505, %v1881
        %v1891 = vld [vmem:[#allocation2] sm:$0x77]
        %v1892 = vld [vmem:[#allocation2 + $0x8] sm:$0x77]
        %v1893 = vld [vmem:[#allocation2 + $0x10] sm:$0x77]
        %v1894 = vld [vmem:[#allocation2 + $0x18] sm:$0x77]
        %v1895 = vld [vmem:[#allocation2 + $0x20] sm:$0x7]
        %v1896 = vld [vmem:[%s1] sm:$0xff]
        %1898 = vrot.lane.b32.xlu0 %v1896, 116
        %v1899 = vpop.permute.xlu0 %1898
        %v1905 = vcombine.high %v1891, %v1891
        %v1906 = vcombine.high %v1892, %v1892
        %v1907 = vcombine.high %v1893, %v1893
        %v1908 = vcombine.high %v1894, %v1894
        %1909 = vrot.lane.b32.xlu0 %v1891, 95
        %v1910 = vpop.permute.xlu0 %1909
        %1911 = vrot.lane.b32.xlu0 %v1905, 95
        %v1912 = vpop.permute.xlu0 %1911
        %1913 = vrot.lane.b32.xlu0 %v1892, 95
        %v1914 = vpop.permute.xlu0 %1913
        %1915 = vrot.lane.b32.xlu0 %v1906, 95
        %v1916 = vpop.permute.xlu0 %1915
        %1917 = vrot.lane.b32.xlu0 %v1893, 95
        %v1918 = vpop.permute.xlu0 %1917
        %1919 = vrot.lane.b32.xlu0 %v1907, 95
        %v1920 = vpop.permute.xlu0 %1919
        %1921 = vrot.lane.b32.xlu0 %v1894, 95
        %v1922 = vpop.permute.xlu0 %1921
        %1923 = vrot.lane.b32.xlu0 %v1908, 95
        %v1924 = vpop.permute.xlu0 %1923
        %1925 = vrot.lane.b32.xlu0 %v1895, 95
        %v1926 = vpop.permute.xlu0 %1925
        %vm1927 = vcmask 777216
        %v1928 = vsel %vm1927, %v1910, %v1912
        %v1929 = vsel %vm1927, %v1912, %v1914
        %v1930 = vsel %vm1927, %v1914, %v1916
        %v1931 = vsel %vm1927, %v1916, %v1918
        %v1932 = vsel %vm1927, %v1918, %v1920
        %v1933 = vsel %vm1927, %v1920, %v1922
        %v1934 = vsel %vm1927, %v1922, %v1924
        %v1935 = vsel %vm1927, %v1924, %v1926
        %v1936 = vsel %vm495, %v1899, 0
        %v1938 = vsel %vm498, %v1928, 0
        %v1940 = vsel %vm498, %v1929, 0
        %v1942 = vsel %vm498, %v1930, 0
        %v1944 = vsel %vm498, %v1931, 0
        %v1946 = vsel %vm498, %v1932, 0
        %v1948 = vsel %vm498, %v1933, 0
        %v1950 = vsel %vm498, %v1934, 0
        %v1952 = vsel %vm498, %v1935, 0
        %1954 = vmatprep.subr.mxu0 %v1940
        %1955 = vmatpush1.msra.mxu0 %v1938
        %1956 = vmatprep.subr.mxu0 0.0
        %1957 = vmatpush1.msra.mxu0 0.0
        %1958 = vmatprep.subr.mxu0 0.0
        %1959 = vmatpush1.msra.mxu0 0.0
        %1960 = vmatprep.subr.mxu0 0.0
        %1961 = vmatpush1.msra.mxu0 0.0
        %1962 = vmatprep.subr.mxu0 0.0
        %1963 = vmatpush1.msra.mxu0 0.0
        %1964 = vmatprep.subr.mxu0 0.0
        %1965 = vmatpush1.msra.mxu0 0.0
        %1966 = vmatprep.subr.mxu0 0.0
        %1967 = vmatpush1.msra.mxu0 0.0
        %1968 = vmatprep.subr.mxu0 0.0
        %1969 = vmatpush1.msra.mxu0 0.0
        %1970 = vmatprep.subr.mxu0 0.0
        %1971 = vmatpush1.msra.mxu0 0.0
        %1972 = vmatprep.subr.mxu0 0.0
        %1973 = vmatpush1.msra.mxu0 0.0
        %1974 = vmatprep.subr.mxu0 0.0
        %1975 = vmatpush1.msra.mxu0 0.0
        %1976 = vmatprep.subr.mxu0 0.0
        %1977 = vmatpush1.msra.mxu0 0.0
        %1978 = vmatprep.subr.mxu0 0.0
        %1979 = vmatpush1.msra.mxu0 0.0
        %1980 = vmatprep.subr.mxu0 0.0
        %1981 = vmatpush1.msra.mxu0 0.0
        %1982 = vmatprep.subr.mxu0 0.0
        %1983 = vmatpush1.msra.mxu0 0.0
        %1984 = vmatprep.subr.mxu0 0.0
        %1985 = vmatpush1.msra.mxu0 0.0
        %1986 = vmatprep.subr.mxu0 0.0
        %1987 = vmatpush1.msra.mxu0 0.0
        %1988 = vmatprep.subr.mxu0 0.0
        %1989 = vmatpush1.msra.mxu0 0.0
        %1990 = vmatprep.subr.mxu0 0.0
        %1991 = vmatpush1.msra.mxu0 0.0
        %1992 = vmatprep.subr.mxu0 0.0
        %1993 = vmatpush1.msra.mxu0 0.0
        %1994 = vmatprep.subr.mxu0 0.0
        %1995 = vmatpush1.msra.mxu0 0.0
        %1996 = vmatprep.subr.mxu0 0.0
        %1997 = vmatpush1.msra.mxu0 0.0
        %1998 = vmatprep.subr.mxu0 0.0
        %1999 = vmatpush1.msra.mxu0 0.0
        %2000 = vmatprep.subr.mxu0 0.0
        %2001 = vmatpush1.msra.mxu0 0.0
        %2002 = vmatprep.subr.mxu0 0.0
        %2003 = vmatpush1.msra.mxu0 0.0
        %2004 = vmatprep.subr.mxu0 0.0
        %2005 = vmatpush1.msra.mxu0 0.0
        %2006 = vmatprep.subr.mxu0 0.0
        %2007 = vmatpush1.msra.mxu0 0.0
        %2008 = vmatprep.subr.mxu0 0.0
        %2009 = vmatpush1.msra.mxu0 0.0
        %2010 = vmatprep.subr.mxu0 0.0
        %2011 = vmatpush1.msra.mxu0 0.0
        %2012 = vmatprep.subr.mxu0 0.0
        %2013 = vmatpush1.msra.mxu0 0.0
        %2014 = vmatprep.subr.mxu0 0.0
        %2015 = vmatpush1.msra.mxu0 0.0
        %2016 = vmatprep.subr.mxu0 0.0
        %2017 = vmatpush1.msra.mxu0 0.0
        %2018 = vmatprep.mubr.f32.mxu0 0.0
        %2019 = vmatmul.mubr.f32.gmra.mrb[0].mxu0 %v1936
        %v2020 = vpop.f32.mrb[0].mxu0
        %v2021 = vadd.f32 0.0, %v2020
        %v2022 = vpop.f32.mrb[0].mxu0
        %v2023 = vadd.f32 0.0, %v2022
        %2024 = vdwg.mxu0
        %2025 = vmatprep.subr.mxu0 %v1944
        %2026 = vmatpush1.msra.mxu0 %v1942
        %2027 = vmatprep.subr.mxu0 0.0
        %2028 = vmatpush1.msra.mxu0 0.0
        %2029 = vmatprep.subr.mxu0 0.0
        %2030 = vmatpush1.msra.mxu0 0.0
        %2031 = vmatprep.subr.mxu0 0.0
        %2032 = vmatpush1.msra.mxu0 0.0
        %2033 = vmatprep.subr.mxu0 0.0
        %2034 = vmatpush1.msra.mxu0 0.0
        %2035 = vmatprep.subr.mxu0 0.0
        %2036 = vmatpush1.msra.mxu0 0.0
        %2037 = vmatprep.subr.mxu0 0.0
        %2038 = vmatpush1.msra.mxu0 0.0
        %2039 = vmatprep.subr.mxu0 0.0
        %2040 = vmatpush1.msra.mxu0 0.0
        %2041 = vmatprep.subr.mxu0 0.0
        %2042 = vmatpush1.msra.mxu0 0.0
        %2043 = vmatprep.subr.mxu0 0.0
        %2044 = vmatpush1.msra.mxu0 0.0
        %2045 = vmatprep.subr.mxu0 0.0
        %2046 = vmatpush1.msra.mxu0 0.0
        %2047 = vmatprep.subr.mxu0 0.0
        %2048 = vmatpush1.msra.mxu0 0.0
        %2049 = vmatprep.subr.mxu0 0.0
        %2050 = vmatpush1.msra.mxu0 0.0
        %2051 = vmatprep.subr.mxu0 0.0
        %2052 = vmatpush1.msra.mxu0 0.0
        %2053 = vmatprep.subr.mxu0 0.0
        %2054 = vmatpush1.msra.mxu0 0.0
        %2055 = vmatprep.subr.mxu0 0.0
        %2056 = vmatpush1.msra.mxu0 0.0
        %2057 = vmatprep.subr.mxu0 0.0
        %2058 = vmatpush1.msra.mxu0 0.0
        %2059 = vmatprep.subr.mxu0 0.0
        %2060 = vmatpush1.msra.mxu0 0.0
        %2061 = vmatprep.subr.mxu0 0.0
        %2062 = vmatpush1.msra.mxu0 0.0
        %2063 = vmatprep.subr.mxu0 0.0
        %2064 = vmatpush1.msra.mxu0 0.0
        %2065 = vmatprep.subr.mxu0 0.0
        %2066 = vmatpush1.msra.mxu0 0.0
        %2067 = vmatprep.subr.mxu0 0.0
        %2068 = vmatpush1.msra.mxu0 0.0
        %2069 = vmatprep.subr.mxu0 0.0
        %2070 = vmatpush1.msra.mxu0 0.0
        %2071 = vmatprep.subr.mxu0 0.0
        %2072 = vmatpush1.msra.mxu0 0.0
        %2073 = vmatprep.subr.mxu0 0.0
        %2074 = vmatpush1.msra.mxu0 0.0
        %2075 = vmatprep.subr.mxu0 0.0
        %2076 = vmatpush1.msra.mxu0 0.0
        %2077 = vmatprep.subr.mxu0 0.0
        %2078 = vmatpush1.msra.mxu0 0.0
        %2079 = vmatprep.subr.mxu0 0.0
        %2080 = vmatpush1.msra.mxu0 0.0
        %2081 = vmatprep.subr.mxu0 0.0
        %2082 = vmatpush1.msra.mxu0 0.0
        %2083 = vmatprep.subr.mxu0 0.0
        %2084 = vmatpush1.msra.mxu0 0.0
        %2085 = vmatprep.subr.mxu0 0.0
        %2086 = vmatpush1.msra.mxu0 0.0
        %2087 = vmatprep.subr.mxu0 0.0
        %2088 = vmatpush1.msra.mxu0 0.0
        %2089 = vmatprep.mubr.f32.mxu0 0.0
        %2090 = vmatmul.mubr.f32.gmra.mrb[0].mxu0 %v1936
        %v2091 = vpop.f32.mrb[0].mxu0
        %v2092 = vadd.f32 0.0, %v2091
        %v2093 = vpop.f32.mrb[0].mxu0
        %v2094 = vadd.f32 0.0, %v2093
        %2095 = vdwg.mxu0
        %2096 = vmatprep.subr.mxu0 %v1948
        %2097 = vmatpush1.msra.mxu0 %v1946
        %2098 = vmatprep.subr.mxu0 0.0
        %2099 = vmatpush1.msra.mxu0 0.0
        %2100 = vmatprep.subr.mxu0 0.0
        %2101 = vmatpush1.msra.mxu0 0.0
        %2102 = vmatprep.subr.mxu0 0.0
        %2103 = vmatpush1.msra.mxu0 0.0
        %2104 = vmatprep.subr.mxu0 0.0
        %2105 = vmatpush1.msra.mxu0 0.0
        %2106 = vmatprep.subr.mxu0 0.0
        %2107 = vmatpush1.msra.mxu0 0.0
        %2108 = vmatprep.subr.mxu0 0.0
        %2109 = vmatpush1.msra.mxu0 0.0
        %2110 = vmatprep.subr.mxu0 0.0
        %2111 = vmatpush1.msra.mxu0 0.0
        %2112 = vmatprep.subr.mxu0 0.0
        %2113 = vmatpush1.msra.mxu0 0.0
        %2114 = vmatprep.subr.mxu0 0.0
        %2115 = vmatpush1.msra.mxu0 0.0
        %2116 = vmatprep.subr.mxu0 0.0
        %2117 = vmatpush1.msra.mxu0 0.0
        %2118 = vmatprep.subr.mxu0 0.0
        %2119 = vmatpush1.msra.mxu0 0.0
        %2120 = vmatprep.subr.mxu0 0.0
        %2121 = vmatpush1.msra.mxu0 0.0
        %2122 = vmatprep.subr.mxu0 0.0
        %2123 = vmatpush1.msra.mxu0 0.0
        %2124 = vmatprep.subr.mxu0 0.0
        %2125 = vmatpush1.msra.mxu0 0.0
        %2126 = vmatprep.subr.mxu0 0.0
        %2127 = vmatpush1.msra.mxu0 0.0
        %2128 = vmatprep.subr.mxu0 0.0
        %2129 = vmatpush1.msra.mxu0 0.0
        %2130 = vmatprep.subr.mxu0 0.0
        %2131 = vmatpush1.msra.mxu0 0.0
        %2132 = vmatprep.subr.mxu0 0.0
        %2133 = vmatpush1.msra.mxu0 0.0
        %2134 = vmatprep.subr.mxu0 0.0
        %2135 = vmatpush1.msra.mxu0 0.0
        %2136 = vmatprep.subr.mxu0 0.0
        %2137 = vmatpush1.msra.mxu0 0.0
        %2138 = vmatprep.subr.mxu0 0.0
        %2139 = vmatpush1.msra.mxu0 0.0
        %2140 = vmatprep.subr.mxu0 0.0
        %2141 = vmatpush1.msra.mxu0 0.0
        %2142 = vmatprep.subr.mxu0 0.0
        %2143 = vmatpush1.msra.mxu0 0.0
        %2144 = vmatprep.subr.mxu0 0.0
        %2145 = vmatpush1.msra.mxu0 0.0
        %2146 = vmatprep.subr.mxu0 0.0
        %2147 = vmatpush1.msra.mxu0 0.0
        %2148 = vmatprep.subr.mxu0 0.0
        %2149 = vmatpush1.msra.mxu0 0.0
        %2150 = vmatprep.subr.mxu0 0.0
        %2151 = vmatpush1.msra.mxu0 0.0
        %2152 = vmatprep.subr.mxu0 0.0
        %2153 = vmatpush1.msra.mxu0 0.0
        %2154 = vmatprep.subr.mxu0 0.0
        %2155 = vmatpush1.msra.mxu0 0.0
        %2156 = vmatprep.subr.mxu0 0.0
        %2157 = vmatpush1.msra.mxu0 0.0
        %2158 = vmatprep.subr.mxu0 0.0
        %2159 = vmatpush1.msra.mxu0 0.0
        %2160 = vmatprep.mubr.f32.mxu0 0.0
        %2161 = vmatmul.mubr.f32.gmra.mrb[0].mxu0 %v1936
        %v2162 = vpop.f32.mrb[0].mxu0
        %v2163 = vadd.f32 0.0, %v2162
        %v2164 = vpop.f32.mrb[0].mxu0
        %v2165 = vadd.f32 0.0, %v2164
        %2166 = vdwg.mxu0
        %2167 = vmatprep.subr.mxu0 %v1952
        %2168 = vmatpush1.msra.mxu0 %v1950
        %2169 = vmatprep.subr.mxu0 0.0
        %2170 = vmatpush1.msra.mxu0 0.0
        %2171 = vmatprep.subr.mxu0 0.0
        %2172 = vmatpush1.msra.mxu0 0.0
        %2173 = vmatprep.subr.mxu0 0.0
        %2174 = vmatpush1.msra.mxu0 0.0
        %2175 = vmatprep.subr.mxu0 0.0
        %2176 = vmatpush1.msra.mxu0 0.0
        %2177 = vmatprep.subr.mxu0 0.0
        %2178 = vmatpush1.msra.mxu0 0.0
        %2179 = vmatprep.subr.mxu0 0.0
        %2180 = vmatpush1.msra.mxu0 0.0
        %2181 = vmatprep.subr.mxu0 0.0
        %2182 = vmatpush1.msra.mxu0 0.0
        %2183 = vmatprep.subr.mxu0 0.0
        %2184 = vmatpush1.msra.mxu0 0.0
        %2185 = vmatprep.subr.mxu0 0.0
        %2186 = vmatpush1.msra.mxu0 0.0
        %2187 = vmatprep.subr.mxu0 0.0
        %2188 = vmatpush1.msra.mxu0 0.0
        %2189 = vmatprep.subr.mxu0 0.0
        %2190 = vmatpush1.msra.mxu0 0.0
        %2191 = vmatprep.subr.mxu0 0.0
        %2192 = vmatpush1.msra.mxu0 0.0
        %2193 = vmatprep.subr.mxu0 0.0
        %2194 = vmatpush1.msra.mxu0 0.0
        %2195 = vmatprep.subr.mxu0 0.0
        %2196 = vmatpush1.msra.mxu0 0.0
        %2197 = vmatprep.subr.mxu0 0.0
        %2198 = vmatpush1.msra.mxu0 0.0
        %2199 = vmatprep.subr.mxu0 0.0
        %2200 = vmatpush1.msra.mxu0 0.0
        %2201 = vmatprep.subr.mxu0 0.0
        %2202 = vmatpush1.msra.mxu0 0.0
        %2203 = vmatprep.subr.mxu0 0.0
        %2204 = vmatpush1.msra.mxu0 0.0
        %2205 = vmatprep.subr.mxu0 0.0
        %2206 = vmatpush1.msra.mxu0 0.0
        %2207 = vmatprep.subr.mxu0 0.0
        %2208 = vmatpush1.msra.mxu0 0.0
        %2209 = vmatprep.subr.mxu0 0.0
        %2210 = vmatpush1.msra.mxu0 0.0
        %2211 = vmatprep.subr.mxu0 0.0
        %2212 = vmatpush1.msra.mxu0 0.0
        %2213 = vmatprep.subr.mxu0 0.0
        %2214 = vmatpush1.msra.mxu0 0.0
        %2215 = vmatprep.subr.mxu0 0.0
        %2216 = vmatpush1.msra.mxu0 0.0
        %2217 = vmatprep.subr.mxu0 0.0
        %2218 = vmatpush1.msra.mxu0 0.0
        %2219 = vmatprep.subr.mxu0 0.0
        %2220 = vmatpush1.msra.mxu0 0.0
        %2221 = vmatprep.subr.mxu0 0.0
        %2222 = vmatpush1.msra.mxu0 0.0
        %2223 = vmatprep.subr.mxu0 0.0
        %2224 = vmatpush1.msra.mxu0 0.0
        %2225 = vmatprep.subr.mxu0 0.0
        %2226 = vmatpush1.msra.mxu0 0.0
        %2227 = vmatprep.subr.mxu0 0.0
        %2228 = vmatpush1.msra.mxu0 0.0
        %2229 = vmatprep.subr.mxu0 0.0
        %2230 = vmatpush1.msra.mxu0 0.0
        %2231 = vmatprep.mubr.f32.mxu0 0.0
        %2232 = vmatmul.mubr.f32.gmra.mrb[0].mxu0 %v1936
        %v2233 = vpop.f32.mrb[0].mxu0
        %v2234 = vadd.f32 0.0, %v2233
        %v2235 = vpop.f32.mrb[0].mxu0
        %v2236 = vadd.f32 0.0, %v2235
        %2237 = vdwg.mxu0
        %v2238 = vadd.f32 %v1883, %v2021
        %v2239 = vadd.f32 %v1884, %v2023
        %v2240 = vadd.f32 %v1885, %v2092
        %v2241 = vadd.f32 %v1886, %v2094
        %v2242 = vadd.f32 %v1887, %v2163
        %v2243 = vadd.f32 %v1888, %v2165
        %v2244 = vadd.f32 %v1889, %v2234
        %v2245 = vadd.f32 %v1890, %v2236
        %v2246 = vld [vmem:[#allocation2] sm:$0x77]
        %v2247 = vld [vmem:[#allocation2 + $0x8] sm:$0x77]
        %v2248 = vld [vmem:[#allocation2 + $0x10] sm:$0x77]
        %v2249 = vld [vmem:[#allocation2 + $0x18] sm:$0x77]
        %v2250 = vld [vmem:[#allocation2 + $0x20] sm:$0x7]
        %2251 = vrot.lane.b32.xlu0 %v1122, 34
        %v2252 = vpop.permute.xlu0 %2251
        %2253 = vrot.lane.b32.xlu0 %v1123, 34
        %v2254 = vpop.permute.xlu0 %2253
        %2255 = vrot.lane.b32.xlu0 %v1124, 34
        %v2256 = vpop.permute.xlu0 %2255
        %2257 = vrot.lane.b32.xlu0 %v1125, 34
        %v2258 = vpop.permute.xlu0 %2257
        %v2259 = vrot.slane %v2252, 4
        %v2260 = vrot.slane %v2254, 4
        %v2261 = vrot.slane %v2256, 4
        %v2262 = vrot.slane %v2258, 4
        %vm2263 = vcmask 277504
        %v2264 = vsel %vm2263, %v2259, %v2252
        %v2265 = vsel %vm345, %v2259, %v2260
        %v2266 = vsel %vm2263, %v2265, %v2254
        %v2267 = vsel %vm345, %v2260, %v2261
        %v2268 = vsel %vm2263, %v2267, %v2256
        %v2269 = vsel %vm345, %v2261, %v2262
        %v2270 = vsel %vm2263, %v2269, %v2258
        %v2276 = vmul.f32 %v2246, %v2264
        %v2277 = vmul.f32 %v2247, %v2266
        %v2278 = vmul.f32 %v2248, %v2268
        %v2279 = vmul.f32 %v2249, %v2270
        %v2280 = vmul.f32 %v2250, %v2262
        %v2281 = vld [vmem:[%s1] sm:$0xff]
        %2283 = vrot.lane.b32.xlu0 %v2281, 113
        %v2284 = vpop.permute.xlu0 %2283
        %v2290 = vcombine.high %v2276, %v2276
        %v2291 = vcombine.high %v2277, %v2277
        %v2292 = vcombine.high %v2278, %v2278
        %v2293 = vcombine.high %v2279, %v2279
        %2294 = vrot.lane.b32.xlu0 %v2276, 94
        %v2295 = vpop.permute.xlu0 %2294
        %2296 = vrot.lane.b32.xlu0 %v2290, 94
        %v2297 = vpop.permute.xlu0 %2296
        %2298 = vrot.lane.b32.xlu0 %v2277, 94
        %v2299 = vpop.permute.xlu0 %2298
        %2300 = vrot.lane.b32.xlu0 %v2291, 94
        %v2301 = vpop.permute.xlu0 %2300
        %2302 = vrot.lane.b32.xlu0 %v2278, 94
        %v2303 = vpop.permute.xlu0 %2302
        %2304 = vrot.lane.b32.xlu0 %v2292, 94
        %v2305 = vpop.permute.xlu0 %2304
        %2306 = vrot.lane.b32.xlu0 %v2279, 94
        %v2307 = vpop.permute.xlu0 %2306
        %2308 = vrot.lane.b32.xlu0 %v2293, 94
        %v2309 = vpop.permute.xlu0 %2308
        %2310 = vrot.lane.b32.xlu0 %v2280, 94
        %v2311 = vpop.permute.xlu0 %2310
        %vm2312 = vcmask 769024
        %v2313 = vsel %vm2312, %v2295, %v2297
        %v2314 = vsel %vm2312, %v2297, %v2299
        %v2315 = vsel %vm2312, %v2299, %v2301
        %v2316 = vsel %vm2312, %v2301, %v2303
        %v2317 = vsel %vm2312, %v2303, %v2305
        %v2318 = vsel %vm2312, %v2305, %v2307
        %v2319 = vsel %vm2312, %v2307, %v2309
        %v2320 = vsel %vm2312, %v2309, %v2311
        %v2321 = vsel %vm495, %v2284, 0
        %v2323 = vsel %vm498, %v2313, 0
        %v2325 = vsel %vm498, %v2314, 0
        %v2327 = vsel %vm498, %v2315, 0
        %v2329 = vsel %vm498, %v2316, 0
        %v2331 = vsel %vm498, %v2317, 0
        %v2333 = vsel %vm498, %v2318, 0
        %v2335 = vsel %vm498, %v2319, 0
        %v2337 = vsel %vm498, %v2320, 0
        %2339 = vmatprep.subr.mxu0 %v2325
        %2340 = vmatpush1.msra.mxu0 %v2323
        %2341 = vmatprep.subr.mxu0 0.0
        %2342 = vmatpush1.msra.mxu0 0.0
        %2343 = vmatprep.subr.mxu0 0.0
        %2344 = vmatpush1.msra.mxu0 0.0
        %2345 = vmatprep.subr.mxu0 0.0
        %2346 = vmatpush1.msra.mxu0 0.0
        %2347 = vmatprep.subr.mxu0 0.0
        %2348 = vmatpush1.msra.mxu0 0.0
        %2349 = vmatprep.subr.mxu0 0.0
        %2350 = vmatpush1.msra.mxu0 0.0
        %2351 = vmatprep.subr.mxu0 0.0
        %2352 = vmatpush1.msra.mxu0 0.0
        %2353 = vmatprep.subr.mxu0 0.0
        %2354 = vmatpush1.msra.mxu0 0.0
        %2355 = vmatprep.subr.mxu0 0.0
        %2356 = vmatpush1.msra.mxu0 0.0
        %2357 = vmatprep.subr.mxu0 0.0
        %2358 = vmatpush1.msra.mxu0 0.0
        %2359 = vmatprep.subr.mxu0 0.0
        %2360 = vmatpush1.msra.mxu0 0.0
        %2361 = vmatprep.subr.mxu0 0.0
        %2362 = vmatpush1.msra.mxu0 0.0
        %2363 = vmatprep.subr.mxu0 0.0
        %2364 = vmatpush1.msra.mxu0 0.0
        %2365 = vmatprep.subr.mxu0 0.0
        %2366 = vmatpush1.msra.mxu0 0.0
        %2367 = vmatprep.subr.mxu0 0.0
        %2368 = vmatpush1.msra.mxu0 0.0
        %2369 = vmatprep.subr.mxu0 0.0
        %2370 = vmatpush1.msra.mxu0 0.0
        %2371 = vmatprep.subr.mxu0 0.0
        %2372 = vmatpush1.msra.mxu0 0.0
        %2373 = vmatprep.subr.mxu0 0.0
        %2374 = vmatpush1.msra.mxu0 0.0
        %2375 = vmatprep.subr.mxu0 0.0
        %2376 = vmatpush1.msra.mxu0 0.0
        %2377 = vmatprep.subr.mxu0 0.0
        %2378 = vmatpush1.msra.mxu0 0.0
        %2379 = vmatprep.subr.mxu0 0.0
        %2380 = vmatpush1.msra.mxu0 0.0
        %2381 = vmatprep.subr.mxu0 0.0
        %2382 = vmatpush1.msra.mxu0 0.0
        %2383 = vmatprep.subr.mxu0 0.0
        %2384 = vmatpush1.msra.mxu0 0.0
        %2385 = vmatprep.subr.mxu0 0.0
        %2386 = vmatpush1.msra.mxu0 0.0
        %2387 = vmatprep.subr.mxu0 0.0
        %2388 = vmatpush1.msra.mxu0 0.0
        %2389 = vmatprep.subr.mxu0 0.0
        %2390 = vmatpush1.msra.mxu0 0.0
        %2391 = vmatprep.subr.mxu0 0.0
        %2392 = vmatpush1.msra.mxu0 0.0
        %2393 = vmatprep.subr.mxu0 0.0
        %2394 = vmatpush1.msra.mxu0 0.0
        %2395 = vmatprep.subr.mxu0 0.0
        %2396 = vmatpush1.msra.mxu0 0.0
        %2397 = vmatprep.subr.mxu0 0.0
        %2398 = vmatpush1.msra.mxu0 0.0
        %2399 = vmatprep.subr.mxu0 0.0
        %2400 = vmatpush1.msra.mxu0 0.0
        %2401 = vmatprep.subr.mxu0 0.0
        %2402 = vmatpush1.msra.mxu0 0.0
        %2403 = vmatprep.mubr.f32.mxu0 0.0
        %2404 = vmatmul.mubr.f32.gmra.mrb[0].mxu0 %v2321
        %v2405 = vpop.f32.mrb[0].mxu0
        %v2406 = vadd.f32 0.0, %v2405
        %v2407 = vpop.f32.mrb[0].mxu0
        %v2408 = vadd.f32 0.0, %v2407
        %2409 = vdwg.mxu0
        %2410 = vmatprep.subr.mxu0 %v2329
        %2411 = vmatpush1.msra.mxu0 %v2327
        %2412 = vmatprep.subr.mxu0 0.0
        %2413 = vmatpush1.msra.mxu0 0.0
        %2414 = vmatprep.subr.mxu0 0.0
        %2415 = vmatpush1.msra.mxu0 0.0
        %2416 = vmatprep.subr.mxu0 0.0
        %2417 = vmatpush1.msra.mxu0 0.0
        %2418 = vmatprep.subr.mxu0 0.0
        %2419 = vmatpush1.msra.mxu0 0.0
        %2420 = vmatprep.subr.mxu0 0.0
        %2421 = vmatpush1.msra.mxu0 0.0
        %2422 = vmatprep.subr.mxu0 0.0
        %2423 = vmatpush1.msra.mxu0 0.0
        %2424 = vmatprep.subr.mxu0 0.0
        %2425 = vmatpush1.msra.mxu0 0.0
        %2426 = vmatprep.subr.mxu0 0.0
        %2427 = vmatpush1.msra.mxu0 0.0
        %2428 = vmatprep.subr.mxu0 0.0
        %2429 = vmatpush1.msra.mxu0 0.0
        %2430 = vmatprep.subr.mxu0 0.0
        %2431 = vmatpush1.msra.mxu0 0.0
        %2432 = vmatprep.subr.mxu0 0.0
        %2433 = vmatpush1.msra.mxu0 0.0
        %2434 = vmatprep.subr.mxu0 0.0
        %2435 = vmatpush1.msra.mxu0 0.0
        %2436 = vmatprep.subr.mxu0 0.0
        %2437 = vmatpush1.msra.mxu0 0.0
        %2438 = vmatprep.subr.mxu0 0.0
        %2439 = vmatpush1.msra.mxu0 0.0
        %2440 = vmatprep.subr.mxu0 0.0
        %2441 = vmatpush1.msra.mxu0 0.0
        %2442 = vmatprep.subr.mxu0 0.0
        %2443 = vmatpush1.msra.mxu0 0.0
        %2444 = vmatprep.subr.mxu0 0.0
        %2445 = vmatpush1.msra.mxu0 0.0
        %2446 = vmatprep.subr.mxu0 0.0
        %2447 = vmatpush1.msra.mxu0 0.0
        %2448 = vmatprep.subr.mxu0 0.0
        %2449 = vmatpush1.msra.mxu0 0.0
        %2450 = vmatprep.subr.mxu0 0.0
        %2451 = vmatpush1.msra.mxu0 0.0
        %2452 = vmatprep.subr.mxu0 0.0
        %2453 = vmatpush1.msra.mxu0 0.0
        %2454 = vmatprep.subr.mxu0 0.0
        %2455 = vmatpush1.msra.mxu0 0.0
        %2456 = vmatprep.subr.mxu0 0.0
        %2457 = vmatpush1.msra.mxu0 0.0
        %2458 = vmatprep.subr.mxu0 0.0
        %2459 = vmatpush1.msra.mxu0 0.0
        %2460 = vmatprep.subr.mxu0 0.0
        %2461 = vmatpush1.msra.mxu0 0.0
        %2462 = vmatprep.subr.mxu0 0.0
        %2463 = vmatpush1.msra.mxu0 0.0
        %2464 = vmatprep.subr.mxu0 0.0
        %2465 = vmatpush1.msra.mxu0 0.0
        %2466 = vmatprep.subr.mxu0 0.0
        %2467 = vmatpush1.msra.mxu0 0.0
        %2468 = vmatprep.subr.mxu0 0.0
        %2469 = vmatpush1.msra.mxu0 0.0
        %2470 = vmatprep.subr.mxu0 0.0
        %2471 = vmatpush1.msra.mxu0 0.0
        %2472 = vmatprep.subr.mxu0 0.0
        %2473 = vmatpush1.msra.mxu0 0.0
        %2474 = vmatprep.mubr.f32.mxu0 0.0
        %2475 = vmatmul.mubr.f32.gmra.mrb[0].mxu0 %v2321
        %v2476 = vpop.f32.mrb[0].mxu0
        %v2477 = vadd.f32 0.0, %v2476
        %v2478 = vpop.f32.mrb[0].mxu0
        %v2479 = vadd.f32 0.0, %v2478
        %2480 = vdwg.mxu0
        %2481 = vmatprep.subr.mxu0 %v2333
        %2482 = vmatpush1.msra.mxu0 %v2331
        %2483 = vmatprep.subr.mxu0 0.0
        %2484 = vmatpush1.msra.mxu0 0.0
        %2485 = vmatprep.subr.mxu0 0.0
        %2486 = vmatpush1.msra.mxu0 0.0
        %2487 = vmatprep.subr.mxu0 0.0
        %2488 = vmatpush1.msra.mxu0 0.0
        %2489 = vmatprep.subr.mxu0 0.0
        %2490 = vmatpush1.msra.mxu0 0.0
        %2491 = vmatprep.subr.mxu0 0.0
        %2492 = vmatpush1.msra.mxu0 0.0
        %2493 = vmatprep.subr.mxu0 0.0
        %2494 = vmatpush1.msra.mxu0 0.0
        %2495 = vmatprep.subr.mxu0 0.0
        %2496 = vmatpush1.msra.mxu0 0.0
        %2497 = vmatprep.subr.mxu0 0.0
        %2498 = vmatpush1.msra.mxu0 0.0
        %2499 = vmatprep.subr.mxu0 0.0
        %2500 = vmatpush1.msra.mxu0 0.0
        %2501 = vmatprep.subr.mxu0 0.0
        %2502 = vmatpush1.msra.mxu0 0.0
        %2503 = vmatprep.subr.mxu0 0.0
        %2504 = vmatpush1.msra.mxu0 0.0
        %2505 = vmatprep.subr.mxu0 0.0
        %2506 = vmatpush1.msra.mxu0 0.0
        %2507 = vmatprep.subr.mxu0 0.0
        %2508 = vmatpush1.msra.mxu0 0.0
        %2509 = vmatprep.subr.mxu0 0.0
        %2510 = vmatpush1.msra.mxu0 0.0
        %2511 = vmatprep.subr.mxu0 0.0
        %2512 = vmatpush1.msra.mxu0 0.0
        %2513 = vmatprep.subr.mxu0 0.0
        %2514 = vmatpush1.msra.mxu0 0.0
        %2515 = vmatprep.subr.mxu0 0.0
        %2516 = vmatpush1.msra.mxu0 0.0
        %2517 = vmatprep.subr.mxu0 0.0
        %2518 = vmatpush1.msra.mxu0 0.0
        %2519 = vmatprep.subr.mxu0 0.0
        %2520 = vmatpush1.msra.mxu0 0.0
        %2521 = vmatprep.subr.mxu0 0.0
        %2522 = vmatpush1.msra.mxu0 0.0
        %2523 = vmatprep.subr.mxu0 0.0
        %2524 = vmatpush1.msra.mxu0 0.0
        %2525 = vmatprep.subr.mxu0 0.0
        %2526 = vmatpush1.msra.mxu0 0.0
        %2527 = vmatprep.subr.mxu0 0.0
        %2528 = vmatpush1.msra.mxu0 0.0
        %2529 = vmatprep.subr.mxu0 0.0
        %2530 = vmatpush1.msra.mxu0 0.0
        %2531 = vmatprep.subr.mxu0 0.0
        %2532 = vmatpush1.msra.mxu0 0.0
        %2533 = vmatprep.subr.mxu0 0.0
        %2534 = vmatpush1.msra.mxu0 0.0
        %2535 = vmatprep.subr.mxu0 0.0
        %2536 = vmatpush1.msra.mxu0 0.0
        %2537 = vmatprep.subr.mxu0 0.0
        %2538 = vmatpush1.msra.mxu0 0.0
        %2539 = vmatprep.subr.mxu0 0.0
        %2540 = vmatpush1.msra.mxu0 0.0
        %2541 = vmatprep.subr.mxu0 0.0
        %2542 = vmatpush1.msra.mxu0 0.0
        %2543 = vmatprep.subr.mxu0 0.0
        %2544 = vmatpush1.msra.mxu0 0.0
        %2545 = vmatprep.mubr.f32.mxu0 0.0
        %2546 = vmatmul.mubr.f32.gmra.mrb[0].mxu0 %v2321
        %v2547 = vpop.f32.mrb[0].mxu0
        %v2548 = vadd.f32 0.0, %v2547
        %v2549 = vpop.f32.mrb[0].mxu0
        %v2550 = vadd.f32 0.0, %v2549
        %2551 = vdwg.mxu0
        %2552 = vmatprep.subr.mxu0 %v2337
        %2553 = vmatpush1.msra.mxu0 %v2335
        %2554 = vmatprep.subr.mxu0 0.0
        %2555 = vmatpush1.msra.mxu0 0.0
        %2556 = vmatprep.subr.mxu0 0.0
        %2557 = vmatpush1.msra.mxu0 0.0
        %2558 = vmatprep.subr.mxu0 0.0
        %2559 = vmatpush1.msra.mxu0 0.0
        %2560 = vmatprep.subr.mxu0 0.0
        %2561 = vmatpush1.msra.mxu0 0.0
        %2562 = vmatprep.subr.mxu0 0.0
        %2563 = vmatpush1.msra.mxu0 0.0
        %2564 = vmatprep.subr.mxu0 0.0
        %2565 = vmatpush1.msra.mxu0 0.0
        %2566 = vmatprep.subr.mxu0 0.0
        %2567 = vmatpush1.msra.mxu0 0.0
        %2568 = vmatprep.subr.mxu0 0.0
        %2569 = vmatpush1.msra.mxu0 0.0
        %2570 = vmatprep.subr.mxu0 0.0
        %2571 = vmatpush1.msra.mxu0 0.0
        %2572 = vmatprep.subr.mxu0 0.0
        %2573 = vmatpush1.msra.mxu0 0.0
        %2574 = vmatprep.subr.mxu0 0.0
        %2575 = vmatpush1.msra.mxu0 0.0
        %2576 = vmatprep.subr.mxu0 0.0
        %2577 = vmatpush1.msra.mxu0 0.0
        %2578 = vmatprep.subr.mxu0 0.0
        %2579 = vmatpush1.msra.mxu0 0.0
        %2580 = vmatprep.subr.mxu0 0.0
        %2581 = vmatpush1.msra.mxu0 0.0
        %2582 = vmatprep.subr.mxu0 0.0
        %2583 = vmatpush1.msra.mxu0 0.0
        %2584 = vmatprep.subr.mxu0 0.0
        %2585 = vmatpush1.msra.mxu0 0.0
        %2586 = vmatprep.subr.mxu0 0.0
        %2587 = vmatpush1.msra.mxu0 0.0
        %2588 = vmatprep.subr.mxu0 0.0
        %2589 = vmatpush1.msra.mxu0 0.0
        %2590 = vmatprep.subr.mxu0 0.0
        %2591 = vmatpush1.msra.mxu0 0.0
        %2592 = vmatprep.subr.mxu0 0.0
        %2593 = vmatpush1.msra.mxu0 0.0
        %2594 = vmatprep.subr.mxu0 0.0
        %2595 = vmatpush1.msra.mxu0 0.0
        %2596 = vmatprep.subr.mxu0 0.0
        %2597 = vmatpush1.msra.mxu0 0.0
        %2598 = vmatprep.subr.mxu0 0.0
        %2599 = vmatpush1.msra.mxu0 0.0
        %2600 = vmatprep.subr.mxu0 0.0
        %2601 = vmatpush1.msra.mxu0 0.0
        %2602 = vmatprep.subr.mxu0 0.0
        %2603 = vmatpush1.msra.mxu0 0.0
        %2604 = vmatprep.subr.mxu0 0.0
        %2605 = vmatpush1.msra.mxu0 0.0
        %2606 = vmatprep.subr.mxu0 0.0
        %2607 = vmatpush1.msra.mxu0 0.0
        %2608 = vmatprep.subr.mxu0 0.0
        %2609 = vmatpush1.msra.mxu0 0.0
        %2610 = vmatprep.subr.mxu0 0.0
        %2611 = vmatpush1.msra.mxu0 0.0
        %2612 = vmatprep.subr.mxu0 0.0
        %2613 = vmatpush1.msra.mxu0 0.0
        %2614 = vmatprep.subr.mxu0 0.0
        %2615 = vmatpush1.msra.mxu0 0.0
        %2616 = vmatprep.mubr.f32.mxu0 0.0
        %2617 = vmatmul.mubr.f32.gmra.mrb[0].mxu0 %v2321
        %v2618 = vpop.f32.mrb[0].mxu0
        %v2619 = vadd.f32 0.0, %v2618
        %v2620 = vpop.f32.mrb[0].mxu0
        %v2621 = vadd.f32 0.0, %v2620
        %2622 = vdwg.mxu0
        %v2623 = vadd.f32 %v2238, %v2406
        %v2624 = vadd.f32 %v2239, %v2408
        %v2625 = vadd.f32 %v2240, %v2477
        %v2626 = vadd.f32 %v2241, %v2479
        %v2627 = vadd.f32 %v2242, %v2548
        %v2628 = vadd.f32 %v2243, %v2550
        %v2629 = vadd.f32 %v2244, %v2619
        %v2630 = vadd.f32 %v2245, %v2621
        %v2631 = vld [vmem:[#allocation2] sm:$0x77]
        %v2632 = vld [vmem:[#allocation2 + $0x8] sm:$0x77]
        %v2633 = vld [vmem:[#allocation2 + $0x10] sm:$0x77]
        %v2634 = vld [vmem:[#allocation2 + $0x18] sm:$0x77]
        %v2635 = vld [vmem:[#allocation2 + $0x20] sm:$0x7]
        %2636 = vrot.lane.b32.xlu0 %v442, 64
        %v2637 = vpop.permute.xlu0 %2636
        %2638 = vrot.lane.b32.xlu0 %v443, 64
        %v2639 = vpop.permute.xlu0 %2638
        %2640 = vrot.lane.b32.xlu0 %v444, 64
        %v2641 = vpop.permute.xlu0 %2640
        %2642 = vrot.lane.b32.xlu0 %v445, 64
        %v2643 = vpop.permute.xlu0 %2642
        %v2644 = vrot.slane %v2637, 4
        %v2645 = vrot.slane %v2639, 4
        %v2646 = vrot.slane %v2641, 4
        %v2647 = vrot.slane %v2643, 4
        %vm2648 = vcmask 523264
        %v2649 = vsel %vm2648, %v2644, %v2637
        %v2650 = vsel %vm345, %v2644, %v2645
        %v2651 = vsel %vm2648, %v2650, %v2639
        %v2652 = vsel %vm345, %v2645, %v2646
        %v2653 = vsel %vm2648, %v2652, %v2641
        %v2654 = vsel %vm345, %v2646, %v2647
        %v2655 = vsel %vm2648, %v2654, %v2643
        %v2661 = vmul.f32 %v2631, %v2649
        %v2662 = vmul.f32 %v2632, %v2651
        %v2663 = vmul.f32 %v2633, %v2653
        %v2664 = vmul.f32 %v2634, %v2655
        %v2665 = vmul.f32 %v2635, %v2647
        %v2666 = vld [vmem:[%s1] sm:$0xff]
        %2668 = vrot.lane.b32.xlu0 %v2666, 110
        %v2669 = vpop.permute.xlu0 %2668
        %v2675 = vcombine.high %v2661, %v2661
        %v2676 = vcombine.high %v2662, %v2662
        %v2677 = vcombine.high %v2663, %v2663
        %v2678 = vcombine.high %v2664, %v2664
        %2679 = vrot.lane.b32.xlu0 %v2661, 64
        %v2680 = vpop.permute.xlu0 %2679
        %2681 = vrot.lane.b32.xlu0 %v2675, 64
        %v2682 = vpop.permute.xlu0 %2681
        %2683 = vrot.lane.b32.xlu0 %v2662, 64
        %v2684 = vpop.permute.xlu0 %2683
        %2685 = vrot.lane.b32.xlu0 %v2676, 64
        %v2686 = vpop.permute.xlu0 %2685
        %2687 = vrot.lane.b32.xlu0 %v2663, 64
        %v2688 = vpop.permute.xlu0 %2687
        %2689 = vrot.lane.b32.xlu0 %v2677, 64
        %v2690 = vpop.permute.xlu0 %2689
        %2691 = vrot.lane.b32.xlu0 %v2664, 64
        %v2692 = vpop.permute.xlu0 %2691
        %2693 = vrot.lane.b32.xlu0 %v2678, 64
        %v2694 = vpop.permute.xlu0 %2693
        %2695 = vrot.lane.b32.xlu0 %v2665, 64
        %v2696 = vpop.permute.xlu0 %2695
        %v2697 = vsel %vm2648, %v2680, %v2682
        %v2698 = vsel %vm2648, %v2682, %v2684
        %v2699 = vsel %vm2648, %v2684, %v2686
        %v2700 = vsel %vm2648, %v2686, %v2688
        %v2701 = vsel %vm2648, %v2688, %v2690
        %v2702 = vsel %vm2648, %v2690, %v2692
        %v2703 = vsel %vm2648, %v2692, %v2694
        %v2704 = vsel %vm2648, %v2694, %v2696
        %v2705 = vsel %vm495, %v2669, 0
        %v2707 = vsel %vm498, %v2697, 0
        %v2709 = vsel %vm498, %v2698, 0
        %v2711 = vsel %vm498, %v2699, 0
        %v2713 = vsel %vm498, %v2700, 0
        %v2715 = vsel %vm498, %v2701, 0
        %v2717 = vsel %vm498, %v2702, 0
        %v2719 = vsel %vm498, %v2703, 0
        %v2721 = vsel %vm498, %v2704, 0
        %2723 = vmatprep.subr.mxu0 %v2709
        %2724 = vmatpush1.msra.mxu0 %v2707
        %2725 = vmatprep.subr.mxu0 0.0
        %2726 = vmatpush1.msra.mxu0 0.0
        %2727 = vmatprep.subr.mxu0 0.0
        %2728 = vmatpush1.msra.mxu0 0.0
        %2729 = vmatprep.subr.mxu0 0.0
        %2730 = vmatpush1.msra.mxu0 0.0
        %2731 = vmatprep.subr.mxu0 0.0
        %2732 = vmatpush1.msra.mxu0 0.0
        %2733 = vmatprep.subr.mxu0 0.0
        %2734 = vmatpush1.msra.mxu0 0.0
        %2735 = vmatprep.subr.mxu0 0.0
        %2736 = vmatpush1.msra.mxu0 0.0
        %2737 = vmatprep.subr.mxu0 0.0
        %2738 = vmatpush1.msra.mxu0 0.0
        %2739 = vmatprep.subr.mxu0 0.0
        %2740 = vmatpush1.msra.mxu0 0.0
        %2741 = vmatprep.subr.mxu0 0.0
        %2742 = vmatpush1.msra.mxu0 0.0
        %2743 = vmatprep.subr.mxu0 0.0
        %2744 = vmatpush1.msra.mxu0 0.0
        %2745 = vmatprep.subr.mxu0 0.0
        %2746 = vmatpush1.msra.mxu0 0.0
        %2747 = vmatprep.subr.mxu0 0.0
        %2748 = vmatpush1.msra.mxu0 0.0
        %2749 = vmatprep.subr.mxu0 0.0
        %2750 = vmatpush1.msra.mxu0 0.0
        %2751 = vmatprep.subr.mxu0 0.0
        %2752 = vmatpush1.msra.mxu0 0.0
        %2753 = vmatprep.subr.mxu0 0.0
        %2754 = vmatpush1.msra.mxu0 0.0
        %2755 = vmatprep.subr.mxu0 0.0
        %2756 = vmatpush1.msra.mxu0 0.0
        %2757 = vmatprep.subr.mxu0 0.0
        %2758 = vmatpush1.msra.mxu0 0.0
        %2759 = vmatprep.subr.mxu0 0.0
        %2760 = vmatpush1.msra.mxu0 0.0
        %2761 = vmatprep.subr.mxu0 0.0
        %2762 = vmatpush1.msra.mxu0 0.0
        %2763 = vmatprep.subr.mxu0 0.0
        %2764 = vmatpush1.msra.mxu0 0.0
        %2765 = vmatprep.subr.mxu0 0.0
        %2766 = vmatpush1.msra.mxu0 0.0
        %2767 = vmatprep.subr.mxu0 0.0
        %2768 = vmatpush1.msra.mxu0 0.0
        %2769 = vmatprep.subr.mxu0 0.0
        %2770 = vmatpush1.msra.mxu0 0.0
        %2771 = vmatprep.subr.mxu0 0.0
        %2772 = vmatpush1.msra.mxu0 0.0
        %2773 = vmatprep.subr.mxu0 0.0
        %2774 = vmatpush1.msra.mxu0 0.0
        %2775 = vmatprep.subr.mxu0 0.0
        %2776 = vmatpush1.msra.mxu0 0.0
        %2777 = vmatprep.subr.mxu0 0.0
        %2778 = vmatpush1.msra.mxu0 0.0
        %2779 = vmatprep.subr.mxu0 0.0
        %2780 = vmatpush1.msra.mxu0 0.0
        %2781 = vmatprep.subr.mxu0 0.0
        %2782 = vmatpush1.msra.mxu0 0.0
        %2783 = vmatprep.subr.mxu0 0.0
        %2784 = vmatpush1.msra.mxu0 0.0
        %2785 = vmatprep.subr.mxu0 0.0
        %2786 = vmatpush1.msra.mxu0 0.0
        %2787 = vmatprep.mubr.f32.mxu0 0.0
        %2788 = vmatmul.mubr.f32.gmra.mrb[0].mxu0 %v2705
        %v2789 = vpop.f32.mrb[0].mxu0
        %v2790 = vadd.f32 0.0, %v2789
        %v2791 = vpop.f32.mrb[0].mxu0
        %v2792 = vadd.f32 0.0, %v2791
        %2793 = vdwg.mxu0
        %2794 = vmatprep.subr.mxu0 %v2713
        %2795 = vmatpush1.msra.mxu0 %v2711
        %2796 = vmatprep.subr.mxu0 0.0
        %2797 = vmatpush1.msra.mxu0 0.0
        %2798 = vmatprep.subr.mxu0 0.0
        %2799 = vmatpush1.msra.mxu0 0.0
        %2800 = vmatprep.subr.mxu0 0.0
        %2801 = vmatpush1.msra.mxu0 0.0
        %2802 = vmatprep.subr.mxu0 0.0
        %2803 = vmatpush1.msra.mxu0 0.0
        %2804 = vmatprep.subr.mxu0 0.0
        %2805 = vmatpush1.msra.mxu0 0.0
        %2806 = vmatprep.subr.mxu0 0.0
        %2807 = vmatpush1.msra.mxu0 0.0
        %2808 = vmatprep.subr.mxu0 0.0
        %2809 = vmatpush1.msra.mxu0 0.0
        %2810 = vmatprep.subr.mxu0 0.0
        %2811 = vmatpush1.msra.mxu0 0.0
        %2812 = vmatprep.subr.mxu0 0.0
        %2813 = vmatpush1.msra.mxu0 0.0
        %2814 = vmatprep.subr.mxu0 0.0
        %2815 = vmatpush1.msra.mxu0 0.0
        %2816 = vmatprep.subr.mxu0 0.0
        %2817 = vmatpush1.msra.mxu0 0.0
        %2818 = vmatprep.subr.mxu0 0.0
        %2819 = vmatpush1.msra.mxu0 0.0
        %2820 = vmatprep.subr.mxu0 0.0
        %2821 = vmatpush1.msra.mxu0 0.0
        %2822 = vmatprep.subr.mxu0 0.0
        %2823 = vmatpush1.msra.mxu0 0.0
        %2824 = vmatprep.subr.mxu0 0.0
        %2825 = vmatpush1.msra.mxu0 0.0
        %2826 = vmatprep.subr.mxu0 0.0
        %2827 = vmatpush1.msra.mxu0 0.0
        %2828 = vmatprep.subr.mxu0 0.0
        %2829 = vmatpush1.msra.mxu0 0.0
        %2830 = vmatprep.subr.mxu0 0.0
        %2831 = vmatpush1.msra.mxu0 0.0
        %2832 = vmatprep.subr.mxu0 0.0
        %2833 = vmatpush1.msra.mxu0 0.0
        %2834 = vmatprep.subr.mxu0 0.0
        %2835 = vmatpush1.msra.mxu0 0.0
        %2836 = vmatprep.subr.mxu0 0.0
        %2837 = vmatpush1.msra.mxu0 0.0
        %2838 = vmatprep.subr.mxu0 0.0
        %2839 = vmatpush1.msra.mxu0 0.0
        %2840 = vmatprep.subr.mxu0 0.0
        %2841 = vmatpush1.msra.mxu0 0.0
        %2842 = vmatprep.subr.mxu0 0.0
        %2843 = vmatpush1.msra.mxu0 0.0
        %2844 = vmatprep.subr.mxu0 0.0
        %2845 = vmatpush1.msra.mxu0 0.0
        %2846 = vmatprep.subr.mxu0 0.0
        %2847 = vmatpush1.msra.mxu0 0.0
        %2848 = vmatprep.subr.mxu0 0.0
        %2849 = vmatpush1.msra.mxu0 0.0
        %2850 = vmatprep.subr.mxu0 0.0
        %2851 = vmatpush1.msra.mxu0 0.0
        %2852 = vmatprep.subr.mxu0 0.0
        %2853 = vmatpush1.msra.mxu0 0.0
        %2854 = vmatprep.subr.mxu0 0.0
        %2855 = vmatpush1.msra.mxu0 0.0
        %2856 = vmatprep.subr.mxu0 0.0
        %2857 = vmatpush1.msra.mxu0 0.0
        %2858 = vmatprep.mubr.f32.mxu0 0.0
        %2859 = vmatmul.mubr.f32.gmra.mrb[0].mxu0 %v2705
        %v2860 = vpop.f32.mrb[0].mxu0
        %v2861 = vadd.f32 0.0, %v2860
        %v2862 = vpop.f32.mrb[0].mxu0
        %v2863 = vadd.f32 0.0, %v2862
        %2864 = vdwg.mxu0
        %2865 = vmatprep.subr.mxu0 %v2717
        %2866 = vmatpush1.msra.mxu0 %v2715
        %2867 = vmatprep.subr.mxu0 0.0
        %2868 = vmatpush1.msra.mxu0 0.0
        %2869 = vmatprep.subr.mxu0 0.0
        %2870 = vmatpush1.msra.mxu0 0.0
        %2871 = vmatprep.subr.mxu0 0.0
        %2872 = vmatpush1.msra.mxu0 0.0
        %2873 = vmatprep.subr.mxu0 0.0
        %2874 = vmatpush1.msra.mxu0 0.0
        %2875 = vmatprep.subr.mxu0 0.0
        %2876 = vmatpush1.msra.mxu0 0.0
        %2877 = vmatprep.subr.mxu0 0.0
        %2878 = vmatpush1.msra.mxu0 0.0
        %2879 = vmatprep.subr.mxu0 0.0
        %2880 = vmatpush1.msra.mxu0 0.0
        %2881 = vmatprep.subr.mxu0 0.0
        %2882 = vmatpush1.msra.mxu0 0.0
        %2883 = vmatprep.subr.mxu0 0.0
        %2884 = vmatpush1.msra.mxu0 0.0
        %2885 = vmatprep.subr.mxu0 0.0
        %2886 = vmatpush1.msra.mxu0 0.0
        %2887 = vmatprep.subr.mxu0 0.0
        %2888 = vmatpush1.msra.mxu0 0.0
        %2889 = vmatprep.subr.mxu0 0.0
        %2890 = vmatpush1.msra.mxu0 0.0
        %2891 = vmatprep.subr.mxu0 0.0
        %2892 = vmatpush1.msra.mxu0 0.0
        %2893 = vmatprep.subr.mxu0 0.0
        %2894 = vmatpush1.msra.mxu0 0.0
        %2895 = vmatprep.subr.mxu0 0.0
        %2896 = vmatpush1.msra.mxu0 0.0
        %2897 = vmatprep.subr.mxu0 0.0
        %2898 = vmatpush1.msra.mxu0 0.0
        %2899 = vmatprep.subr.mxu0 0.0
        %2900 = vmatpush1.msra.mxu0 0.0
        %2901 = vmatprep.subr.mxu0 0.0
        %2902 = vmatpush1.msra.mxu0 0.0
        %2903 = vmatprep.subr.mxu0 0.0
        %2904 = vmatpush1.msra.mxu0 0.0
        %2905 = vmatprep.subr.mxu0 0.0
        %2906 = vmatpush1.msra.mxu0 0.0
        %2907 = vmatprep.subr.mxu0 0.0
        %2908 = vmatpush1.msra.mxu0 0.0
        %2909 = vmatprep.subr.mxu0 0.0
        %2910 = vmatpush1.msra.mxu0 0.0
        %2911 = vmatprep.subr.mxu0 0.0
        %2912 = vmatpush1.msra.mxu0 0.0
        %2913 = vmatprep.subr.mxu0 0.0
        %2914 = vmatpush1.msra.mxu0 0.0
        %2915 = vmatprep.subr.mxu0 0.0
        %2916 = vmatpush1.msra.mxu0 0.0
        %2917 = vmatprep.subr.mxu0 0.0
        %2918 = vmatpush1.msra.mxu0 0.0
        %2919 = vmatprep.subr.mxu0 0.0
        %2920 = vmatpush1.msra.mxu0 0.0
        %2921 = vmatprep.subr.mxu0 0.0
        %2922 = vmatpush1.msra.mxu0 0.0
        %2923 = vmatprep.subr.mxu0 0.0
        %2924 = vmatpush1.msra.mxu0 0.0
        %2925 = vmatprep.subr.mxu0 0.0
        %2926 = vmatpush1.msra.mxu0 0.0
        %2927 = vmatprep.subr.mxu0 0.0
        %2928 = vmatpush1.msra.mxu0 0.0
        %2929 = vmatprep.mubr.f32.mxu0 0.0
        %2930 = vmatmul.mubr.f32.gmra.mrb[0].mxu0 %v2705
        %v2931 = vpop.f32.mrb[0].mxu0
        %v2932 = vadd.f32 0.0, %v2931
        %v2933 = vpop.f32.mrb[0].mxu0
        %v2934 = vadd.f32 0.0, %v2933
        %2935 = vdwg.mxu0
        %2936 = vmatprep.subr.mxu0 %v2721
        %2937 = vmatpush1.msra.mxu0 %v2719
        %2938 = vmatprep.subr.mxu0 0.0
        %2939 = vmatpush1.msra.mxu0 0.0
        %2940 = vmatprep.subr.mxu0 0.0
        %2941 = vmatpush1.msra.mxu0 0.0
        %2942 = vmatprep.subr.mxu0 0.0
        %2943 = vmatpush1.msra.mxu0 0.0
        %2944 = vmatprep.subr.mxu0 0.0
        %2945 = vmatpush1.msra.mxu0 0.0
        %2946 = vmatprep.subr.mxu0 0.0
        %2947 = vmatpush1.msra.mxu0 0.0
        %2948 = vmatprep.subr.mxu0 0.0
        %2949 = vmatpush1.msra.mxu0 0.0
        %2950 = vmatprep.subr.mxu0 0.0
        %2951 = vmatpush1.msra.mxu0 0.0
        %2952 = vmatprep.subr.mxu0 0.0
        %2953 = vmatpush1.msra.mxu0 0.0
        %2954 = vmatprep.subr.mxu0 0.0
        %2955 = vmatpush1.msra.mxu0 0.0
        %2956 = vmatprep.subr.mxu0 0.0
        %2957 = vmatpush1.msra.mxu0 0.0
        %2958 = vmatprep.subr.mxu0 0.0
        %2959 = vmatpush1.msra.mxu0 0.0
        %2960 = vmatprep.subr.mxu0 0.0
        %2961 = vmatpush1.msra.mxu0 0.0
        %2962 = vmatprep.subr.mxu0 0.0
        %2963 = vmatpush1.msra.mxu0 0.0
        %2964 = vmatprep.subr.mxu0 0.0
        %2965 = vmatpush1.msra.mxu0 0.0
        %2966 = vmatprep.subr.mxu0 0.0
        %2967 = vmatpush1.msra.mxu0 0.0
        %2968 = vmatprep.subr.mxu0 0.0
        %2969 = vmatpush1.msra.mxu0 0.0
        %2970 = vmatprep.subr.mxu0 0.0
        %2971 = vmatpush1.msra.mxu0 0.0
        %2972 = vmatprep.subr.mxu0 0.0
        %2973 = vmatpush1.msra.mxu0 0.0
        %2974 = vmatprep.subr.mxu0 0.0
        %2975 = vmatpush1.msra.mxu0 0.0
        %2976 = vmatprep.subr.mxu0 0.0
        %2977 = vmatpush1.msra.mxu0 0.0
        %2978 = vmatprep.subr.mxu0 0.0
        %2979 = vmatpush1.msra.mxu0 0.0
        %2980 = vmatprep.subr.mxu0 0.0
        %2981 = vmatpush1.msra.mxu0 0.0
        %2982 = vmatprep.subr.mxu0 0.0
        %2983 = vmatpush1.msra.mxu0 0.0
        %2984 = vmatprep.subr.mxu0 0.0
        %2985 = vmatpush1.msra.mxu0 0.0
        %2986 = vmatprep.subr.mxu0 0.0
        %2987 = vmatpush1.msra.mxu0 0.0
        %2988 = vmatprep.subr.mxu0 0.0
        %2989 = vmatpush1.msra.mxu0 0.0
        %2990 = vmatprep.subr.mxu0 0.0
        %2991 = vmatpush1.msra.mxu0 0.0
        %2992 = vmatprep.subr.mxu0 0.0
        %2993 = vmatpush1.msra.mxu0 0.0
        %2994 = vmatprep.subr.mxu0 0.0
        %2995 = vmatpush1.msra.mxu0 0.0
        %2996 = vmatprep.subr.mxu0 0.0
        %2997 = vmatpush1.msra.mxu0 0.0
        %2998 = vmatprep.subr.mxu0 0.0
        %2999 = vmatpush1.msra.mxu0 0.0
        %3000 = vmatprep.mubr.f32.mxu0 0.0
        %3001 = vmatmul.mubr.f32.gmra.mrb[0].mxu0 %v2705
        %v3002 = vpop.f32.mrb[0].mxu0
        %v3003 = vadd.f32 0.0, %v3002
        %v3004 = vpop.f32.mrb[0].mxu0
        %v3005 = vadd.f32 0.0, %v3004
        %3006 = vdwg.mxu0
        %v3007 = vadd.f32 %v2623, %v2790
        %v3008 = vadd.f32 %v2624, %v2792
        %v3009 = vadd.f32 %v2625, %v2861
        %v3010 = vadd.f32 %v2626, %v2863
        %v3011 = vadd.f32 %v2627, %v2932
        %v3012 = vadd.f32 %v2628, %v2934
        %v3013 = vadd.f32 %v2629, %v3003
        %v3014 = vadd.f32 %v2630, %v3005
        %v3015 = vld [vmem:[#allocation2] sm:$0x77]
        %v3016 = vld [vmem:[#allocation2 + $0x8] sm:$0x77]
        %v3017 = vld [vmem:[#allocation2 + $0x10] sm:$0x77]
        %v3018 = vld [vmem:[#allocation2 + $0x18] sm:$0x77]
        %v3019 = vld [vmem:[#allocation2 + $0x20] sm:$0x7]
        %v3020 = vld [vmem:[%s1] sm:$0xff]
        %3022 = vrot.lane.b32.xlu0 %v3020, 107
        %v3023 = vpop.permute.xlu0 %3022
        %v3029 = vcombine.high %v3015, %v3015
        %v3030 = vcombine.high %v3016, %v3016
        %v3031 = vcombine.high %v3017, %v3017
        %v3032 = vcombine.high %v3018, %v3018
        %3033 = vrot.lane.b32.xlu0 %v3015, 63
        %v3034 = vpop.permute.xlu0 %3033
        %3035 = vrot.lane.b32.xlu0 %v3029, 63
        %v3036 = vpop.permute.xlu0 %3035
        %3037 = vrot.lane.b32.xlu0 %v3016, 63
        %v3038 = vpop.permute.xlu0 %3037
        %3039 = vrot.lane.b32.xlu0 %v3030, 63
        %v3040 = vpop.permute.xlu0 %3039
        %3041 = vrot.lane.b32.xlu0 %v3017, 63
        %v3042 = vpop.permute.xlu0 %3041
        %3043 = vrot.lane.b32.xlu0 %v3031, 63
        %v3044 = vpop.permute.xlu0 %3043
        %3045 = vrot.lane.b32.xlu0 %v3018, 63
        %v3046 = vpop.permute.xlu0 %3045
        %3047 = vrot.lane.b32.xlu0 %v3032, 63
        %v3048 = vpop.permute.xlu0 %3047
        %3049 = vrot.lane.b32.xlu0 %v3019, 63
        %v3050 = vpop.permute.xlu0 %3049
        %vm3051 = vcmask 515072
        %v3052 = vsel %vm3051, %v3034, %v3036
        %v3053 = vsel %vm3051, %v3036, %v3038
        %v3054 = vsel %vm3051, %v3038, %v3040
        %v3055 = vsel %vm3051, %v3040, %v3042
        %v3056 = vsel %vm3051, %v3042, %v3044
        %v3057 = vsel %vm3051, %v3044, %v3046
        %v3058 = vsel %vm3051, %v3046, %v3048
        %v3059 = vsel %vm3051, %v3048, %v3050
        %v3060 = vsel %vm495, %v3023, 0
        %v3062 = vsel %vm498, %v3052, 0
        %v3064 = vsel %vm498, %v3053, 0
        %v3066 = vsel %vm498, %v3054, 0
        %v3068 = vsel %vm498, %v3055, 0
        %v3070 = vsel %vm498, %v3056, 0
        %v3072 = vsel %vm498, %v3057, 0
        %v3074 = vsel %vm498, %v3058, 0
        %v3076 = vsel %vm498, %v3059, 0
        %3078 = vmatprep.subr.mxu0 %v3064
        %3079 = vmatpush1.msra.mxu0 %v3062
        %3080 = vmatprep.subr.mxu0 0.0
        %3081 = vmatpush1.msra.mxu0 0.0
        %3082 = vmatprep.subr.mxu0 0.0
        %3083 = vmatpush1.msra.mxu0 0.0
        %3084 = vmatprep.subr.mxu0 0.0
        %3085 = vmatpush1.msra.mxu0 0.0
        %3086 = vmatprep.subr.mxu0 0.0
        %3087 = vmatpush1.msra.mxu0 0.0
        %3088 = vmatprep.subr.mxu0 0.0
        %3089 = vmatpush1.msra.mxu0 0.0
        %3090 = vmatprep.subr.mxu0 0.0
        %3091 = vmatpush1.msra.mxu0 0.0
        %3092 = vmatprep.subr.mxu0 0.0
        %3093 = vmatpush1.msra.mxu0 0.0
        %3094 = vmatprep.subr.mxu0 0.0
        %3095 = vmatpush1.msra.mxu0 0.0
        %3096 = vmatprep.subr.mxu0 0.0
        %3097 = vmatpush1.msra.mxu0 0.0
        %3098 = vmatprep.subr.mxu0 0.0
        %3099 = vmatpush1.msra.mxu0 0.0
        %3100 = vmatprep.subr.mxu0 0.0
        %3101 = vmatpush1.msra.mxu0 0.0
        %3102 = vmatprep.subr.mxu0 0.0
        %3103 = vmatpush1.msra.mxu0 0.0
        %3104 = vmatprep.subr.mxu0 0.0
        %3105 = vmatpush1.msra.mxu0 0.0
        %3106 = vmatprep.subr.mxu0 0.0
        %3107 = vmatpush1.msra.mxu0 0.0
        %3108 = vmatprep.subr.mxu0 0.0
        %3109 = vmatpush1.msra.mxu0 0.0
        %3110 = vmatprep.subr.mxu0 0.0
        %3111 = vmatpush1.msra.mxu0 0.0
        %3112 = vmatprep.subr.mxu0 0.0
        %3113 = vmatpush1.msra.mxu0 0.0
        %3114 = vmatprep.subr.mxu0 0.0
        %3115 = vmatpush1.msra.mxu0 0.0
        %3116 = vmatprep.subr.mxu0 0.0
        %3117 = vmatpush1.msra.mxu0 0.0
        %3118 = vmatprep.subr.mxu0 0.0
        %3119 = vmatpush1.msra.mxu0 0.0
        %3120 = vmatprep.subr.mxu0 0.0
        %3121 = vmatpush1.msra.mxu0 0.0
        %3122 = vmatprep.subr.mxu0 0.0
        %3123 = vmatpush1.msra.mxu0 0.0
        %3124 = vmatprep.subr.mxu0 0.0
        %3125 = vmatpush1.msra.mxu0 0.0
        %3126 = vmatprep.subr.mxu0 0.0
        %3127 = vmatpush1.msra.mxu0 0.0
        %3128 = vmatprep.subr.mxu0 0.0
        %3129 = vmatpush1.msra.mxu0 0.0
        %3130 = vmatprep.subr.mxu0 0.0
        %3131 = vmatpush1.msra.mxu0 0.0
        %3132 = vmatprep.subr.mxu0 0.0
        %3133 = vmatpush1.msra.mxu0 0.0
        %3134 = vmatprep.subr.mxu0 0.0
        %3135 = vmatpush1.msra.mxu0 0.0
        %3136 = vmatprep.subr.mxu0 0.0
        %3137 = vmatpush1.msra.mxu0 0.0
        %3138 = vmatprep.subr.mxu0 0.0
        %3139 = vmatpush1.msra.mxu0 0.0
        %3140 = vmatprep.subr.mxu0 0.0
        %3141 = vmatpush1.msra.mxu0 0.0
        %3142 = vmatprep.mubr.f32.mxu0 0.0
        %3143 = vmatmul.mubr.f32.gmra.mrb[0].mxu0 %v3060
        %v3144 = vpop.f32.mrb[0].mxu0
        %v3145 = vadd.f32 0.0, %v3144
        %v3146 = vpop.f32.mrb[0].mxu0
        %v3147 = vadd.f32 0.0, %v3146
        %3148 = vdwg.mxu0
        %3149 = vmatprep.subr.mxu0 %v3068
        %3150 = vmatpush1.msra.mxu0 %v3066
        %3151 = vmatprep.subr.mxu0 0.0
        %3152 = vmatpush1.msra.mxu0 0.0
        %3153 = vmatprep.subr.mxu0 0.0
        %3154 = vmatpush1.msra.mxu0 0.0
        %3155 = vmatprep.subr.mxu0 0.0
        %3156 = vmatpush1.msra.mxu0 0.0
        %3157 = vmatprep.subr.mxu0 0.0
        %3158 = vmatpush1.msra.mxu0 0.0
        %3159 = vmatprep.subr.mxu0 0.0
        %3160 = vmatpush1.msra.mxu0 0.0
        %3161 = vmatprep.subr.mxu0 0.0
        %3162 = vmatpush1.msra.mxu0 0.0
        %3163 = vmatprep.subr.mxu0 0.0
        %3164 = vmatpush1.msra.mxu0 0.0
        %3165 = vmatprep.subr.mxu0 0.0
        %3166 = vmatpush1.msra.mxu0 0.0
        %3167 = vmatprep.subr.mxu0 0.0
        %3168 = vmatpush1.msra.mxu0 0.0
        %3169 = vmatprep.subr.mxu0 0.0
        %3170 = vmatpush1.msra.mxu0 0.0
        %3171 = vmatprep.subr.mxu0 0.0
        %3172 = vmatpush1.msra.mxu0 0.0
        %3173 = vmatprep.subr.mxu0 0.0
        %3174 = vmatpush1.msra.mxu0 0.0
        %3175 = vmatprep.subr.mxu0 0.0
        %3176 = vmatpush1.msra.mxu0 0.0
        %3177 = vmatprep.subr.mxu0 0.0
        %3178 = vmatpush1.msra.mxu0 0.0
        %3179 = vmatprep.subr.mxu0 0.0
        %3180 = vmatpush1.msra.mxu0 0.0
        %3181 = vmatprep.subr.mxu0 0.0
        %3182 = vmatpush1.msra.mxu0 0.0
        %3183 = vmatprep.subr.mxu0 0.0
        %3184 = vmatpush1.msra.mxu0 0.0
        %3185 = vmatprep.subr.mxu0 0.0
        %3186 = vmatpush1.msra.mxu0 0.0
        %3187 = vmatprep.subr.mxu0 0.0
        %3188 = vmatpush1.msra.mxu0 0.0
        %3189 = vmatprep.subr.mxu0 0.0
        %3190 = vmatpush1.msra.mxu0 0.0
        %3191 = vmatprep.subr.mxu0 0.0
        %3192 = vmatpush1.msra.mxu0 0.0
        %3193 = vmatprep.subr.mxu0 0.0
        %3194 = vmatpush1.msra.mxu0 0.0
        %3195 = vmatprep.subr.mxu0 0.0
        %3196 = vmatpush1.msra.mxu0 0.0
        %3197 = vmatprep.subr.mxu0 0.0
        %3198 = vmatpush1.msra.mxu0 0.0
        %3199 = vmatprep.subr.mxu0 0.0
        %3200 = vmatpush1.msra.mxu0 0.0
        %3201 = vmatprep.subr.mxu0 0.0
        %3202 = vmatpush1.msra.mxu0 0.0
        %3203 = vmatprep.subr.mxu0 0.0
        %3204 = vmatpush1.msra.mxu0 0.0
        %3205 = vmatprep.subr.mxu0 0.0
        %3206 = vmatpush1.msra.mxu0 0.0
        %3207 = vmatprep.subr.mxu0 0.0
        %3208 = vmatpush1.msra.mxu0 0.0
        %3209 = vmatprep.subr.mxu0 0.0
        %3210 = vmatpush1.msra.mxu0 0.0
        %3211 = vmatprep.subr.mxu0 0.0
        %3212 = vmatpush1.msra.mxu0 0.0
        %3213 = vmatprep.mubr.f32.mxu0 0.0
        %3214 = vmatmul.mubr.f32.gmra.mrb[0].mxu0 %v3060
        %v3215 = vpop.f32.mrb[0].mxu0
        %v3216 = vadd.f32 0.0, %v3215
        %v3217 = vpop.f32.mrb[0].mxu0
        %v3218 = vadd.f32 0.0, %v3217
        %3219 = vdwg.mxu0
        %3220 = vmatprep.subr.mxu0 %v3072
        %3221 = vmatpush1.msra.mxu0 %v3070
        %3222 = vmatprep.subr.mxu0 0.0
        %3223 = vmatpush1.msra.mxu0 0.0
        %3224 = vmatprep.subr.mxu0 0.0
        %3225 = vmatpush1.msra.mxu0 0.0
        %3226 = vmatprep.subr.mxu0 0.0
        %3227 = vmatpush1.msra.mxu0 0.0
        %3228 = vmatprep.subr.mxu0 0.0
        %3229 = vmatpush1.msra.mxu0 0.0
        %3230 = vmatprep.subr.mxu0 0.0
        %3231 = vmatpush1.msra.mxu0 0.0
        %3232 = vmatprep.subr.mxu0 0.0
        %3233 = vmatpush1.msra.mxu0 0.0
        %3234 = vmatprep.subr.mxu0 0.0
        %3235 = vmatpush1.msra.mxu0 0.0
        %3236 = vmatprep.subr.mxu0 0.0
        %3237 = vmatpush1.msra.mxu0 0.0
        %3238 = vmatprep.subr.mxu0 0.0
        %3239 = vmatpush1.msra.mxu0 0.0
        %3240 = vmatprep.subr.mxu0 0.0
        %3241 = vmatpush1.msra.mxu0 0.0
        %3242 = vmatprep.subr.mxu0 0.0
        %3243 = vmatpush1.msra.mxu0 0.0
        %3244 = vmatprep.subr.mxu0 0.0
        %3245 = vmatpush1.msra.mxu0 0.0
        %3246 = vmatprep.subr.mxu0 0.0
        %3247 = vmatpush1.msra.mxu0 0.0
        %3248 = vmatprep.subr.mxu0 0.0
        %3249 = vmatpush1.msra.mxu0 0.0
        %3250 = vmatprep.subr.mxu0 0.0
        %3251 = vmatpush1.msra.mxu0 0.0
        %3252 = vmatprep.subr.mxu0 0.0
        %3253 = vmatpush1.msra.mxu0 0.0
        %3254 = vmatprep.subr.mxu0 0.0
        %3255 = vmatpush1.msra.mxu0 0.0
        %3256 = vmatprep.subr.mxu0 0.0
        %3257 = vmatpush1.msra.mxu0 0.0
        %3258 = vmatprep.subr.mxu0 0.0
        %3259 = vmatpush1.msra.mxu0 0.0
        %3260 = vmatprep.subr.mxu0 0.0
        %3261 = vmatpush1.msra.mxu0 0.0
        %3262 = vmatprep.subr.mxu0 0.0
        %3263 = vmatpush1.msra.mxu0 0.0
        %3264 = vmatprep.subr.mxu0 0.0
        %3265 = vmatpush1.msra.mxu0 0.0
        %3266 = vmatprep.subr.mxu0 0.0
        %3267 = vmatpush1.msra.mxu0 0.0
        %3268 = vmatprep.subr.mxu0 0.0
        %3269 = vmatpush1.msra.mxu0 0.0
        %3270 = vmatprep.subr.mxu0 0.0
        %3271 = vmatpush1.msra.mxu0 0.0
        %3272 = vmatprep.subr.mxu0 0.0
        %3273 = vmatpush1.msra.mxu0 0.0
        %3274 = vmatprep.subr.mxu0 0.0
        %3275 = vmatpush1.msra.mxu0 0.0
        %3276 = vmatprep.subr.mxu0 0.0
        %3277 = vmatpush1.msra.mxu0 0.0
        %3278 = vmatprep.subr.mxu0 0.0
        %3279 = vmatpush1.msra.mxu0 0.0
        %3280 = vmatprep.subr.mxu0 0.0
        %3281 = vmatpush1.msra.mxu0 0.0
        %3282 = vmatprep.subr.mxu0 0.0
        %3283 = vmatpush1.msra.mxu0 0.0
        %3284 = vmatprep.mubr.f32.mxu0 0.0
        %3285 = vmatmul.mubr.f32.gmra.mrb[0].mxu0 %v3060
        %v3286 = vpop.f32.mrb[0].mxu0
        %v3287 = vadd.f32 0.0, %v3286
        %v3288 = vpop.f32.mrb[0].mxu0
        %v3289 = vadd.f32 0.0, %v3288
        %3290 = vdwg.mxu0
        %3291 = vmatprep.subr.mxu0 %v3076
        %3292 = vmatpush1.msra.mxu0 %v3074
        %3293 = vmatprep.subr.mxu0 0.0
        %3294 = vmatpush1.msra.mxu0 0.0
        %3295 = vmatprep.subr.mxu0 0.0
        %3296 = vmatpush1.msra.mxu0 0.0
        %3297 = vmatprep.subr.mxu0 0.0
        %3298 = vmatpush1.msra.mxu0 0.0
        %3299 = vmatprep.subr.mxu0 0.0
        %3300 = vmatpush1.msra.mxu0 0.0
        %3301 = vmatprep.subr.mxu0 0.0
        %3302 = vmatpush1.msra.mxu0 0.0
        %3303 = vmatprep.subr.mxu0 0.0
        %3304 = vmatpush1.msra.mxu0 0.0
        %3305 = vmatprep.subr.mxu0 0.0
        %3306 = vmatpush1.msra.mxu0 0.0
        %3307 = vmatprep.subr.mxu0 0.0
        %3308 = vmatpush1.msra.mxu0 0.0
        %3309 = vmatprep.subr.mxu0 0.0
        %3310 = vmatpush1.msra.mxu0 0.0
        %3311 = vmatprep.subr.mxu0 0.0
        %3312 = vmatpush1.msra.mxu0 0.0
        %3313 = vmatprep.subr.mxu0 0.0
        %3314 = vmatpush1.msra.mxu0 0.0
        %3315 = vmatprep.subr.mxu0 0.0
        %3316 = vmatpush1.msra.mxu0 0.0
        %3317 = vmatprep.subr.mxu0 0.0
        %3318 = vmatpush1.msra.mxu0 0.0
        %3319 = vmatprep.subr.mxu0 0.0
        %3320 = vmatpush1.msra.mxu0 0.0
        %3321 = vmatprep.subr.mxu0 0.0
        %3322 = vmatpush1.msra.mxu0 0.0
        %3323 = vmatprep.subr.mxu0 0.0
        %3324 = vmatpush1.msra.mxu0 0.0
        %3325 = vmatprep.subr.mxu0 0.0
        %3326 = vmatpush1.msra.mxu0 0.0
        %3327 = vmatprep.subr.mxu0 0.0
        %3328 = vmatpush1.msra.mxu0 0.0
        %3329 = vmatprep.subr.mxu0 0.0
        %3330 = vmatpush1.msra.mxu0 0.0
        %3331 = vmatprep.subr.mxu0 0.0
        %3332 = vmatpush1.msra.mxu0 0.0
        %3333 = vmatprep.subr.mxu0 0.0
        %3334 = vmatpush1.msra.mxu0 0.0
        %3335 = vmatprep.subr.mxu0 0.0
        %3336 = vmatpush1.msra.mxu0 0.0
        %3337 = vmatprep.subr.mxu0 0.0
        %3338 = vmatpush1.msra.mxu0 0.0
        %3339 = vmatprep.subr.mxu0 0.0
        %3340 = vmatpush1.msra.mxu0 0.0
        %3341 = vmatprep.subr.mxu0 0.0
        %3342 = vmatpush1.msra.mxu0 0.0
        %3343 = vmatprep.subr.mxu0 0.0
        %3344 = vmatpush1.msra.mxu0 0.0
        %3345 = vmatprep.subr.mxu0 0.0
        %3346 = vmatpush1.msra.mxu0 0.0
        %3347 = vmatprep.subr.mxu0 0.0
        %3348 = vmatpush1.msra.mxu0 0.0
        %3349 = vmatprep.subr.mxu0 0.0
        %3350 = vmatpush1.msra.mxu0 0.0
        %3351 = vmatprep.subr.mxu0 0.0
        %3352 = vmatpush1.msra.mxu0 0.0
        %3353 = vmatprep.subr.mxu0 0.0
        %3354 = vmatpush1.msra.mxu0 0.0
        %3355 = vmatprep.mubr.f32.mxu0 0.0
        %3356 = vmatmul.mubr.f32.gmra.mrb[0].mxu0 %v3060
        %v3357 = vpop.f32.mrb[0].mxu0
        %v3358 = vadd.f32 0.0, %v3357
        %v3359 = vpop.f32.mrb[0].mxu0
        %v3360 = vadd.f32 0.0, %v3359
        %3361 = vdwg.mxu0
        %v3362 = vadd.f32 %v3007, %v3145
        %v3363 = vadd.f32 %v3008, %v3147
        %v3364 = vadd.f32 %v3009, %v3216
        %v3365 = vadd.f32 %v3010, %v3218
        %v3366 = vadd.f32 %v3011, %v3287
        %v3367 = vadd.f32 %v3012, %v3289
        %v3368 = vadd.f32 %v3013, %v3358
        %v3369 = vadd.f32 %v3014, %v3360
        %v3370 = vld [vmem:[#allocation2] sm:$0x77]
        %v3371 = vld [vmem:[#allocation2 + $0x8] sm:$0x77]
        %v3372 = vld [vmem:[#allocation2 + $0x10] sm:$0x77]
        %v3373 = vld [vmem:[#allocation2 + $0x18] sm:$0x77]
        %v3374 = vld [vmem:[#allocation2 + $0x20] sm:$0x7]
        %3375 = vrot.lane.b32.xlu0 %v1122, 66
        %v3376 = vpop.permute.xlu0 %3375
        %3377 = vrot.lane.b32.xlu0 %v1123, 66
        %v3378 = vpop.permute.xlu0 %3377
        %3379 = vrot.lane.b32.xlu0 %v1124, 66
        %v3380 = vpop.permute.xlu0 %3379
        %3381 = vrot.lane.b32.xlu0 %v1125, 66
        %v3382 = vpop.permute.xlu0 %3381
        %v3383 = vrot.slane %v3376, 4
        %v3384 = vrot.slane %v3378, 4
        %v3385 = vrot.slane %v3380, 4
        %v3386 = vrot.slane %v3382, 4
        %vm3387 = vcmask 539648
        %v3388 = vsel %vm3387, %v3383, %v3376
        %v3389 = vsel %vm345, %v3383, %v3384
        %v3390 = vsel %vm3387, %v3389, %v3378
        %v3391 = vsel %vm345, %v3384, %v3385
        %v3392 = vsel %vm3387, %v3391, %v3380
        %v3393 = vsel %vm345, %v3385, %v3386
        %v3394 = vsel %vm3387, %v3393, %v3382
        %v3400 = vmul.f32 %v3370, %v3388
        %v3401 = vmul.f32 %v3371, %v3390
        %v3402 = vmul.f32 %v3372, %v3392
        %v3403 = vmul.f32 %v3373, %v3394
        %v3404 = vmul.f32 %v3374, %v3386
        %v3405 = vld [vmem:[%s1] sm:$0xff]
        %3407 = vrot.lane.b32.xlu0 %v3405, 104
        %v3408 = vpop.permute.xlu0 %3407
        %v3414 = vcombine.high %v3400, %v3400
        %v3415 = vcombine.high %v3401, %v3401
        %v3416 = vcombine.high %v3402, %v3402
        %v3417 = vcombine.high %v3403, %v3403
        %3418 = vrot.lane.b32.xlu0 %v3400, 62
        %v3419 = vpop.permute.xlu0 %3418
        %3420 = vrot.lane.b32.xlu0 %v3414, 62
        %v3421 = vpop.permute.xlu0 %3420
        %3422 = vrot.lane.b32.xlu0 %v3401, 62
        %v3423 = vpop.permute.xlu0 %3422
        %3424 = vrot.lane.b32.xlu0 %v3415, 62
        %v3425 = vpop.permute.xlu0 %3424
        %3426 = vrot.lane.b32.xlu0 %v3402, 62
        %v3427 = vpop.permute.xlu0 %3426
        %3428 = vrot.lane.b32.xlu0 %v3416, 62
        %v3429 = vpop.permute.xlu0 %3428
        %3430 = vrot.lane.b32.xlu0 %v3403, 62
        %v3431 = vpop.permute.xlu0 %3430
        %3432 = vrot.lane.b32.xlu0 %v3417, 62
        %v3433 = vpop.permute.xlu0 %3432
        %3434 = vrot.lane.b32.xlu0 %v3404, 62
        %v3435 = vpop.permute.xlu0 %3434
        %vm3436 = vcmask 506880
        %v3437 = vsel %vm3436, %v3419, %v3421
        %v3438 = vsel %vm3436, %v3421, %v3423
        %v3439 = vsel %vm3436, %v3423, %v3425
        %v3440 = vsel %vm3436, %v3425, %v3427
        %v3441 = vsel %vm3436, %v3427, %v3429
        %v3442 = vsel %vm3436, %v3429, %v3431
        %v3443 = vsel %vm3436, %v3431, %v3433
        %v3444 = vsel %vm3436, %v3433, %v3435
        %v3445 = vsel %vm495, %v3408, 0
        %v3447 = vsel %vm498, %v3437, 0
        %v3449 = vsel %vm498, %v3438, 0
        %v3451 = vsel %vm498, %v3439, 0
        %v3453 = vsel %vm498, %v3440, 0
        %v3455 = vsel %vm498, %v3441, 0
        %v3457 = vsel %vm498, %v3442, 0
        %v3459 = vsel %vm498, %v3443, 0
        %v3461 = vsel %vm498, %v3444, 0
        %3463 = vmatprep.subr.mxu0 %v3449
        %3464 = vmatpush1.msra.mxu0 %v3447
        %3465 = vmatprep.subr.mxu0 0.0
        %3466 = vmatpush1.msra.mxu0 0.0
        %3467 = vmatprep.subr.mxu0 0.0
        %3468 = vmatpush1.msra.mxu0 0.0
        %3469 = vmatprep.subr.mxu0 0.0
        %3470 = vmatpush1.msra.mxu0 0.0
        %3471 = vmatprep.subr.mxu0 0.0
        %3472 = vmatpush1.msra.mxu0 0.0
        %3473 = vmatprep.subr.mxu0 0.0
        %3474 = vmatpush1.msra.mxu0 0.0
        %3475 = vmatprep.subr.mxu0 0.0
        %3476 = vmatpush1.msra.mxu0 0.0
        %3477 = vmatprep.subr.mxu0 0.0
        %3478 = vmatpush1.msra.mxu0 0.0
        %3479 = vmatprep.subr.mxu0 0.0
        %3480 = vmatpush1.msra.mxu0 0.0
        %3481 = vmatprep.subr.mxu0 0.0
        %3482 = vmatpush1.msra.mxu0 0.0
        %3483 = vmatprep.subr.mxu0 0.0
        %3484 = vmatpush1.msra.mxu0 0.0
        %3485 = vmatprep.subr.mxu0 0.0
        %3486 = vmatpush1.msra.mxu0 0.0
        %3487 = vmatprep.subr.mxu0 0.0
        %3488 = vmatpush1.msra.mxu0 0.0
        %3489 = vmatprep.subr.mxu0 0.0
        %3490 = vmatpush1.msra.mxu0 0.0
        %3491 = vmatprep.subr.mxu0 0.0
        %3492 = vmatpush1.msra.mxu0 0.0
        %3493 = vmatprep.subr.mxu0 0.0
        %3494 = vmatpush1.msra.mxu0 0.0
        %3495 = vmatprep.subr.mxu0 0.0
        %3496 = vmatpush1.msra.mxu0 0.0
        %3497 = vmatprep.subr.mxu0 0.0
        %3498 = vmatpush1.msra.mxu0 0.0
        %3499 = vmatprep.subr.mxu0 0.0
        %3500 = vmatpush1.msra.mxu0 0.0
        %3501 = vmatprep.subr.mxu0 0.0
        %3502 = vmatpush1.msra.mxu0 0.0
        %3503 = vmatprep.subr.mxu0 0.0
        %3504 = vmatpush1.msra.mxu0 0.0
        %3505 = vmatprep.subr.mxu0 0.0
        %3506 = vmatpush1.msra.mxu0 0.0
        %3507 = vmatprep.subr.mxu0 0.0
        %3508 = vmatpush1.msra.mxu0 0.0
        %3509 = vmatprep.subr.mxu0 0.0
        %3510 = vmatpush1.msra.mxu0 0.0
        %3511 = vmatprep.subr.mxu0 0.0
        %3512 = vmatpush1.msra.mxu0 0.0
        %3513 = vmatprep.subr.mxu0 0.0
        %3514 = vmatpush1.msra.mxu0 0.0
        %3515 = vmatprep.subr.mxu0 0.0
        %3516 = vmatpush1.msra.mxu0 0.0
        %3517 = vmatprep.subr.mxu0 0.0
        %3518 = vmatpush1.msra.mxu0 0.0
        %3519 = vmatprep.subr.mxu0 0.0
        %3520 = vmatpush1.msra.mxu0 0.0
        %3521 = vmatprep.subr.mxu0 0.0
        %3522 = vmatpush1.msra.mxu0 0.0
        %3523 = vmatprep.subr.mxu0 0.0
        %3524 = vmatpush1.msra.mxu0 0.0
        %3525 = vmatprep.subr.mxu0 0.0
        %3526 = vmatpush1.msra.mxu0 0.0
        %3527 = vmatprep.mubr.f32.mxu0 0.0
        %3528 = vmatmul.mubr.f32.gmra.mrb[0].mxu0 %v3445
        %v3529 = vpop.f32.mrb[0].mxu0
        %v3530 = vadd.f32 0.0, %v3529
        %v3531 = vpop.f32.mrb[0].mxu0
        %v3532 = vadd.f32 0.0, %v3531
        %3533 = vdwg.mxu0
        %3534 = vmatprep.subr.mxu0 %v3453
        %3535 = vmatpush1.msra.mxu0 %v3451
        %3536 = vmatprep.subr.mxu0 0.0
        %3537 = vmatpush1.msra.mxu0 0.0
        %3538 = vmatprep.subr.mxu0 0.0
        %3539 = vmatpush1.msra.mxu0 0.0
        %3540 = vmatprep.subr.mxu0 0.0
        %3541 = vmatpush1.msra.mxu0 0.0
        %3542 = vmatprep.subr.mxu0 0.0
        %3543 = vmatpush1.msra.mxu0 0.0
        %3544 = vmatprep.subr.mxu0 0.0
        %3545 = vmatpush1.msra.mxu0 0.0
        %3546 = vmatprep.subr.mxu0 0.0
        %3547 = vmatpush1.msra.mxu0 0.0
        %3548 = vmatprep.subr.mxu0 0.0
        %3549 = vmatpush1.msra.mxu0 0.0
        %3550 = vmatprep.subr.mxu0 0.0
        %3551 = vmatpush1.msra.mxu0 0.0
        %3552 = vmatprep.subr.mxu0 0.0
        %3553 = vmatpush1.msra.mxu0 0.0
        %3554 = vmatprep.subr.mxu0 0.0
        %3555 = vmatpush1.msra.mxu0 0.0
        %3556 = vmatprep.subr.mxu0 0.0
        %3557 = vmatpush1.msra.mxu0 0.0
        %3558 = vmatprep.subr.mxu0 0.0
        %3559 = vmatpush1.msra.mxu0 0.0
        %3560 = vmatprep.subr.mxu0 0.0
        %3561 = vmatpush1.msra.mxu0 0.0
        %3562 = vmatprep.subr.mxu0 0.0
        %3563 = vmatpush1.msra.mxu0 0.0
        %3564 = vmatprep.subr.mxu0 0.0
        %3565 = vmatpush1.msra.mxu0 0.0
        %3566 = vmatprep.subr.mxu0 0.0
        %3567 = vmatpush1.msra.mxu0 0.0
        %3568 = vmatprep.subr.mxu0 0.0
        %3569 = vmatpush1.msra.mxu0 0.0
        %3570 = vmatprep.subr.mxu0 0.0
        %3571 = vmatpush1.msra.mxu0 0.0
        %3572 = vmatprep.subr.mxu0 0.0
        %3573 = vmatpush1.msra.mxu0 0.0
        %3574 = vmatprep.subr.mxu0 0.0
        %3575 = vmatpush1.msra.mxu0 0.0
        %3576 = vmatprep.subr.mxu0 0.0
        %3577 = vmatpush1.msra.mxu0 0.0
        %3578 = vmatprep.subr.mxu0 0.0
        %3579 = vmatpush1.msra.mxu0 0.0
        %3580 = vmatprep.subr.mxu0 0.0
        %3581 = vmatpush1.msra.mxu0 0.0
        %3582 = vmatprep.subr.mxu0 0.0
        %3583 = vmatpush1.msra.mxu0 0.0
        %3584 = vmatprep.subr.mxu0 0.0
        %3585 = vmatpush1.msra.mxu0 0.0
        %3586 = vmatprep.subr.mxu0 0.0
        %3587 = vmatpush1.msra.mxu0 0.0
        %3588 = vmatprep.subr.mxu0 0.0
        %3589 = vmatpush1.msra.mxu0 0.0
        %3590 = vmatprep.subr.mxu0 0.0
        %3591 = vmatpush1.msra.mxu0 0.0
        %3592 = vmatprep.subr.mxu0 0.0
        %3593 = vmatpush1.msra.mxu0 0.0
        %3594 = vmatprep.subr.mxu0 0.0
        %3595 = vmatpush1.msra.mxu0 0.0
        %3596 = vmatprep.subr.mxu0 0.0
        %3597 = vmatpush1.msra.mxu0 0.0
        %3598 = vmatprep.mubr.f32.mxu0 0.0
        %3599 = vmatmul.mubr.f32.gmra.mrb[0].mxu0 %v3445
        %v3600 = vpop.f32.mrb[0].mxu0
        %v3601 = vadd.f32 0.0, %v3600
        %v3602 = vpop.f32.mrb[0].mxu0
        %v3603 = vadd.f32 0.0, %v3602
        %3604 = vdwg.mxu0
        %3605 = vmatprep.subr.mxu0 %v3457
        %3606 = vmatpush1.msra.mxu0 %v3455
        %3607 = vmatprep.subr.mxu0 0.0
        %3608 = vmatpush1.msra.mxu0 0.0
        %3609 = vmatprep.subr.mxu0 0.0
        %3610 = vmatpush1.msra.mxu0 0.0
        %3611 = vmatprep.subr.mxu0 0.0
        %3612 = vmatpush1.msra.mxu0 0.0
        %3613 = vmatprep.subr.mxu0 0.0
        %3614 = vmatpush1.msra.mxu0 0.0
        %3615 = vmatprep.subr.mxu0 0.0
        %3616 = vmatpush1.msra.mxu0 0.0
        %3617 = vmatprep.subr.mxu0 0.0
        %3618 = vmatpush1.msra.mxu0 0.0
        %3619 = vmatprep.subr.mxu0 0.0
        %3620 = vmatpush1.msra.mxu0 0.0
        %3621 = vmatprep.subr.mxu0 0.0
        %3622 = vmatpush1.msra.mxu0 0.0
        %3623 = vmatprep.subr.mxu0 0.0
        %3624 = vmatpush1.msra.mxu0 0.0
        %3625 = vmatprep.subr.mxu0 0.0
        %3626 = vmatpush1.msra.mxu0 0.0
        %3627 = vmatprep.subr.mxu0 0.0
        %3628 = vmatpush1.msra.mxu0 0.0
        %3629 = vmatprep.subr.mxu0 0.0
        %3630 = vmatpush1.msra.mxu0 0.0
        %3631 = vmatprep.subr.mxu0 0.0
        %3632 = vmatpush1.msra.mxu0 0.0
        %3633 = vmatprep.subr.mxu0 0.0
        %3634 = vmatpush1.msra.mxu0 0.0
        %3635 = vmatprep.subr.mxu0 0.0
        %3636 = vmatpush1.msra.mxu0 0.0
        %3637 = vmatprep.subr.mxu0 0.0
        %3638 = vmatpush1.msra.mxu0 0.0
        %3639 = vmatprep.subr.mxu0 0.0
        %3640 = vmatpush1.msra.mxu0 0.0
        %3641 = vmatprep.subr.mxu0 0.0
        %3642 = vmatpush1.msra.mxu0 0.0
        %3643 = vmatprep.subr.mxu0 0.0
        %3644 = vmatpush1.msra.mxu0 0.0
        %3645 = vmatprep.subr.mxu0 0.0
        %3646 = vmatpush1.msra.mxu0 0.0
        %3647 = vmatprep.subr.mxu0 0.0
        %3648 = vmatpush1.msra.mxu0 0.0
        %3649 = vmatprep.subr.mxu0 0.0
        %3650 = vmatpush1.msra.mxu0 0.0
        %3651 = vmatprep.subr.mxu0 0.0
        %3652 = vmatpush1.msra.mxu0 0.0
        %3653 = vmatprep.subr.mxu0 0.0
        %3654 = vmatpush1.msra.mxu0 0.0
        %3655 = vmatprep.subr.mxu0 0.0
        %3656 = vmatpush1.msra.mxu0 0.0
        %3657 = vmatprep.subr.mxu0 0.0
        %3658 = vmatpush1.msra.mxu0 0.0
        %3659 = vmatprep.subr.mxu0 0.0
        %3660 = vmatpush1.msra.mxu0 0.0
        %3661 = vmatprep.subr.mxu0 0.0
        %3662 = vmatpush1.msra.mxu0 0.0
        %3663 = vmatprep.subr.mxu0 0.0
        %3664 = vmatpush1.msra.mxu0 0.0
        %3665 = vmatprep.subr.mxu0 0.0
        %3666 = vmatpush1.msra.mxu0 0.0
        %3667 = vmatprep.subr.mxu0 0.0
        %3668 = vmatpush1.msra.mxu0 0.0
        %3669 = vmatprep.mubr.f32.mxu0 0.0
        %3670 = vmatmul.mubr.f32.gmra.mrb[0].mxu0 %v3445
        %v3671 = vpop.f32.mrb[0].mxu0
        %v3672 = vadd.f32 0.0, %v3671
        %v3673 = vpop.f32.mrb[0].mxu0
        %v3674 = vadd.f32 0.0, %v3673
        %3675 = vdwg.mxu0
        %3676 = vmatprep.subr.mxu0 %v3461
        %3677 = vmatpush1.msra.mxu0 %v3459
        %3678 = vmatprep.subr.mxu0 0.0
        %3679 = vmatpush1.msra.mxu0 0.0
        %3680 = vmatprep.subr.mxu0 0.0
        %3681 = vmatpush1.msra.mxu0 0.0
        %3682 = vmatprep.subr.mxu0 0.0
        %3683 = vmatpush1.msra.mxu0 0.0
        %3684 = vmatprep.subr.mxu0 0.0
        %3685 = vmatpush1.msra.mxu0 0.0
        %3686 = vmatprep.subr.mxu0 0.0
        %3687 = vmatpush1.msra.mxu0 0.0
        %3688 = vmatprep.subr.mxu0 0.0
        %3689 = vmatpush1.msra.mxu0 0.0
        %3690 = vmatprep.subr.mxu0 0.0
        %3691 = vmatpush1.msra.mxu0 0.0
        %3692 = vmatprep.subr.mxu0 0.0
        %3693 = vmatpush1.msra.mxu0 0.0
        %3694 = vmatprep.subr.mxu0 0.0
        %3695 = vmatpush1.msra.mxu0 0.0
        %3696 = vmatprep.subr.mxu0 0.0
        %3697 = vmatpush1.msra.mxu0 0.0
        %3698 = vmatprep.subr.mxu0 0.0
        %3699 = vmatpush1.msra.mxu0 0.0
        %3700 = vmatprep.subr.mxu0 0.0
        %3701 = vmatpush1.msra.mxu0 0.0
        %3702 = vmatprep.subr.mxu0 0.0
        %3703 = vmatpush1.msra.mxu0 0.0
        %3704 = vmatprep.subr.mxu0 0.0
        %3705 = vmatpush1.msra.mxu0 0.0
        %3706 = vmatprep.subr.mxu0 0.0
        %3707 = vmatpush1.msra.mxu0 0.0
        %3708 = vmatprep.subr.mxu0 0.0
        %3709 = vmatpush1.msra.mxu0 0.0
        %3710 = vmatprep.subr.mxu0 0.0
        %3711 = vmatpush1.msra.mxu0 0.0
        %3712 = vmatprep.subr.mxu0 0.0
        %3713 = vmatpush1.msra.mxu0 0.0
        %3714 = vmatprep.subr.mxu0 0.0
        %3715 = vmatpush1.msra.mxu0 0.0
        %3716 = vmatprep.subr.mxu0 0.0
        %3717 = vmatpush1.msra.mxu0 0.0
        %3718 = vmatprep.subr.mxu0 0.0
        %3719 = vmatpush1.msra.mxu0 0.0
        %3720 = vmatprep.subr.mxu0 0.0
        %3721 = vmatpush1.msra.mxu0 0.0
        %3722 = vmatprep.subr.mxu0 0.0
        %3723 = vmatpush1.msra.mxu0 0.0
        %3724 = vmatprep.subr.mxu0 0.0
        %3725 = vmatpush1.msra.mxu0 0.0
        %3726 = vmatprep.subr.mxu0 0.0
        %3727 = vmatpush1.msra.mxu0 0.0
        %3728 = vmatprep.subr.mxu0 0.0
        %3729 = vmatpush1.msra.mxu0 0.0
        %3730 = vmatprep.subr.mxu0 0.0
        %3731 = vmatpush1.msra.mxu0 0.0
        %3732 = vmatprep.subr.mxu0 0.0
        %3733 = vmatpush1.msra.mxu0 0.0
        %3734 = vmatprep.subr.mxu0 0.0
        %3735 = vmatpush1.msra.mxu0 0.0
        %3736 = vmatprep.subr.mxu0 0.0
        %3737 = vmatpush1.msra.mxu0 0.0
        %3738 = vmatprep.subr.mxu0 0.0
        %3739 = vmatpush1.msra.mxu0 0.0
        %3740 = vmatprep.mubr.f32.mxu0 0.0
        %3741 = vmatmul.mubr.f32.gmra.mrb[0].mxu0 %v3445
        %v3742 = vpop.f32.mrb[0].mxu0
        %v3743 = vadd.f32 0.0, %v3742
        %v3744 = vpop.f32.mrb[0].mxu0
        %v3745 = vadd.f32 0.0, %v3744
        %3746 = vdwg.mxu0
        %v3747 = vadd.f32 %v3362, %v3530
        %v3748 = vadd.f32 %v3363, %v3532
        %v3749 = vadd.f32 %v3364, %v3601
        %v3750 = vadd.f32 %v3365, %v3603
        %v3751 = vadd.f32 %v3366, %v3672
        %v3752 = vadd.f32 %v3367, %v3674
        %v3753 = vadd.f32 %v3368, %v3743
        %v3754 = vadd.f32 %v3369, %v3745
        %v3755 = vld [vmem:[%s2] sm:$0xff]
        %3757 = vset.pattern.permute.xlu0 0
        %3758 = vperm.xlu0 %3757, %v3755
        %v3759 = vpop.permute.xlu0 %3758
        %v3761 = vadd.f32 %v3747, %v3759
        %v3762 = vadd.f32 %v3748, %v3759
        %v3763 = vadd.f32 %v3749, %v3759
        %v3764 = vadd.f32 %v3750, %v3759
        %v3765 = vadd.f32 %v3751, %v3759
        %v3766 = vadd.f32 %v3752, %v3759
        %v3767 = vadd.f32 %v3753, %v3759
        %v3768 = vadd.f32 %v3754, %v3759
        %v3769 = vmax.f32 %v3761, 0.0
        %v3770 = vmax.f32 %v3762, 0.0
        %v3771 = vmax.f32 %v3763, 0.0
        %v3772 = vmax.f32 %v3764, 0.0
        %v3773 = vmax.f32 %v3765, 0.0
        %v3774 = vmax.f32 %v3766, 0.0
        %v3775 = vmax.f32 %v3767, 0.0
        %v3776 = vmax.f32 %v3768, 0.0
        %3785 = vrot.lane.b32.xlu0 %v3769, 127
        %v3786 = vpop.permute.xlu0 %3785
        %3787 = vrot.lane.b32.xlu0 %v3770, 127
        %v3788 = vpop.permute.xlu0 %3787
        %3789 = vrot.lane.b32.xlu0 %v3771, 127
        %v3790 = vpop.permute.xlu0 %3789
        %3791 = vrot.lane.b32.xlu0 %v3772, 127
        %v3792 = vpop.permute.xlu0 %3791
        %3793 = vrot.lane.b32.xlu0 %v3773, 127
        %v3794 = vpop.permute.xlu0 %3793
        %3795 = vrot.lane.b32.xlu0 %v3774, 127
        %v3796 = vpop.permute.xlu0 %3795
        %3797 = vrot.lane.b32.xlu0 %v3775, 127
        %v3798 = vpop.permute.xlu0 %3797
        %3799 = vrot.lane.b32.xlu0 %v3776, 127
        %v3800 = vpop.permute.xlu0 %3799
        %v3801 = vsel %vm486, %v3786, %v3788
        %v3802 = vsel %vm486, %v3788, %v3790
        %v3803 = vsel %vm486, %v3790, %v3792
        %v3804 = vsel %vm486, %v3792, %v3794
        %v3805 = vsel %vm486, %v3794, %v3796
        %v3806 = vsel %vm486, %v3796, %v3798
        %v3807 = vsel %vm486, %v3798, %v3800
        %v3816 = vmax.f32 %v3769, %v3801
        %v3817 = vmax.f32 %v3770, %v3802
        %v3818 = vmax.f32 %v3771, %v3803
        %v3819 = vmax.f32 %v3772, %v3804
        %v3820 = vmax.f32 %v3773, %v3805
        %v3821 = vmax.f32 %v3774, %v3806
        %v3822 = vmax.f32 %v3775, %v3807
        %v3823 = vmax.f32 %v3776, %v3800
        %3832 = vrot.lane.b32.xlu0 %v3816, 96
        %v3833 = vpop.permute.xlu0 %3832
        %3834 = vrot.lane.b32.xlu0 %v3817, 96
        %v3835 = vpop.permute.xlu0 %3834
        %3836 = vrot.lane.b32.xlu0 %v3818, 96
        %v3837 = vpop.permute.xlu0 %3836
        %3838 = vrot.lane.b32.xlu0 %v3819, 96
        %v3839 = vpop.permute.xlu0 %3838
        %3840 = vrot.lane.b32.xlu0 %v3820, 96
        %v3841 = vpop.permute.xlu0 %3840
        %3842 = vrot.lane.b32.xlu0 %v3821, 96
        %v3843 = vpop.permute.xlu0 %3842
        %3844 = vrot.lane.b32.xlu0 %v3822, 96
        %v3845 = vpop.permute.xlu0 %3844
        %3846 = vrot.lane.b32.xlu0 %v3823, 96
        %v3847 = vpop.permute.xlu0 %3846
        %v3848 = vsel %vm1572, %v3833, %v3835
        %v3849 = vsel %vm1572, %v3835, %v3837
        %v3850 = vsel %vm1572, %v3837, %v3839
        %v3851 = vsel %vm1572, %v3839, %v3841
        %v3852 = vsel %vm1572, %v3841, %v3843
        %v3853 = vsel %vm1572, %v3843, %v3845
        %v3854 = vsel %vm1572, %v3845, %v3847
        %v3863 = vmax.f32 %v3816, %v3848
        %v3864 = vmax.f32 %v3817, %v3849
        %v3865 = vmax.f32 %v3818, %v3850
        %v3866 = vmax.f32 %v3819, %v3851
        %v3867 = vmax.f32 %v3820, %v3852
        %v3868 = vmax.f32 %v3821, %v3853
        %v3869 = vmax.f32 %v3822, %v3854
        %v3870 = vmax.f32 %v3823, %v3847
        %v3871 = vld [vmem:[#allocation4] sm:$0xff]
        %v3872 = vld [vmem:[#allocation4 + $0x8] sm:$0xff]
        %v3873 = vld [vmem:[#allocation4 + $0x10] sm:$0xff]
        %v3874 = vld [vmem:[#allocation4 + $0x18] sm:$0xff]
        %v3875 = vld [vmem:[#allocation4 + $0x20] sm:$0xff]
        %v3876 = vld [vmem:[#allocation4 + $0x28] sm:$0xff]
        %v3877 = vld [vmem:[#allocation4 + $0x30] sm:$0xff]
        %v3878 = vld [vmem:[#allocation4 + $0x38] sm:$0xff]
        %v3879 = vld [vmem:[#allocation4 + $0x40] sm:$0xff]
        %v3880 = vld [vmem:[#allocation4 + $0x48] sm:$0xff]
        %v3881 = vld [vmem:[#allocation4 + $0x50] sm:$0xff]
        %v3882 = vld [vmem:[#allocation4 + $0x58] sm:$0xff]
        %v3883 = vld [vmem:[#allocation4 + $0x60] sm:$0xff]
        %v3884 = vld [vmem:[#allocation4 + $0x68] sm:$0xff]
        %v3885 = vld [vmem:[#allocation4 + $0x70] sm:$0xff]
        %v3886 = vld [vmem:[#allocation4 + $0x78] sm:$0xff]
        %v3887 = vld [vmem:[#allocation4 + $0x80] sm:$0xff]
        %v3888 = vld [vmem:[#allocation4 + $0x88] sm:$0xff]
        %v3889 = vld [vmem:[#allocation4 + $0x90] sm:$0xff]
        %v3890 = vld [vmem:[#allocation4 + $0x98] sm:$0xff]
        %v3891 = vld [vmem:[#allocation4 + $0xa0] sm:$0xff]
        %v3892 = vld [vmem:[#allocation4 + $0xa8] sm:$0xff]
        %v3893 = vld [vmem:[#allocation4 + $0xb0] sm:$0xff]
        %v3894 = vld [vmem:[#allocation4 + $0xb8] sm:$0xff]
        %v3895 = vld [vmem:[#allocation4 + $0xc0] sm:$0xff]
        %v3896 = vld [vmem:[#allocation4 + $0xc8] sm:$0xff]
        %v3897 = vld [vmem:[#allocation4 + $0xd0] sm:$0xff]
        %v3898 = vld [vmem:[#allocation4 + $0xd8] sm:$0xff]
        %v3899 = vld [vmem:[#allocation4 + $0xe0] sm:$0xff]
        %v3900 = vld [vmem:[#allocation4 + $0xe8] sm:$0xff]
        %v3901 = vld [vmem:[#allocation4 + $0xf0] sm:$0xff]
        %v3902 = vld [vmem:[#allocation4 + $0xf8] sm:$0xff]
        %v3903 = vld [vmem:[#allocation4 + $0x100] sm:$0xff]
        %v3904 = vld [vmem:[#allocation4 + $0x108] sm:$0xff]
        %v3905 = vld [vmem:[#allocation4 + $0x110] sm:$0xff]
        %v3906 = vld [vmem:[#allocation4 + $0x118] sm:$0xff]
        %v3907 = vld [vmem:[#allocation4 + $0x120] sm:$0xff]
        %v3908 = vld [vmem:[#allocation4 + $0x128] sm:$0xff]
        %v3909 = vld [vmem:[#allocation4 + $0x130] sm:$0xff]
        %v3910 = vld [vmem:[#allocation4 + $0x138] sm:$0xff]
        %v3911 = vld [vmem:[#allocation4 + $0x140] sm:$0xff]
        %v3912 = vld [vmem:[#allocation4 + $0x148] sm:$0xff]
        %v3913 = vld [vmem:[#allocation4 + $0x150] sm:$0xff]
        %v3914 = vld [vmem:[#allocation4 + $0x158] sm:$0xff]
        %v3915 = vld [vmem:[#allocation4 + $0x160] sm:$0xff]
        %v3916 = vld [vmem:[#allocation4 + $0x168] sm:$0xff]
        %v3917 = vld [vmem:[#allocation4 + $0x170] sm:$0xff]
        %v3918 = vld [vmem:[#allocation4 + $0x178] sm:$0xff]
        %v3919 = vld [vmem:[#allocation4 + $0x180] sm:$0xff]
        %v3920 = vld [vmem:[#allocation4 + $0x188] sm:$0xff]
        %v3921 = vld [vmem:[#allocation4 + $0x190] sm:$0xff]
        %v3922 = vld [vmem:[#allocation4 + $0x198] sm:$0xff]
        %v3923 = vld [vmem:[#allocation4 + $0x1a0] sm:$0xff]
        %v3924 = vld [vmem:[#allocation4 + $0x1a8] sm:$0xff]
        %v3925 = vld [vmem:[#allocation4 + $0x1b0] sm:$0xff]
        %v3926 = vld [vmem:[#allocation4 + $0x1b8] sm:$0xff]
        %v3927 = vld [vmem:[#allocation4 + $0x1c0] sm:$0xff]
        %v3928 = vld [vmem:[#allocation4 + $0x1c8] sm:$0xff]
        %v3929 = vld [vmem:[#allocation4 + $0x1d0] sm:$0xff]
        %v3930 = vld [vmem:[#allocation4 + $0x1d8] sm:$0xff]
        %v3931 = vld [vmem:[#allocation4 + $0x1e0] sm:$0xff]
        %v3932 = vld [vmem:[#allocation4 + $0x1e8] sm:$0xff]
        %v3933 = vld [vmem:[#allocation4 + $0x1f0] sm:$0xff]
        %v3934 = vld [vmem:[#allocation4 + $0x1f8] sm:$0xff]
        %v3935 = vld [vmem:[#allocation4 + $0x200] sm:$0xff]
        %v3936 = vld [vmem:[#allocation4 + $0x208] sm:$0xff]
        %v3937 = vld [vmem:[#allocation4 + $0x210] sm:$0xff]
        %v3938 = vld [vmem:[#allocation4 + $0x218] sm:$0xff]
        %v3939 = vld [vmem:[#allocation4 + $0x220] sm:$0xff]
        %v3940 = vld [vmem:[#allocation4 + $0x228] sm:$0xff]
        %v3941 = vld [vmem:[#allocation4 + $0x230] sm:$0xff]
        %v3942 = vld [vmem:[#allocation4 + $0x238] sm:$0xff]
        %v3943 = vld [vmem:[#allocation4 + $0x240] sm:$0xff]
        %v3944 = vld [vmem:[#allocation4 + $0x248] sm:$0xff]
        %v3945 = vld [vmem:[#allocation4 + $0x250] sm:$0xff]
        %v3946 = vld [vmem:[#allocation4 + $0x258] sm:$0xff]
        %v3947 = vld [vmem:[#allocation4 + $0x260] sm:$0xff]
        %v3948 = vld [vmem:[#allocation4 + $0x268] sm:$0xff]
        %v3949 = vld [vmem:[#allocation4 + $0x270] sm:$0xff]
        %v3950 = vld [vmem:[#allocation4 + $0x278] sm:$0xff]
        %v3951 = vld [vmem:[#allocation4 + $0x280] sm:$0xff]
        %v3952 = vld [vmem:[#allocation4 + $0x288] sm:$0xff]
        %v3953 = vld [vmem:[#allocation4 + $0x290] sm:$0xff]
        %v3954 = vld [vmem:[#allocation4 + $0x298] sm:$0xff]
        %v3955 = vld [vmem:[#allocation4 + $0x2a0] sm:$0xff]
        %v3956 = vld [vmem:[#allocation4 + $0x2a8] sm:$0xff]
        %v3957 = vld [vmem:[#allocation4 + $0x2b0] sm:$0xff]
        %v3958 = vld [vmem:[#allocation4 + $0x2b8] sm:$0xff]
        %v3959 = vld [vmem:[#allocation4 + $0x2c0] sm:$0xff]
        %v3960 = vld [vmem:[#allocation4 + $0x2c8] sm:$0xff]
        %v3961 = vld [vmem:[#allocation4 + $0x2d0] sm:$0xff]
        %v3962 = vld [vmem:[#allocation4 + $0x2d8] sm:$0xff]
        %v3963 = vld [vmem:[#allocation4 + $0x2e0] sm:$0xff]
        %v3964 = vld [vmem:[#allocation4 + $0x2e8] sm:$0xff]
        %v3965 = vld [vmem:[#allocation4 + $0x2f0] sm:$0xff]
        %v3966 = vld [vmem:[#allocation4 + $0x2f8] sm:$0xff]
        %v3967 = vld [vmem:[#allocation4 + $0x300] sm:$0xff]
        %v3968 = vld [vmem:[#allocation4 + $0x308] sm:$0xff]
        %v3969 = vld [vmem:[#allocation4 + $0x310] sm:$0xff]
        %v3970 = vld [vmem:[#allocation4 + $0x318] sm:$0xff]
        %v3971 = vld [vmem:[#allocation4 + $0x320] sm:$0xff]
        %v3972 = vld [vmem:[#allocation4 + $0x328] sm:$0xff]
        %v3973 = vld [vmem:[#allocation4 + $0x330] sm:$0xff]
        %v3974 = vld [vmem:[#allocation4 + $0x338] sm:$0xff]
        %v3975 = vld [vmem:[#allocation4 + $0x340] sm:$0xff]
        %v3976 = vld [vmem:[#allocation4 + $0x348] sm:$0xff]
        %v3977 = vld [vmem:[#allocation4 + $0x350] sm:$0xff]
        %v3978 = vld [vmem:[#allocation4 + $0x358] sm:$0xff]
        %v3979 = vld [vmem:[#allocation4 + $0x360] sm:$0xff]
        %v3980 = vld [vmem:[#allocation4 + $0x368] sm:$0xff]
        %v3981 = vld [vmem:[#allocation4 + $0x370] sm:$0xff]
        %v3982 = vld [vmem:[#allocation4 + $0x378] sm:$0xff]
        %v3983 = vld [vmem:[#allocation4 + $0x380] sm:$0xff]
        %v3984 = vld [vmem:[#allocation4 + $0x388] sm:$0xff]
        %v3985 = vld [vmem:[#allocation4 + $0x390] sm:$0xff]
        %v3986 = vld [vmem:[#allocation4 + $0x398] sm:$0xff]
        %v3987 = vld [vmem:[#allocation4 + $0x3a0] sm:$0xff]
        %v3988 = vld [vmem:[#allocation4 + $0x3a8] sm:$0xff]
        %v3989 = vld [vmem:[#allocation4 + $0x3b0] sm:$0xff]
        %v3990 = vld [vmem:[#allocation4 + $0x3b8] sm:$0xff]
        %v3991 = vld [vmem:[#allocation4 + $0x3c0] sm:$0xff]
        %v3992 = vld [vmem:[#allocation4 + $0x3c8] sm:$0xff]
        %v3993 = vld [vmem:[#allocation4 + $0x3d0] sm:$0xff]
        %v3994 = vld [vmem:[#allocation4 + $0x3d8] sm:$0xff]
        %v3995 = vld [vmem:[#allocation4 + $0x3e0] sm:$0xff]
        %v3996 = vld [vmem:[#allocation4 + $0x3e8] sm:$0xff]
        %v3997 = vld [vmem:[#allocation4 + $0x3f0] sm:$0xff]
        %v3998 = vld [vmem:[#allocation4 + $0x3f8] sm:$0xff]
        %v3999 = vld [vmem:[#allocation4 + $0x400] sm:$0xff]
        %v4000 = vld [vmem:[#allocation4 + $0x408] sm:$0xff]
        %v4001 = vld [vmem:[#allocation4 + $0x410] sm:$0xff]
        %v4002 = vld [vmem:[#allocation4 + $0x418] sm:$0xff]
        %v4003 = vld [vmem:[#allocation4 + $0x420] sm:$0xff]
        %v4004 = vld [vmem:[#allocation4 + $0x428] sm:$0xff]
        %v4005 = vld [vmem:[#allocation4 + $0x430] sm:$0xff]
        %v4006 = vld [vmem:[#allocation4 + $0x438] sm:$0xff]
        %v4007 = vld [vmem:[#allocation4 + $0x440] sm:$0xff]
        %v4008 = vld [vmem:[#allocation4 + $0x448] sm:$0xff]
        %v4009 = vld [vmem:[#allocation4 + $0x450] sm:$0xff]
        %v4010 = vld [vmem:[#allocation4 + $0x458] sm:$0xff]
        %v4011 = vld [vmem:[#allocation4 + $0x460] sm:$0xff]
        %v4012 = vld [vmem:[#allocation4 + $0x468] sm:$0xff]
        %v4013 = vld [vmem:[#allocation4 + $0x470] sm:$0xff]
        %v4014 = vld [vmem:[#allocation4 + $0x478] sm:$0xff]
        %v4015 = vld [vmem:[#allocation4 + $0x480] sm:$0xff]
        %v4016 = vld [vmem:[#allocation4 + $0x488] sm:$0xff]
        %v4017 = vld [vmem:[#allocation4 + $0x490] sm:$0xff]
        %v4018 = vld [vmem:[#allocation4 + $0x498] sm:$0xff]
        %v4019 = vld [vmem:[#allocation4 + $0x4a0] sm:$0xff]
        %v4020 = vld [vmem:[#allocation4 + $0x4a8] sm:$0xff]
        %v4021 = vld [vmem:[#allocation4 + $0x4b0] sm:$0xff]
        %v4022 = vld [vmem:[#allocation4 + $0x4b8] sm:$0xff]
        %v4023 = vld [vmem:[#allocation4 + $0x4c0] sm:$0xff]
        %v4024 = vld [vmem:[#allocation4 + $0x4c8] sm:$0xff]
        %v4025 = vld [vmem:[#allocation4 + $0x4d0] sm:$0xff]
        %v4026 = vld [vmem:[#allocation4 + $0x4d8] sm:$0xff]
        %v4027 = vld [vmem:[#allocation4 + $0x4e0] sm:$0xff]
        %v4028 = vld [vmem:[#allocation4 + $0x4e8] sm:$0xff]
        %v4029 = vld [vmem:[#allocation4 + $0x4f0] sm:$0xff]
        %v4030 = vld [vmem:[#allocation4 + $0x4f8] sm:$0xff]
        %v4031 = vld [vmem:[#allocation4 + $0x500] sm:$0xff]
        %v4032 = vld [vmem:[#allocation4 + $0x508] sm:$0xff]
        %v4033 = vld [vmem:[#allocation4 + $0x510] sm:$0xff]
        %v4034 = vld [vmem:[#allocation4 + $0x518] sm:$0xff]
        %v4035 = vld [vmem:[#allocation4 + $0x520] sm:$0xff]
        %v4036 = vld [vmem:[#allocation4 + $0x528] sm:$0xff]
        %v4037 = vld [vmem:[#allocation4 + $0x530] sm:$0xff]
        %v4038 = vld [vmem:[#allocation4 + $0x538] sm:$0xff]
        %v4039 = vld [vmem:[#allocation4 + $0x540] sm:$0xff]
        %v4040 = vld [vmem:[#allocation4 + $0x548] sm:$0xff]
        %v4041 = vld [vmem:[#allocation4 + $0x550] sm:$0xff]
        %v4042 = vld [vmem:[#allocation4 + $0x558] sm:$0xff]
        %v4043 = vld [vmem:[#allocation4 + $0x560] sm:$0xff]
        %v4044 = vld [vmem:[#allocation4 + $0x568] sm:$0xff]
        %v4045 = vld [vmem:[#allocation4 + $0x570] sm:$0xff]
        %v4046 = vld [vmem:[#allocation4 + $0x578] sm:$0xff]
        %v4047 = vld [vmem:[#allocation4 + $0x580] sm:$0xff]
        %v4048 = vld [vmem:[#allocation4 + $0x588] sm:$0xff]
        %v4049 = vld [vmem:[#allocation4 + $0x590] sm:$0xff]
        %v4050 = vld [vmem:[#allocation4 + $0x598] sm:$0xff]
        %v4051 = vld [vmem:[#allocation4 + $0x5a0] sm:$0xff]
        %v4052 = vld [vmem:[#allocation4 + $0x5a8] sm:$0xff]
        %v4053 = vld [vmem:[#allocation4 + $0x5b0] sm:$0xff]
        %v4054 = vld [vmem:[#allocation4 + $0x5b8] sm:$0xff]
        %v4055 = vld [vmem:[#allocation4 + $0x5c0] sm:$0xff]
        %v4056 = vld [vmem:[#allocation4 + $0x5c8] sm:$0xff]
        %v4057 = vld [vmem:[#allocation4 + $0x5d0] sm:$0xff]
        %v4058 = vld [vmem:[#allocation4 + $0x5d8] sm:$0xff]
        %v4059 = vld [vmem:[#allocation4 + $0x5e0] sm:$0xff]
        %v4060 = vld [vmem:[#allocation4 + $0x5e8] sm:$0xff]
        %v4061 = vld [vmem:[#allocation4 + $0x5f0] sm:$0xff]
        %v4062 = vld [vmem:[#allocation4 + $0x5f8] sm:$0xff]
        %v4063 = vld [vmem:[#allocation4 + $0x600] sm:$0xff]
        %v4064 = vld [vmem:[#allocation4 + $0x608] sm:$0xff]
        %v4065 = vld [vmem:[#allocation4 + $0x610] sm:$0xff]
        %v4066 = vld [vmem:[#allocation4 + $0x618] sm:$0xff]
        %v4067 = vld [vmem:[#allocation4 + $0x620] sm:$0xff]
        %v4068 = vld [vmem:[#allocation4 + $0x628] sm:$0xff]
        %v4069 = vld [vmem:[#allocation4 + $0x630] sm:$0xff]
        %v4070 = vld [vmem:[#allocation4 + $0x638] sm:$0xff]
        %v4071 = vld [vmem:[#allocation4 + $0x640] sm:$0xff]
        %v4072 = vld [vmem:[#allocation4 + $0x648] sm:$0xff]
        %v4073 = vld [vmem:[#allocation4 + $0x650] sm:$0xff]
        %v4074 = vld [vmem:[#allocation4 + $0x658] sm:$0xff]
        %v4075 = vld [vmem:[#allocation4 + $0x660] sm:$0xff]
        %v4076 = vld [vmem:[#allocation4 + $0x668] sm:$0xff]
        %v4077 = vld [vmem:[#allocation4 + $0x670] sm:$0xff]
        %v4078 = vld [vmem:[#allocation4 + $0x678] sm:$0xff]
        %v4079 = vld [vmem:[#allocation4 + $0x680] sm:$0xff]
        %v4080 = vld [vmem:[#allocation4 + $0x688] sm:$0xff]
        %v4081 = vld [vmem:[#allocation4 + $0x690] sm:$0xff]
        %v4082 = vld [vmem:[#allocation4 + $0x698] sm:$0xff]
        %v4083 = vld [vmem:[#allocation4 + $0x6a0] sm:$0xff]
        %v4084 = vld [vmem:[#allocation4 + $0x6a8] sm:$0xff]
        %v4085 = vld [vmem:[#allocation4 + $0x6b0] sm:$0xff]
        %v4086 = vld [vmem:[#allocation4 + $0x6b8] sm:$0xff]
        %v4087 = vld [vmem:[#allocation4 + $0x6c0] sm:$0xff]
        %v4088 = vld [vmem:[#allocation4 + $0x6c8] sm:$0xff]
        %v4089 = vld [vmem:[#allocation4 + $0x6d0] sm:$0xff]
        %v4090 = vld [vmem:[#allocation4 + $0x6d8] sm:$0xff]
        %v4091 = vld [vmem:[#allocation4 + $0x6e0] sm:$0xff]
        %v4092 = vld [vmem:[#allocation4 + $0x6e8] sm:$0xff]
        %v4093 = vld [vmem:[#allocation4 + $0x6f0] sm:$0xff]
        %v4094 = vld [vmem:[#allocation4 + $0x6f8] sm:$0xff]
        %v4095 = vld [vmem:[#allocation4 + $0x700] sm:$0xff]
        %v4096 = vld [vmem:[#allocation4 + $0x708] sm:$0xff]
        %v4097 = vld [vmem:[#allocation4 + $0x710] sm:$0xff]
        %v4098 = vld [vmem:[#allocation4 + $0x718] sm:$0xff]
        %v4099 = vld [vmem:[#allocation4 + $0x720] sm:$0xff]
        %v4100 = vld [vmem:[#allocation4 + $0x728] sm:$0xff]
        %v4101 = vld [vmem:[#allocation4 + $0x730] sm:$0xff]
        %v4102 = vld [vmem:[#allocation4 + $0x738] sm:$0xff]
        %v4103 = vld [vmem:[#allocation4 + $0x740] sm:$0xff]
        %v4104 = vld [vmem:[#allocation4 + $0x748] sm:$0xff]
        %v4105 = vld [vmem:[#allocation4 + $0x750] sm:$0xff]
        %v4106 = vld [vmem:[#allocation4 + $0x758] sm:$0xff]
        %v4107 = vld [vmem:[#allocation4 + $0x760] sm:$0xff]
        %v4108 = vld [vmem:[#allocation4 + $0x768] sm:$0xff]
        %v4109 = vld [vmem:[#allocation4 + $0x770] sm:$0xff]
        %v4110 = vld [vmem:[#allocation4 + $0x778] sm:$0xff]
        %v4111 = vld [vmem:[#allocation4 + $0x780] sm:$0xff]
        %v4112 = vld [vmem:[#allocation4 + $0x788] sm:$0xff]
        %v4113 = vld [vmem:[#allocation4 + $0x790] sm:$0xff]
        %v4114 = vld [vmem:[#allocation4 + $0x798] sm:$0xff]
        %v4115 = vld [vmem:[#allocation4 + $0x7a0] sm:$0xff]
        %v4116 = vld [vmem:[#allocation4 + $0x7a8] sm:$0xff]
        %v4117 = vld [vmem:[#allocation4 + $0x7b0] sm:$0x7f]
        %v4118 = vld [vmem:[#allocation4 + $0x7b8] sm:$0x7f]
        %v4120 = vsel %vm1927, %v3870, 0
        %vm4122 = vcmask 1046528
        %v4124 = vsel %vm4122, %v4117, 0
        %v4127 = vsel %vm4122, %v4118, 0
        %4129 = vmatprep.subr.mxu0 %v3872
        %4130 = vmatpush1.msra.mxu0 %v3871
        %4131 = vmatprep.subr.mxu0 %v3874
        %4132 = vmatpush1.msra.mxu0 %v3873
        %4133 = vmatprep.subr.mxu0 %v3876
        %4134 = vmatpush1.msra.mxu0 %v3875
        %4135 = vmatprep.subr.mxu0 %v3878
        %4136 = vmatpush1.msra.mxu0 %v3877
        %4137 = vmatprep.subr.mxu0 %v3880
        %4138 = vmatpush1.msra.mxu0 %v3879
        %4139 = vmatprep.subr.mxu0 %v3882
        %4140 = vmatpush1.msra.mxu0 %v3881
        %4141 = vmatprep.subr.mxu0 %v3884
        %4142 = vmatpush1.msra.mxu0 %v3883
        %4143 = vmatprep.subr.mxu0 %v3886
        %4144 = vmatpush1.msra.mxu0 %v3885
        %4145 = vmatprep.subr.mxu0 %v3888
        %4146 = vmatpush1.msra.mxu0 %v3887
        %4147 = vmatprep.subr.mxu0 %v3890
        %4148 = vmatpush1.msra.mxu0 %v3889
        %4149 = vmatprep.subr.mxu0 %v3892
        %4150 = vmatpush1.msra.mxu0 %v3891
        %4151 = vmatprep.subr.mxu0 %v3894
        %4152 = vmatpush1.msra.mxu0 %v3893
        %4153 = vmatprep.subr.mxu0 %v3896
        %4154 = vmatpush1.msra.mxu0 %v3895
        %4155 = vmatprep.subr.mxu0 %v3898
        %4156 = vmatpush1.msra.mxu0 %v3897
        %4157 = vmatprep.subr.mxu0 %v3900
        %4158 = vmatpush1.msra.mxu0 %v3899
        %4159 = vmatprep.subr.mxu0 %v3902
        %4160 = vmatpush1.msra.mxu0 %v3901
        %4161 = vmatprep.subr.mxu0 %v3904
        %4162 = vmatpush1.msra.mxu0 %v3903
        %4163 = vmatprep.subr.mxu0 %v3906
        %4164 = vmatpush1.msra.mxu0 %v3905
        %4165 = vmatprep.subr.mxu0 %v3908
        %4166 = vmatpush1.msra.mxu0 %v3907
        %4167 = vmatprep.subr.mxu0 %v3910
        %4168 = vmatpush1.msra.mxu0 %v3909
        %4169 = vmatprep.subr.mxu0 %v3912
        %4170 = vmatpush1.msra.mxu0 %v3911
        %4171 = vmatprep.subr.mxu0 %v3914
        %4172 = vmatpush1.msra.mxu0 %v3913
        %4173 = vmatprep.subr.mxu0 %v3916
        %4174 = vmatpush1.msra.mxu0 %v3915
        %4175 = vmatprep.subr.mxu0 %v3918
        %4176 = vmatpush1.msra.mxu0 %v3917
        %4177 = vmatprep.subr.mxu0 %v3920
        %4178 = vmatpush1.msra.mxu0 %v3919
        %4179 = vmatprep.subr.mxu0 %v3922
        %4180 = vmatpush1.msra.mxu0 %v3921
        %4181 = vmatprep.subr.mxu0 %v3924
        %4182 = vmatpush1.msra.mxu0 %v3923
        %4183 = vmatprep.subr.mxu0 %v3926
        %4184 = vmatpush1.msra.mxu0 %v3925
        %4185 = vmatprep.subr.mxu0 %v3928
        %4186 = vmatpush1.msra.mxu0 %v3927
        %4187 = vmatprep.subr.mxu0 %v3930
        %4188 = vmatpush1.msra.mxu0 %v3929
        %4189 = vmatprep.subr.mxu0 %v3932
        %4190 = vmatpush1.msra.mxu0 %v3931
        %4191 = vmatprep.subr.mxu0 %v3934
        %4192 = vmatpush1.msra.mxu0 %v3933
        %4193 = vmatprep.mubr.f32.mxu0 %v3864
        %4194 = vmatmul.mubr.f32.gmra.mrb[0].mxu0 %v3863
        %v4195 = vpop.f32.mrb[0].mxu0
        %v4196 = vadd.f32 0.0, %v4195
        %v4197 = vpop.f32.mrb[0].mxu0
        %v4198 = vadd.f32 0.0, %v4197
        %4199 = vdwg.mxu0
        %4200 = vmatprep.subr.mxu0 %v3936
        %4201 = vmatpush1.msra.mxu0 %v3935
        %4202 = vmatprep.subr.mxu0 %v3938
        %4203 = vmatpush1.msra.mxu0 %v3937
        %4204 = vmatprep.subr.mxu0 %v3940
        %4205 = vmatpush1.msra.mxu0 %v3939
        %4206 = vmatprep.subr.mxu0 %v3942
        %4207 = vmatpush1.msra.mxu0 %v3941
        %4208 = vmatprep.subr.mxu0 %v3944
        %4209 = vmatpush1.msra.mxu0 %v3943
        %4210 = vmatprep.subr.mxu0 %v3946
        %4211 = vmatpush1.msra.mxu0 %v3945
        %4212 = vmatprep.subr.mxu0 %v3948
        %4213 = vmatpush1.msra.mxu0 %v3947
        %4214 = vmatprep.subr.mxu0 %v3950
        %4215 = vmatpush1.msra.mxu0 %v3949
        %4216 = vmatprep.subr.mxu0 %v3952
        %4217 = vmatpush1.msra.mxu0 %v3951
        %4218 = vmatprep.subr.mxu0 %v3954
        %4219 = vmatpush1.msra.mxu0 %v3953
        %4220 = vmatprep.subr.mxu0 %v3956
        %4221 = vmatpush1.msra.mxu0 %v3955
        %4222 = vmatprep.subr.mxu0 %v3958
        %4223 = vmatpush1.msra.mxu0 %v3957
        %4224 = vmatprep.subr.mxu0 %v3960
        %4225 = vmatpush1.msra.mxu0 %v3959
        %4226 = vmatprep.subr.mxu0 %v3962
        %4227 = vmatpush1.msra.mxu0 %v3961
        %4228 = vmatprep.subr.mxu0 %v3964
        %4229 = vmatpush1.msra.mxu0 %v3963
        %4230 = vmatprep.subr.mxu0 %v3966
        %4231 = vmatpush1.msra.mxu0 %v3965
        %4232 = vmatprep.subr.mxu0 %v3968
        %4233 = vmatpush1.msra.mxu0 %v3967
        %4234 = vmatprep.subr.mxu0 %v3970
        %4235 = vmatpush1.msra.mxu0 %v3969
        %4236 = vmatprep.subr.mxu0 %v3972
        %4237 = vmatpush1.msra.mxu0 %v3971
        %4238 = vmatprep.subr.mxu0 %v3974
        %4239 = vmatpush1.msra.mxu0 %v3973
        %4240 = vmatprep.subr.mxu0 %v3976
        %4241 = vmatpush1.msra.mxu0 %v3975
        %4242 = vmatprep.subr.mxu0 %v3978
        %4243 = vmatpush1.msra.mxu0 %v3977
        %4244 = vmatprep.subr.mxu0 %v3980
        %4245 = vmatpush1.msra.mxu0 %v3979
        %4246 = vmatprep.subr.mxu0 %v3982
        %4247 = vmatpush1.msra.mxu0 %v3981
        %4248 = vmatprep.subr.mxu0 %v3984
        %4249 = vmatpush1.msra.mxu0 %v3983
        %4250 = vmatprep.subr.mxu0 %v3986
        %4251 = vmatpush1.msra.mxu0 %v3985
        %4252 = vmatprep.subr.mxu0 %v3988
        %4253 = vmatpush1.msra.mxu0 %v3987
        %4254 = vmatprep.subr.mxu0 %v3990
        %4255 = vmatpush1.msra.mxu0 %v3989
        %4256 = vmatprep.subr.mxu0 %v3992
        %4257 = vmatpush1.msra.mxu0 %v3991
        %4258 = vmatprep.subr.mxu0 %v3994
        %4259 = vmatpush1.msra.mxu0 %v3993
        %4260 = vmatprep.subr.mxu0 %v3996
        %4261 = vmatpush1.msra.mxu0 %v3995
        %4262 = vmatprep.subr.mxu0 %v3998
        %4263 = vmatpush1.msra.mxu0 %v3997
        %4264 = vmatprep.mubr.f32.mxu0 %v3866
        %4265 = vmatmul.mubr.f32.gmra.mrb[0].mxu0 %v3865
        %v4266 = vpop.f32.mrb[0].mxu0
        %v4267 = vadd.f32 %v4196, %v4266
        %v4268 = vpop.f32.mrb[0].mxu0
        %v4269 = vadd.f32 %v4198, %v4268
        %4270 = vdwg.mxu0
        %4271 = vmatprep.subr.mxu0 %v4000
        %4272 = vmatpush1.msra.mxu0 %v3999
        %4273 = vmatprep.subr.mxu0 %v4002
        %4274 = vmatpush1.msra.mxu0 %v4001
        %4275 = vmatprep.subr.mxu0 %v4004
        %4276 = vmatpush1.msra.mxu0 %v4003
        %4277 = vmatprep.subr.mxu0 %v4006
        %4278 = vmatpush1.msra.mxu0 %v4005
        %4279 = vmatprep.subr.mxu0 %v4008
        %4280 = vmatpush1.msra.mxu0 %v4007
        %4281 = vmatprep.subr.mxu0 %v4010
        %4282 = vmatpush1.msra.mxu0 %v4009
        %4283 = vmatprep.subr.mxu0 %v4012
        %4284 = vmatpush1.msra.mxu0 %v4011
        %4285 = vmatprep.subr.mxu0 %v4014
        %4286 = vmatpush1.msra.mxu0 %v4013
        %4287 = vmatprep.subr.mxu0 %v4016
        %4288 = vmatpush1.msra.mxu0 %v4015
        %4289 = vmatprep.subr.mxu0 %v4018
        %4290 = vmatpush1.msra.mxu0 %v4017
        %4291 = vmatprep.subr.mxu0 %v4020
        %4292 = vmatpush1.msra.mxu0 %v4019
        %4293 = vmatprep.subr.mxu0 %v4022
        %4294 = vmatpush1.msra.mxu0 %v4021
        %4295 = vmatprep.subr.mxu0 %v4024
        %4296 = vmatpush1.msra.mxu0 %v4023
        %4297 = vmatprep.subr.mxu0 %v4026
        %4298 = vmatpush1.msra.mxu0 %v4025
        %4299 = vmatprep.subr.mxu0 %v4028
        %4300 = vmatpush1.msra.mxu0 %v4027
        %4301 = vmatprep.subr.mxu0 %v4030
        %4302 = vmatpush1.msra.mxu0 %v4029
        %4303 = vmatprep.subr.mxu0 %v4032
        %4304 = vmatpush1.msra.mxu0 %v4031
        %4305 = vmatprep.subr.mxu0 %v4034
        %4306 = vmatpush1.msra.mxu0 %v4033
        %4307 = vmatprep.subr.mxu0 %v4036
        %4308 = vmatpush1.msra.mxu0 %v4035
        %4309 = vmatprep.subr.mxu0 %v4038
        %4310 = vmatpush1.msra.mxu0 %v4037
        %4311 = vmatprep.subr.mxu0 %v4040
        %4312 = vmatpush1.msra.mxu0 %v4039
        %4313 = vmatprep.subr.mxu0 %v4042
        %4314 = vmatpush1.msra.mxu0 %v4041
        %4315 = vmatprep.subr.mxu0 %v4044
        %4316 = vmatpush1.msra.mxu0 %v4043
        %4317 = vmatprep.subr.mxu0 %v4046
        %4318 = vmatpush1.msra.mxu0 %v4045
        %4319 = vmatprep.subr.mxu0 %v4048
        %4320 = vmatpush1.msra.mxu0 %v4047
        %4321 = vmatprep.subr.mxu0 %v4050
        %4322 = vmatpush1.msra.mxu0 %v4049
        %4323 = vmatprep.subr.mxu0 %v4052
        %4324 = vmatpush1.msra.mxu0 %v4051
        %4325 = vmatprep.subr.mxu0 %v4054
        %4326 = vmatpush1.msra.mxu0 %v4053
        %4327 = vmatprep.subr.mxu0 %v4056
        %4328 = vmatpush1.msra.mxu0 %v4055
        %4329 = vmatprep.subr.mxu0 %v4058
        %4330 = vmatpush1.msra.mxu0 %v4057
        %4331 = vmatprep.subr.mxu0 %v4060
        %4332 = vmatpush1.msra.mxu0 %v4059
        %4333 = vmatprep.subr.mxu0 %v4062
        %4334 = vmatpush1.msra.mxu0 %v4061
        %4335 = vmatprep.mubr.f32.mxu0 %v3868
        %4336 = vmatmul.mubr.f32.gmra.mrb[0].mxu0 %v3867
        %v4337 = vpop.f32.mrb[0].mxu0
        %v4338 = vadd.f32 %v4267, %v4337
        %v4339 = vpop.f32.mrb[0].mxu0
        %v4340 = vadd.f32 %v4269, %v4339
        %4341 = vdwg.mxu0
        %4342 = vmatprep.subr.mxu0 %v4064
        %4343 = vmatpush1.msra.mxu0 %v4063
        %4344 = vmatprep.subr.mxu0 %v4066
        %4345 = vmatpush1.msra.mxu0 %v4065
        %4346 = vmatprep.subr.mxu0 %v4068
        %4347 = vmatpush1.msra.mxu0 %v4067
        %4348 = vmatprep.subr.mxu0 %v4070
        %4349 = vmatpush1.msra.mxu0 %v4069
        %4350 = vmatprep.subr.mxu0 %v4072
        %4351 = vmatpush1.msra.mxu0 %v4071
        %4352 = vmatprep.subr.mxu0 %v4074
        %4353 = vmatpush1.msra.mxu0 %v4073
        %4354 = vmatprep.subr.mxu0 %v4076
        %4355 = vmatpush1.msra.mxu0 %v4075
        %4356 = vmatprep.subr.mxu0 %v4078
        %4357 = vmatpush1.msra.mxu0 %v4077
        %4358 = vmatprep.subr.mxu0 %v4080
        %4359 = vmatpush1.msra.mxu0 %v4079
        %4360 = vmatprep.subr.mxu0 %v4082
        %4361 = vmatpush1.msra.mxu0 %v4081
        %4362 = vmatprep.subr.mxu0 %v4084
        %4363 = vmatpush1.msra.mxu0 %v4083
        %4364 = vmatprep.subr.mxu0 %v4086
        %4365 = vmatpush1.msra.mxu0 %v4085
        %4366 = vmatprep.subr.mxu0 %v4088
        %4367 = vmatpush1.msra.mxu0 %v4087
        %4368 = vmatprep.subr.mxu0 %v4090
        %4369 = vmatpush1.msra.mxu0 %v4089
        %4370 = vmatprep.subr.mxu0 %v4092
        %4371 = vmatpush1.msra.mxu0 %v4091
        %4372 = vmatprep.subr.mxu0 %v4094
        %4373 = vmatpush1.msra.mxu0 %v4093
        %4374 = vmatprep.subr.mxu0 %v4096
        %4375 = vmatpush1.msra.mxu0 %v4095
        %4376 = vmatprep.subr.mxu0 %v4098
        %4377 = vmatpush1.msra.mxu0 %v4097
        %4378 = vmatprep.subr.mxu0 %v4100
        %4379 = vmatpush1.msra.mxu0 %v4099
        %4380 = vmatprep.subr.mxu0 %v4102
        %4381 = vmatpush1.msra.mxu0 %v4101
        %4382 = vmatprep.subr.mxu0 %v4104
        %4383 = vmatpush1.msra.mxu0 %v4103
        %4384 = vmatprep.subr.mxu0 %v4106
        %4385 = vmatpush1.msra.mxu0 %v4105
        %4386 = vmatprep.subr.mxu0 %v4108
        %4387 = vmatpush1.msra.mxu0 %v4107
        %4388 = vmatprep.subr.mxu0 %v4110
        %4389 = vmatpush1.msra.mxu0 %v4109
        %4390 = vmatprep.subr.mxu0 %v4112
        %4391 = vmatpush1.msra.mxu0 %v4111
        %4392 = vmatprep.subr.mxu0 %v4114
        %4393 = vmatpush1.msra.mxu0 %v4113
        %4394 = vmatprep.subr.mxu0 %v4116
        %4395 = vmatpush1.msra.mxu0 %v4115
        %4396 = vmatprep.subr.mxu0 %v4127
        %4397 = vmatpush1.msra.mxu0 %v4124
        %4398 = vmatprep.subr.mxu0 0.0
        %4399 = vmatpush1.msra.mxu0 0.0
        %4400 = vmatprep.subr.mxu0 0.0
        %4401 = vmatpush1.msra.mxu0 0.0
        %4402 = vmatprep.subr.mxu0 0.0
        %4403 = vmatpush1.msra.mxu0 0.0
        %4404 = vmatprep.subr.mxu0 0.0
        %4405 = vmatpush1.msra.mxu0 0.0
        %4406 = vmatprep.mubr.f32.mxu0 %v4120
        %4407 = vmatmul.mubr.f32.gmra.mrb[0].mxu0 %v3869
        %v4408 = vpop.f32.mrb[0].mxu0
        %v4409 = vadd.f32 %v4338, %v4408
        %v4410 = vpop.f32.mrb[0].mxu0
        %v4411 = vadd.f32 %v4340, %v4410
        %4412 = vdwg.mxu0
        %vm4413 = vcmask 138240
        %4414 = vst.msk [vmem:[#allocation3] sm:$0xff] %vm4413, 0.0
        %vm4415 = vcmask 277640
        %4416 = vst.msk [vmem:[#allocation3 + $0x10] sm:$0xff] %vm4415, 0.0
        %4419 = vrot.lane.b32.xlu0 %v4409, 17
        %v4420 = vpop.permute.xlu0 %4419
        %4421 = vrot.lane.b32.xlu0 %v4411, 17
        %v4422 = vpop.permute.xlu0 %4421
        %v4423 = vsel %vm4413, %v4420, %v4422
        %vm4427 = vcmask 1047688
        %4428 = vst.msk [vmem:[#allocation3] sm:$0xff] %vm4427, %v4420
        %4429 = vst [vmem:[#allocation3 + $0x8] sm:$0xff] %v4423
        %4430 = vst.msk [vmem:[#allocation3 + $0x10] sm:$0xff] %vm4413, %v4422
        %v4431 = vand.u32 %v366, 15
        %v4432 = vand.u32 %v367, 15
        %vm4433 = vcmp.ne.s32.totalorder %v4431, 0
        %vm4434 = vcmp.ne.s32.totalorder %v4432, 0
        %v4435 = vsel %vm4433, 1, 0
        %v4436 = vsel %vm4434, 1, 0
        %v4437 = vcvt.s32.f32 %v4435
        %v4438 = vcvt.s32.f32 %v4436
        %vm4439 = vcmp.ne.s32.totalorder %v4431, 15
        %vm4440 = vcmp.ne.s32.totalorder %v4432, 15
        %v4441 = vsel %vm4439, 1, 0
        %v4442 = vsel %vm4440, 1, 0
        %v4443 = vcvt.s32.f32 %v4441
        %v4444 = vcvt.s32.f32 %v4442
        %v4445 = vld [vmem:[#allocation3] sm:$0xff]
        %v4446 = vld [vmem:[#allocation3 + $0x8] sm:$0xff]
        %v4447 = vmul.f32 %v4445, %v4437
        %v4448 = vmul.f32 %v4446, %v4438
        %v4449 = vld [vmem:[%s4] sm:$0xff]
        %v4450 = vld [vmem:[%s4 + $0x8] sm:$0xff]
        %v4451 = vld [vmem:[#allocation3 + $0x10] sm:$0xff]
        %4454 = vrot.lane.b32.xlu0 %v4449, 120
        %v4455 = vpop.permute.xlu0 %4454
        %4456 = vrot.lane.b32.xlu0 %v4450, 120
        %v4457 = vpop.permute.xlu0 %4456
        %4461 = vrot.lane.b32.xlu0 %v4445, 127
        %v4462 = vpop.permute.xlu0 %4461
        %4463 = vrot.lane.b32.xlu0 %v4446, 127
        %v4464 = vpop.permute.xlu0 %4463
        %4465 = vrot.lane.b32.xlu0 %v4451, 127
        %v4466 = vpop.permute.xlu0 %4465
        %v4467 = vsel %vm486, %v4462, %v4464
        %v4468 = vsel %vm486, %v4464, %v4466
        %vm4471 = vcmask 64512
        %v4472 = vsel %vm4471, %v4455, 0
        %v4474 = vsel %vm4471, %v4457, 0
        %4476 = vmatprep.subr.mxu0 %v4468
        %4477 = vmatpush1.msra.mxu0 %v4467
        %4478 = vmatprep.subr.mxu0 0.0
        %4479 = vmatpush1.msra.mxu0 0.0
        %4480 = vmatprep.subr.mxu0 0.0
        %4481 = vmatpush1.msra.mxu0 0.0
        %4482 = vmatprep.subr.mxu0 0.0
        %4483 = vmatpush1.msra.mxu0 0.0
        %4484 = vmatprep.subr.mxu0 0.0
        %4485 = vmatpush1.msra.mxu0 0.0
        %4486 = vmatprep.subr.mxu0 0.0
        %4487 = vmatpush1.msra.mxu0 0.0
        %4488 = vmatprep.subr.mxu0 0.0
        %4489 = vmatpush1.msra.mxu0 0.0
        %4490 = vmatprep.subr.mxu0 0.0
        %4491 = vmatpush1.msra.mxu0 0.0
        %4492 = vmatprep.subr.mxu0 0.0
        %4493 = vmatpush1.msra.mxu0 0.0
        %4494 = vmatprep.subr.mxu0 0.0
        %4495 = vmatpush1.msra.mxu0 0.0
        %4496 = vmatprep.subr.mxu0 0.0
        %4497 = vmatpush1.msra.mxu0 0.0
        %4498 = vmatprep.subr.mxu0 0.0
        %4499 = vmatpush1.msra.mxu0 0.0
        %4500 = vmatprep.subr.mxu0 0.0
        %4501 = vmatpush1.msra.mxu0 0.0
        %4502 = vmatprep.subr.mxu0 0.0
        %4503 = vmatpush1.msra.mxu0 0.0
        %4504 = vmatprep.subr.mxu0 0.0
        %4505 = vmatpush1.msra.mxu0 0.0
        %4506 = vmatprep.subr.mxu0 0.0
        %4507 = vmatpush1.msra.mxu0 0.0
        %4508 = vmatprep.subr.mxu0 0.0
        %4509 = vmatpush1.msra.mxu0 0.0
        %4510 = vmatprep.subr.mxu0 0.0
        %4511 = vmatpush1.msra.mxu0 0.0
        %4512 = vmatprep.subr.mxu0 0.0
        %4513 = vmatpush1.msra.mxu0 0.0
        %4514 = vmatprep.subr.mxu0 0.0
        %4515 = vmatpush1.msra.mxu0 0.0
        %4516 = vmatprep.subr.mxu0 0.0
        %4517 = vmatpush1.msra.mxu0 0.0
        %4518 = vmatprep.subr.mxu0 0.0
        %4519 = vmatpush1.msra.mxu0 0.0
        %4520 = vmatprep.subr.mxu0 0.0
        %4521 = vmatpush1.msra.mxu0 0.0
        %4522 = vmatprep.subr.mxu0 0.0
        %4523 = vmatpush1.msra.mxu0 0.0
        %4524 = vmatprep.subr.mxu0 0.0
        %4525 = vmatpush1.msra.mxu0 0.0
        %4526 = vmatprep.subr.mxu0 0.0
        %4527 = vmatpush1.msra.mxu0 0.0
        %4528 = vmatprep.subr.mxu0 0.0
        %4529 = vmatpush1.msra.mxu0 0.0
        %4530 = vmatprep.subr.mxu0 0.0
        %4531 = vmatpush1.msra.mxu0 0.0
        %4532 = vmatprep.subr.mxu0 0.0
        %4533 = vmatpush1.msra.mxu0 0.0
        %4534 = vmatprep.subr.mxu0 0.0
        %4535 = vmatpush1.msra.mxu0 0.0
        %4536 = vmatprep.subr.mxu0 0.0
        %4537 = vmatpush1.msra.mxu0 0.0
        %4538 = vmatprep.subr.mxu0 0.0
        %4539 = vmatpush1.msra.mxu0 0.0
        %4540 = vmatprep.mubr.f32.mxu0 0.0
        %4541 = vmatmul.mubr.f32.gmra.mrb[0].mxu0 %v4472
        %v4542 = vpop.f32.mrb[0].mxu0
        %v4543 = vadd.f32 0.0, %v4542
        %v4544 = vpop.f32.mrb[0].mxu0
        %v4545 = vadd.f32 0.0, %v4544
        %4546 = vmatprep.mubr.f32.mxu0 0.0
        %4547 = vmatmul.mubr.f32.gmra.mrb[0].mxu0 %v4474
        %v4548 = vpop.f32.mrb[0].mxu0
        %v4549 = vadd.f32 0.0, %v4548
        %v4550 = vpop.f32.mrb[0].mxu0
        %v4551 = vadd.f32 0.0, %v4550
        %4552 = vdwg.mxu0
        %v4553 = vsel %vm4471, %v4449, 0
        %v4555 = vsel %vm4471, %v4450, 0
        %4557 = vmatprep.subr.mxu0 %v4448
        %4558 = vmatpush1.msra.mxu0 %v4447
        %4559 = vmatprep.subr.mxu0 0.0
        %4560 = vmatpush1.msra.mxu0 0.0
        %4561 = vmatprep.subr.mxu0 0.0
        %4562 = vmatpush1.msra.mxu0 0.0
        %4563 = vmatprep.subr.mxu0 0.0
        %4564 = vmatpush1.msra.mxu0 0.0
        %4565 = vmatprep.subr.mxu0 0.0
        %4566 = vmatpush1.msra.mxu0 0.0
        %4567 = vmatprep.subr.mxu0 0.0
        %4568 = vmatpush1.msra.mxu0 0.0
        %4569 = vmatprep.subr.mxu0 0.0
        %4570 = vmatpush1.msra.mxu0 0.0
        %4571 = vmatprep.subr.mxu0 0.0
        %4572 = vmatpush1.msra.mxu0 0.0
        %4573 = vmatprep.subr.mxu0 0.0
        %4574 = vmatpush1.msra.mxu0 0.0
        %4575 = vmatprep.subr.mxu0 0.0
        %4576 = vmatpush1.msra.mxu0 0.0
        %4577 = vmatprep.subr.mxu0 0.0
        %4578 = vmatpush1.msra.mxu0 0.0
        %4579 = vmatprep.subr.mxu0 0.0
        %4580 = vmatpush1.msra.mxu0 0.0
        %4581 = vmatprep.subr.mxu0 0.0
        %4582 = vmatpush1.msra.mxu0 0.0
        %4583 = vmatprep.subr.mxu0 0.0
        %4584 = vmatpush1.msra.mxu0 0.0
        %4585 = vmatprep.subr.mxu0 0.0
        %4586 = vmatpush1.msra.mxu0 0.0
        %4587 = vmatprep.subr.mxu0 0.0
        %4588 = vmatpush1.msra.mxu0 0.0
        %4589 = vmatprep.subr.mxu0 0.0
        %4590 = vmatpush1.msra.mxu0 0.0
        %4591 = vmatprep.subr.mxu0 0.0
        %4592 = vmatpush1.msra.mxu0 0.0
        %4593 = vmatprep.subr.mxu0 0.0
        %4594 = vmatpush1.msra.mxu0 0.0
        %4595 = vmatprep.subr.mxu0 0.0
        %4596 = vmatpush1.msra.mxu0 0.0
        %4597 = vmatprep.subr.mxu0 0.0
        %4598 = vmatpush1.msra.mxu0 0.0
        %4599 = vmatprep.subr.mxu0 0.0
        %4600 = vmatpush1.msra.mxu0 0.0
        %4601 = vmatprep.subr.mxu0 0.0
        %4602 = vmatpush1.msra.mxu0 0.0
        %4603 = vmatprep.subr.mxu0 0.0
        %4604 = vmatpush1.msra.mxu0 0.0
        %4605 = vmatprep.subr.mxu0 0.0
        %4606 = vmatpush1.msra.mxu0 0.0
        %4607 = vmatprep.subr.mxu0 0.0
        %4608 = vmatpush1.msra.mxu0 0.0
        %4609 = vmatprep.subr.mxu0 0.0
        %4610 = vmatpush1.msra.mxu0 0.0
        %4611 = vmatprep.subr.mxu0 0.0
        %4612 = vmatpush1.msra.mxu0 0.0
        %4613 = vmatprep.subr.mxu0 0.0
        %4614 = vmatpush1.msra.mxu0 0.0
        %4615 = vmatprep.subr.mxu0 0.0
        %4616 = vmatpush1.msra.mxu0 0.0
        %4617 = vmatprep.subr.mxu0 0.0
        %4618 = vmatpush1.msra.mxu0 0.0
        %4619 = vmatprep.subr.mxu0 0.0
        %4620 = vmatpush1.msra.mxu0 0.0
        %4621 = vmatprep.mubr.f32.mxu0 0.0
        %4622 = vmatmul.mubr.f32.gmra.mrb[0].mxu0 %v4553
        %v4623 = vpop.f32.mrb[0].mxu0
        %v4624 = vadd.f32 %v4543, %v4623
        %v4625 = vpop.f32.mrb[0].mxu0
        %v4626 = vadd.f32 %v4545, %v4625
        %4627 = vmatprep.mubr.f32.mxu0 0.0
        %4628 = vmatmul.mubr.f32.gmra.mrb[0].mxu0 %v4555
        %v4629 = vpop.f32.mrb[0].mxu0
        %v4630 = vadd.f32 %v4549, %v4629
        %v4631 = vpop.f32.mrb[0].mxu0
        %v4632 = vadd.f32 %v4551, %v4631
        %4633 = vdwg.mxu0
        %4636 = vrot.lane.b32.xlu0 %v4443, 2
        %v4637 = vpop.permute.xlu0 %4636
        %4638 = vrot.lane.b32.xlu0 %v4444, 2
        %v4639 = vpop.permute.xlu0 %4638
        %v4640 = vsel %vm1138, %v4637, %v4639
        %v4644 = vmul.f32 %v4445, %v4637
        %v4645 = vmul.f32 %v4446, %v4640
        %v4646 = vmul.f32 %v4451, %v4639
        %4647 = vrot.lane.b32.xlu0 %v4449, 112
        %v4648 = vpop.permute.xlu0 %4647
        %4649 = vrot.lane.b32.xlu0 %v4450, 112
        %v4650 = vpop.permute.xlu0 %4649
        %4654 = vrot.lane.b32.xlu0 %v4644, 126
        %v4655 = vpop.permute.xlu0 %4654
        %4656 = vrot.lane.b32.xlu0 %v4645, 126
        %v4657 = vpop.permute.xlu0 %4656
        %4658 = vrot.lane.b32.xlu0 %v4646, 126
        %v4659 = vpop.permute.xlu0 %4658
        %v4660 = vsel %vm1187, %v4655, %v4657
        %v4661 = vsel %vm1187, %v4657, %v4659
        %v4664 = vsel %vm4471, %v4648, 0
        %v4666 = vsel %vm4471, %v4650, 0
        %4668 = vmatprep.subr.mxu0 %v4661
        %4669 = vmatpush1.msra.mxu0 %v4660
        %4670 = vmatprep.subr.mxu0 0.0
        %4671 = vmatpush1.msra.mxu0 0.0
        %4672 = vmatprep.subr.mxu0 0.0
        %4673 = vmatpush1.msra.mxu0 0.0
        %4674 = vmatprep.subr.mxu0 0.0
        %4675 = vmatpush1.msra.mxu0 0.0
        %4676 = vmatprep.subr.mxu0 0.0
        %4677 = vmatpush1.msra.mxu0 0.0
        %4678 = vmatprep.subr.mxu0 0.0
        %4679 = vmatpush1.msra.mxu0 0.0
        %4680 = vmatprep.subr.mxu0 0.0
        %4681 = vmatpush1.msra.mxu0 0.0
        %4682 = vmatprep.subr.mxu0 0.0
        %4683 = vmatpush1.msra.mxu0 0.0
        %4684 = vmatprep.subr.mxu0 0.0
        %4685 = vmatpush1.msra.mxu0 0.0
        %4686 = vmatprep.subr.mxu0 0.0
        %4687 = vmatpush1.msra.mxu0 0.0
        %4688 = vmatprep.subr.mxu0 0.0
        %4689 = vmatpush1.msra.mxu0 0.0
        %4690 = vmatprep.subr.mxu0 0.0
        %4691 = vmatpush1.msra.mxu0 0.0
        %4692 = vmatprep.subr.mxu0 0.0
        %4693 = vmatpush1.msra.mxu0 0.0
        %4694 = vmatprep.subr.mxu0 0.0
        %4695 = vmatpush1.msra.mxu0 0.0
        %4696 = vmatprep.subr.mxu0 0.0
        %4697 = vmatpush1.msra.mxu0 0.0
        %4698 = vmatprep.subr.mxu0 0.0
        %4699 = vmatpush1.msra.mxu0 0.0
        %4700 = vmatprep.subr.mxu0 0.0
        %4701 = vmatpush1.msra.mxu0 0.0
        %4702 = vmatprep.subr.mxu0 0.0
        %4703 = vmatpush1.msra.mxu0 0.0
        %4704 = vmatprep.subr.mxu0 0.0
        %4705 = vmatpush1.msra.mxu0 0.0
        %4706 = vmatprep.subr.mxu0 0.0
        %4707 = vmatpush1.msra.mxu0 0.0
        %4708 = vmatprep.subr.mxu0 0.0
        %4709 = vmatpush1.msra.mxu0 0.0
        %4710 = vmatprep.subr.mxu0 0.0
        %4711 = vmatpush1.msra.mxu0 0.0
        %4712 = vmatprep.subr.mxu0 0.0
        %4713 = vmatpush1.msra.mxu0 0.0
        %4714 = vmatprep.subr.mxu0 0.0
        %4715 = vmatpush1.msra.mxu0 0.0
        %4716 = vmatprep.subr.mxu0 0.0
        %4717 = vmatpush1.msra.mxu0 0.0
        %4718 = vmatprep.subr.mxu0 0.0
        %4719 = vmatpush1.msra.mxu0 0.0
        %4720 = vmatprep.subr.mxu0 0.0
        %4721 = vmatpush1.msra.mxu0 0.0
        %4722 = vmatprep.subr.mxu0 0.0
        %4723 = vmatpush1.msra.mxu0 0.0
        %4724 = vmatprep.subr.mxu0 0.0
        %4725 = vmatpush1.msra.mxu0 0.0
        %4726 = vmatprep.subr.mxu0 0.0
        %4727 = vmatpush1.msra.mxu0 0.0
        %4728 = vmatprep.subr.mxu0 0.0
        %4729 = vmatpush1.msra.mxu0 0.0
        %4730 = vmatprep.subr.mxu0 0.0
        %4731 = vmatpush1.msra.mxu0 0.0
        %4732 = vmatprep.mubr.f32.mxu0 0.0
        %4733 = vmatmul.mubr.f32.gmra.mrb[0].mxu0 %v4664
        %v4734 = vpop.f32.mrb[0].mxu0
        %v4735 = vadd.f32 0.0, %v4734
        %v4736 = vpop.f32.mrb[0].mxu0
        %v4737 = vadd.f32 0.0, %v4736
        %4738 = vmatprep.mubr.f32.mxu0 0.0
        %4739 = vmatmul.mubr.f32.gmra.mrb[0].mxu0 %v4666
        %v4740 = vpop.f32.mrb[0].mxu0
        %v4741 = vadd.f32 0.0, %v4740
        %v4742 = vpop.f32.mrb[0].mxu0
        %v4743 = vadd.f32 0.0, %v4742
        %4744 = vdwg.mxu0
        %v4745 = vadd.f32 %v4624, %v4735
        %v4746 = vadd.f32 %v4626, %v4737
        %v4747 = vadd.f32 %v4630, %v4741
        %v4748 = vadd.f32 %v4632, %v4743
        %4751 = vrot.lane.b32.xlu0 %v4437, 16
        %v4752 = vpop.permute.xlu0 %4751
        %4753 = vrot.lane.b32.xlu0 %v4438, 16
        %v4754 = vpop.permute.xlu0 %4753
        %vm4755 = vcmask 130048
        %v4756 = vsel %vm4755, %v4752, %v4754
        %v4760 = vmul.f32 %v4445, %v4752
        %v4761 = vmul.f32 %v4446, %v4756
        %v4762 = vmul.f32 %v4451, %v4754
        %4763 = vrot.lane.b32.xlu0 %v4449, 104
        %v4764 = vpop.permute.xlu0 %4763
        %4765 = vrot.lane.b32.xlu0 %v4450, 104
        %v4766 = vpop.permute.xlu0 %4765
        %4770 = vrot.lane.b32.xlu0 %v4760, 112
        %v4771 = vpop.permute.xlu0 %4770
        %4772 = vrot.lane.b32.xlu0 %v4761, 112
        %v4773 = vpop.permute.xlu0 %4772
        %4774 = vrot.lane.b32.xlu0 %v4762, 112
        %v4775 = vpop.permute.xlu0 %4774
        %vm4776 = vcmask 916480
        %v4777 = vsel %vm4776, %v4771, %v4773
        %v4778 = vsel %vm4776, %v4773, %v4775
        %v4781 = vsel %vm4471, %v4764, 0
        %v4783 = vsel %vm4471, %v4766, 0
        %4785 = vmatprep.subr.mxu0 %v4778
        %4786 = vmatpush1.msra.mxu0 %v4777
        %4787 = vmatprep.subr.mxu0 0.0
        %4788 = vmatpush1.msra.mxu0 0.0
        %4789 = vmatprep.subr.mxu0 0.0
        %4790 = vmatpush1.msra.mxu0 0.0
        %4791 = vmatprep.subr.mxu0 0.0
        %4792 = vmatpush1.msra.mxu0 0.0
        %4793 = vmatprep.subr.mxu0 0.0
        %4794 = vmatpush1.msra.mxu0 0.0
        %4795 = vmatprep.subr.mxu0 0.0
        %4796 = vmatpush1.msra.mxu0 0.0
        %4797 = vmatprep.subr.mxu0 0.0
        %4798 = vmatpush1.msra.mxu0 0.0
        %4799 = vmatprep.subr.mxu0 0.0
        %4800 = vmatpush1.msra.mxu0 0.0
        %4801 = vmatprep.subr.mxu0 0.0
        %4802 = vmatpush1.msra.mxu0 0.0
        %4803 = vmatprep.subr.mxu0 0.0
        %4804 = vmatpush1.msra.mxu0 0.0
        %4805 = vmatprep.subr.mxu0 0.0
        %4806 = vmatpush1.msra.mxu0 0.0
        %4807 = vmatprep.subr.mxu0 0.0
        %4808 = vmatpush1.msra.mxu0 0.0
        %4809 = vmatprep.subr.mxu0 0.0
        %4810 = vmatpush1.msra.mxu0 0.0
        %4811 = vmatprep.subr.mxu0 0.0
        %4812 = vmatpush1.msra.mxu0 0.0
        %4813 = vmatprep.subr.mxu0 0.0
        %4814 = vmatpush1.msra.mxu0 0.0
        %4815 = vmatprep.subr.mxu0 0.0
        %4816 = vmatpush1.msra.mxu0 0.0
        %4817 = vmatprep.subr.mxu0 0.0
        %4818 = vmatpush1.msra.mxu0 0.0
        %4819 = vmatprep.subr.mxu0 0.0
        %4820 = vmatpush1.msra.mxu0 0.0
        %4821 = vmatprep.subr.mxu0 0.0
        %4822 = vmatpush1.msra.mxu0 0.0
        %4823 = vmatprep.subr.mxu0 0.0
        %4824 = vmatpush1.msra.mxu0 0.0
        %4825 = vmatprep.subr.mxu0 0.0
        %4826 = vmatpush1.msra.mxu0 0.0
        %4827 = vmatprep.subr.mxu0 0.0
        %4828 = vmatpush1.msra.mxu0 0.0
        %4829 = vmatprep.subr.mxu0 0.0
        %4830 = vmatpush1.msra.mxu0 0.0
        %4831 = vmatprep.subr.mxu0 0.0
        %4832 = vmatpush1.msra.mxu0 0.0
        %4833 = vmatprep.subr.mxu0 0.0
        %4834 = vmatpush1.msra.mxu0 0.0
        %4835 = vmatprep.subr.mxu0 0.0
        %4836 = vmatpush1.msra.mxu0 0.0
        %4837 = vmatprep.subr.mxu0 0.0
        %4838 = vmatpush1.msra.mxu0 0.0
        %4839 = vmatprep.subr.mxu0 0.0
        %4840 = vmatpush1.msra.mxu0 0.0
        %4841 = vmatprep.subr.mxu0 0.0
        %4842 = vmatpush1.msra.mxu0 0.0
        %4843 = vmatprep.subr.mxu0 0.0
        %4844 = vmatpush1.msra.mxu0 0.0
        %4845 = vmatprep.subr.mxu0 0.0
        %4846 = vmatpush1.msra.mxu0 0.0
        %4847 = vmatprep.subr.mxu0 0.0
        %4848 = vmatpush1.msra.mxu0 0.0
        %4849 = vmatprep.mubr.f32.mxu0 0.0
        %4850 = vmatmul.mubr.f32.gmra.mrb[0].mxu0 %v4781
        %v4851 = vpop.f32.mrb[0].mxu0
        %v4852 = vadd.f32 0.0, %v4851
        %v4853 = vpop.f32.mrb[0].mxu0
        %v4854 = vadd.f32 0.0, %v4853
        %4855 = vmatprep.mubr.f32.mxu0 0.0
        %4856 = vmatmul.mubr.f32.gmra.mrb[0].mxu0 %v4783
        %v4857 = vpop.f32.mrb[0].mxu0
        %v4858 = vadd.f32 0.0, %v4857
        %v4859 = vpop.f32.mrb[0].mxu0
        %v4860 = vadd.f32 0.0, %v4859
        %4861 = vdwg.mxu0
        %v4862 = vadd.f32 %v4745, %v4852
        %v4863 = vadd.f32 %v4746, %v4854
        %v4864 = vadd.f32 %v4747, %v4858
        %v4865 = vadd.f32 %v4748, %v4860
        %4866 = vrot.lane.b32.xlu0 %v4449, 96
        %v4867 = vpop.permute.xlu0 %4866
        %4868 = vrot.lane.b32.xlu0 %v4450, 96
        %v4869 = vpop.permute.xlu0 %4868
        %4870 = vrot.lane.b32.xlu0 %v4445, 111
        %v4871 = vpop.permute.xlu0 %4870
        %4872 = vrot.lane.b32.xlu0 %v4446, 111
        %v4873 = vpop.permute.xlu0 %4872
        %4874 = vrot.lane.b32.xlu0 %v4451, 111
        %v4875 = vpop.permute.xlu0 %4874
        %vm4876 = vcmask 908288
        %v4877 = vsel %vm4876, %v4871, %v4873
        %v4878 = vsel %vm4876, %v4873, %v4875
        %v4881 = vsel %vm4471, %v4867, 0
        %v4883 = vsel %vm4471, %v4869, 0
        %4885 = vmatprep.subr.mxu0 %v4878
        %4886 = vmatpush1.msra.mxu0 %v4877
        %4887 = vmatprep.subr.mxu0 0.0
        %4888 = vmatpush1.msra.mxu0 0.0
        %4889 = vmatprep.subr.mxu0 0.0
        %4890 = vmatpush1.msra.mxu0 0.0
        %4891 = vmatprep.subr.mxu0 0.0
        %4892 = vmatpush1.msra.mxu0 0.0
        %4893 = vmatprep.subr.mxu0 0.0
        %4894 = vmatpush1.msra.mxu0 0.0
        %4895 = vmatprep.subr.mxu0 0.0
        %4896 = vmatpush1.msra.mxu0 0.0
        %4897 = vmatprep.subr.mxu0 0.0
        %4898 = vmatpush1.msra.mxu0 0.0
        %4899 = vmatprep.subr.mxu0 0.0
        %4900 = vmatpush1.msra.mxu0 0.0
        %4901 = vmatprep.subr.mxu0 0.0
        %4902 = vmatpush1.msra.mxu0 0.0
        %4903 = vmatprep.subr.mxu0 0.0
        %4904 = vmatpush1.msra.mxu0 0.0
        %4905 = vmatprep.subr.mxu0 0.0
        %4906 = vmatpush1.msra.mxu0 0.0
        %4907 = vmatprep.subr.mxu0 0.0
        %4908 = vmatpush1.msra.mxu0 0.0
        %4909 = vmatprep.subr.mxu0 0.0
        %4910 = vmatpush1.msra.mxu0 0.0
        %4911 = vmatprep.subr.mxu0 0.0
        %4912 = vmatpush1.msra.mxu0 0.0
        %4913 = vmatprep.subr.mxu0 0.0
        %4914 = vmatpush1.msra.mxu0 0.0
        %4915 = vmatprep.subr.mxu0 0.0
        %4916 = vmatpush1.msra.mxu0 0.0
        %4917 = vmatprep.subr.mxu0 0.0
        %4918 = vmatpush1.msra.mxu0 0.0
        %4919 = vmatprep.subr.mxu0 0.0
        %4920 = vmatpush1.msra.mxu0 0.0
        %4921 = vmatprep.subr.mxu0 0.0
        %4922 = vmatpush1.msra.mxu0 0.0
        %4923 = vmatprep.subr.mxu0 0.0
        %4924 = vmatpush1.msra.mxu0 0.0
        %4925 = vmatprep.subr.mxu0 0.0
        %4926 = vmatpush1.msra.mxu0 0.0
        %4927 = vmatprep.subr.mxu0 0.0
        %4928 = vmatpush1.msra.mxu0 0.0
        %4929 = vmatprep.subr.mxu0 0.0
        %4930 = vmatpush1.msra.mxu0 0.0
        %4931 = vmatprep.subr.mxu0 0.0
        %4932 = vmatpush1.msra.mxu0 0.0
        %4933 = vmatprep.subr.mxu0 0.0
        %4934 = vmatpush1.msra.mxu0 0.0
        %4935 = vmatprep.subr.mxu0 0.0
        %4936 = vmatpush1.msra.mxu0 0.0
        %4937 = vmatprep.subr.mxu0 0.0
        %4938 = vmatpush1.msra.mxu0 0.0
        %4939 = vmatprep.subr.mxu0 0.0
        %4940 = vmatpush1.msra.mxu0 0.0
        %4941 = vmatprep.subr.mxu0 0.0
        %4942 = vmatpush1.msra.mxu0 0.0
        %4943 = vmatprep.subr.mxu0 0.0
        %4944 = vmatpush1.msra.mxu0 0.0
        %4945 = vmatprep.subr.mxu0 0.0
        %4946 = vmatpush1.msra.mxu0 0.0
        %4947 = vmatprep.subr.mxu0 0.0
        %4948 = vmatpush1.msra.mxu0 0.0
        %4949 = vmatprep.mubr.f32.mxu0 0.0
        %4950 = vmatmul.mubr.f32.gmra.mrb[0].mxu0 %v4881
        %v4951 = vpop.f32.mrb[0].mxu0
        %v4952 = vadd.f32 0.0, %v4951
        %v4953 = vpop.f32.mrb[0].mxu0
        %v4954 = vadd.f32 0.0, %v4953
        %4955 = vmatprep.mubr.f32.mxu0 0.0
        %4956 = vmatmul.mubr.f32.gmra.mrb[0].mxu0 %v4883
        %v4957 = vpop.f32.mrb[0].mxu0
        %v4958 = vadd.f32 0.0, %v4957
        %v4959 = vpop.f32.mrb[0].mxu0
        %v4960 = vadd.f32 0.0, %v4959
        %4961 = vdwg.mxu0
        %v4962 = vadd.f32 %v4862, %v4952
        %v4963 = vadd.f32 %v4863, %v4954
        %v4964 = vadd.f32 %v4864, %v4958
        %v4965 = vadd.f32 %v4865, %v4960
        %4966 = vrot.lane.b32.xlu0 %v4443, 18
        %v4967 = vpop.permute.xlu0 %4966
        %4968 = vrot.lane.b32.xlu0 %v4444, 18
        %v4969 = vpop.permute.xlu0 %4968
        %vm4970 = vcmask 146432
        %v4971 = vsel %vm4970, %v4967, %v4969
        %v4975 = vmul.f32 %v4445, %v4967
        %v4976 = vmul.f32 %v4446, %v4971
        %v4977 = vmul.f32 %v4451, %v4969
        %4978 = vrot.lane.b32.xlu0 %v4449, 88
        %v4979 = vpop.permute.xlu0 %4978
        %4980 = vrot.lane.b32.xlu0 %v4450, 88
        %v4981 = vpop.permute.xlu0 %4980
        %4985 = vrot.lane.b32.xlu0 %v4975, 110
        %v4986 = vpop.permute.xlu0 %4985
        %4987 = vrot.lane.b32.xlu0 %v4976, 110
        %v4988 = vpop.permute.xlu0 %4987
        %4989 = vrot.lane.b32.xlu0 %v4977, 110
        %v4990 = vpop.permute.xlu0 %4989
        %vm4991 = vcmask 900096
        %v4992 = vsel %vm4991, %v4986, %v4988
        %v4993 = vsel %vm4991, %v4988, %v4990
        %v4996 = vsel %vm4471, %v4979, 0
        %v4998 = vsel %vm4471, %v4981, 0
        %5000 = vmatprep.subr.mxu0 %v4993
        %5001 = vmatpush1.msra.mxu0 %v4992
        %5002 = vmatprep.subr.mxu0 0.0
        %5003 = vmatpush1.msra.mxu0 0.0
        %5004 = vmatprep.subr.mxu0 0.0
        %5005 = vmatpush1.msra.mxu0 0.0
        %5006 = vmatprep.subr.mxu0 0.0
        %5007 = vmatpush1.msra.mxu0 0.0
        %5008 = vmatprep.subr.mxu0 0.0
        %5009 = vmatpush1.msra.mxu0 0.0
        %5010 = vmatprep.subr.mxu0 0.0
        %5011 = vmatpush1.msra.mxu0 0.0
        %5012 = vmatprep.subr.mxu0 0.0
        %5013 = vmatpush1.msra.mxu0 0.0
        %5014 = vmatprep.subr.mxu0 0.0
        %5015 = vmatpush1.msra.mxu0 0.0
        %5016 = vmatprep.subr.mxu0 0.0
        %5017 = vmatpush1.msra.mxu0 0.0
        %5018 = vmatprep.subr.mxu0 0.0
        %5019 = vmatpush1.msra.mxu0 0.0
        %5020 = vmatprep.subr.mxu0 0.0
        %5021 = vmatpush1.msra.mxu0 0.0
        %5022 = vmatprep.subr.mxu0 0.0
        %5023 = vmatpush1.msra.mxu0 0.0
        %5024 = vmatprep.subr.mxu0 0.0
        %5025 = vmatpush1.msra.mxu0 0.0
        %5026 = vmatprep.subr.mxu0 0.0
        %5027 = vmatpush1.msra.mxu0 0.0
        %5028 = vmatprep.subr.mxu0 0.0
        %5029 = vmatpush1.msra.mxu0 0.0
        %5030 = vmatprep.subr.mxu0 0.0
        %5031 = vmatpush1.msra.mxu0 0.0
        %5032 = vmatprep.subr.mxu0 0.0
        %5033 = vmatpush1.msra.mxu0 0.0
        %5034 = vmatprep.subr.mxu0 0.0
        %5035 = vmatpush1.msra.mxu0 0.0
        %5036 = vmatprep.subr.mxu0 0.0
        %5037 = vmatpush1.msra.mxu0 0.0
        %5038 = vmatprep.subr.mxu0 0.0
        %5039 = vmatpush1.msra.mxu0 0.0
        %5040 = vmatprep.subr.mxu0 0.0
        %5041 = vmatpush1.msra.mxu0 0.0
        %5042 = vmatprep.subr.mxu0 0.0
        %5043 = vmatpush1.msra.mxu0 0.0
        %5044 = vmatprep.subr.mxu0 0.0
        %5045 = vmatpush1.msra.mxu0 0.0
        %5046 = vmatprep.subr.mxu0 0.0
        %5047 = vmatpush1.msra.mxu0 0.0
        %5048 = vmatprep.subr.mxu0 0.0
        %5049 = vmatpush1.msra.mxu0 0.0
        %5050 = vmatprep.subr.mxu0 0.0
        %5051 = vmatpush1.msra.mxu0 0.0
        %5052 = vmatprep.subr.mxu0 0.0
        %5053 = vmatpush1.msra.mxu0 0.0
        %5054 = vmatprep.subr.mxu0 0.0
        %5055 = vmatpush1.msra.mxu0 0.0
        %5056 = vmatprep.subr.mxu0 0.0
        %5057 = vmatpush1.msra.mxu0 0.0
        %5058 = vmatprep.subr.mxu0 0.0
        %5059 = vmatpush1.msra.mxu0 0.0
        %5060 = vmatprep.subr.mxu0 0.0
        %5061 = vmatpush1.msra.mxu0 0.0
        %5062 = vmatprep.subr.mxu0 0.0
        %5063 = vmatpush1.msra.mxu0 0.0
        %5064 = vmatprep.mubr.f32.mxu0 0.0
        %5065 = vmatmul.mubr.f32.gmra.mrb[0].mxu0 %v4996
        %v5066 = vpop.f32.mrb[0].mxu0
        %v5067 = vadd.f32 0.0, %v5066
        %v5068 = vpop.f32.mrb[0].mxu0
        %v5069 = vadd.f32 0.0, %v5068
        %5070 = vmatprep.mubr.f32.mxu0 0.0
        %5071 = vmatmul.mubr.f32.gmra.mrb[0].mxu0 %v4998
        %v5072 = vpop.f32.mrb[0].mxu0
        %v5073 = vadd.f32 0.0, %v5072
        %v5074 = vpop.f32.mrb[0].mxu0
        %v5075 = vadd.f32 0.0, %v5074
        %5076 = vdwg.mxu0
        %v5077 = vadd.f32 %v4962, %v5067
        %v5078 = vadd.f32 %v4963, %v5069
        %v5079 = vadd.f32 %v4964, %v5073
        %v5080 = vadd.f32 %v4965, %v5075
        %5081 = vrot.lane.b32.xlu0 %v4437, 32
        %v5082 = vpop.permute.xlu0 %5081
        %5083 = vrot.lane.b32.xlu0 %v4438, 32
        %v5084 = vpop.permute.xlu0 %5083
        %v5085 = vsel %vm1523, %v5082, %v5084
        %v5089 = vmul.f32 %v4445, %v5082
        %v5090 = vmul.f32 %v4446, %v5085
        %v5091 = vmul.f32 %v4451, %v5084
        %5092 = vrot.lane.b32.xlu0 %v4449, 80
        %v5093 = vpop.permute.xlu0 %5092
        %5094 = vrot.lane.b32.xlu0 %v4450, 80
        %v5095 = vpop.permute.xlu0 %5094
        %5099 = vrot.lane.b32.xlu0 %v5089, 96
        %v5100 = vpop.permute.xlu0 %5099
        %5101 = vrot.lane.b32.xlu0 %v5090, 96
        %v5102 = vpop.permute.xlu0 %5101
        %5103 = vrot.lane.b32.xlu0 %v5091, 96
        %v5104 = vpop.permute.xlu0 %5103
        %v5105 = vsel %vm1572, %v5100, %v5102
        %v5106 = vsel %vm1572, %v5102, %v5104
        %v5109 = vsel %vm4471, %v5093, 0
        %v5111 = vsel %vm4471, %v5095, 0
        %5113 = vmatprep.subr.mxu0 %v5106
        %5114 = vmatpush1.msra.mxu0 %v5105
        %5115 = vmatprep.subr.mxu0 0.0
        %5116 = vmatpush1.msra.mxu0 0.0
        %5117 = vmatprep.subr.mxu0 0.0
        %5118 = vmatpush1.msra.mxu0 0.0
        %5119 = vmatprep.subr.mxu0 0.0
        %5120 = vmatpush1.msra.mxu0 0.0
        %5121 = vmatprep.subr.mxu0 0.0
        %5122 = vmatpush1.msra.mxu0 0.0
        %5123 = vmatprep.subr.mxu0 0.0
        %5124 = vmatpush1.msra.mxu0 0.0
        %5125 = vmatprep.subr.mxu0 0.0
        %5126 = vmatpush1.msra.mxu0 0.0
        %5127 = vmatprep.subr.mxu0 0.0
        %5128 = vmatpush1.msra.mxu0 0.0
        %5129 = vmatprep.subr.mxu0 0.0
        %5130 = vmatpush1.msra.mxu0 0.0
        %5131 = vmatprep.subr.mxu0 0.0
        %5132 = vmatpush1.msra.mxu0 0.0
        %5133 = vmatprep.subr.mxu0 0.0
        %5134 = vmatpush1.msra.mxu0 0.0
        %5135 = vmatprep.subr.mxu0 0.0
        %5136 = vmatpush1.msra.mxu0 0.0
        %5137 = vmatprep.subr.mxu0 0.0
        %5138 = vmatpush1.msra.mxu0 0.0
        %5139 = vmatprep.subr.mxu0 0.0
        %5140 = vmatpush1.msra.mxu0 0.0
        %5141 = vmatprep.subr.mxu0 0.0
        %5142 = vmatpush1.msra.mxu0 0.0
        %5143 = vmatprep.subr.mxu0 0.0
        %5144 = vmatpush1.msra.mxu0 0.0
        %5145 = vmatprep.subr.mxu0 0.0
        %5146 = vmatpush1.msra.mxu0 0.0
        %5147 = vmatprep.subr.mxu0 0.0
        %5148 = vmatpush1.msra.mxu0 0.0
        %5149 = vmatprep.subr.mxu0 0.0
        %5150 = vmatpush1.msra.mxu0 0.0
        %5151 = vmatprep.subr.mxu0 0.0
        %5152 = vmatpush1.msra.mxu0 0.0
        %5153 = vmatprep.subr.mxu0 0.0
        %5154 = vmatpush1.msra.mxu0 0.0
        %5155 = vmatprep.subr.mxu0 0.0
        %5156 = vmatpush1.msra.mxu0 0.0
        %5157 = vmatprep.subr.mxu0 0.0
        %5158 = vmatpush1.msra.mxu0 0.0
        %5159 = vmatprep.subr.mxu0 0.0
        %5160 = vmatpush1.msra.mxu0 0.0
        %5161 = vmatprep.subr.mxu0 0.0
        %5162 = vmatpush1.msra.mxu0 0.0
        %5163 = vmatprep.subr.mxu0 0.0
        %5164 = vmatpush1.msra.mxu0 0.0
        %5165 = vmatprep.subr.mxu0 0.0
        %5166 = vmatpush1.msra.mxu0 0.0
        %5167 = vmatprep.subr.mxu0 0.0
        %5168 = vmatpush1.msra.mxu0 0.0
        %5169 = vmatprep.subr.mxu0 0.0
        %5170 = vmatpush1.msra.mxu0 0.0
        %5171 = vmatprep.subr.mxu0 0.0
        %5172 = vmatpush1.msra.mxu0 0.0
        %5173 = vmatprep.subr.mxu0 0.0
        %5174 = vmatpush1.msra.mxu0 0.0
        %5175 = vmatprep.subr.mxu0 0.0
        %5176 = vmatpush1.msra.mxu0 0.0
        %5177 = vmatprep.mubr.f32.mxu0 0.0
        %5178 = vmatmul.mubr.f32.gmra.mrb[0].mxu0 %v5109
        %v5179 = vpop.f32.mrb[0].mxu0
        %v5180 = vadd.f32 0.0, %v5179
        %v5181 = vpop.f32.mrb[0].mxu0
        %v5182 = vadd.f32 0.0, %v5181
        %5183 = vmatprep.mubr.f32.mxu0 0.0
        %5184 = vmatmul.mubr.f32.gmra.mrb[0].mxu0 %v5111
        %v5185 = vpop.f32.mrb[0].mxu0
        %v5186 = vadd.f32 0.0, %v5185
        %v5187 = vpop.f32.mrb[0].mxu0
        %v5188 = vadd.f32 0.0, %v5187
        %5189 = vdwg.mxu0
        %v5190 = vadd.f32 %v5077, %v5180
        %v5191 = vadd.f32 %v5078, %v5182
        %v5192 = vadd.f32 %v5079, %v5186
        %v5193 = vadd.f32 %v5080, %v5188
        %5194 = vrot.lane.b32.xlu0 %v4449, 72
        %v5195 = vpop.permute.xlu0 %5194
        %5196 = vrot.lane.b32.xlu0 %v4450, 72
        %v5197 = vpop.permute.xlu0 %5196
        %5198 = vrot.lane.b32.xlu0 %v4445, 95
        %v5199 = vpop.permute.xlu0 %5198
        %5200 = vrot.lane.b32.xlu0 %v4446, 95
        %v5201 = vpop.permute.xlu0 %5200
        %5202 = vrot.lane.b32.xlu0 %v4451, 95
        %v5203 = vpop.permute.xlu0 %5202
        %v5204 = vsel %vm1927, %v5199, %v5201
        %v5205 = vsel %vm1927, %v5201, %v5203
        %v5208 = vsel %vm4471, %v5195, 0
        %v5210 = vsel %vm4471, %v5197, 0
        %5212 = vmatprep.subr.mxu0 %v5205
        %5213 = vmatpush1.msra.mxu0 %v5204
        %5214 = vmatprep.subr.mxu0 0.0
        %5215 = vmatpush1.msra.mxu0 0.0
        %5216 = vmatprep.subr.mxu0 0.0
        %5217 = vmatpush1.msra.mxu0 0.0
        %5218 = vmatprep.subr.mxu0 0.0
        %5219 = vmatpush1.msra.mxu0 0.0
        %5220 = vmatprep.subr.mxu0 0.0
        %5221 = vmatpush1.msra.mxu0 0.0
        %5222 = vmatprep.subr.mxu0 0.0
        %5223 = vmatpush1.msra.mxu0 0.0
        %5224 = vmatprep.subr.mxu0 0.0
        %5225 = vmatpush1.msra.mxu0 0.0
        %5226 = vmatprep.subr.mxu0 0.0
        %5227 = vmatpush1.msra.mxu0 0.0
        %5228 = vmatprep.subr.mxu0 0.0
        %5229 = vmatpush1.msra.mxu0 0.0
        %5230 = vmatprep.subr.mxu0 0.0
        %5231 = vmatpush1.msra.mxu0 0.0
        %5232 = vmatprep.subr.mxu0 0.0
        %5233 = vmatpush1.msra.mxu0 0.0
        %5234 = vmatprep.subr.mxu0 0.0
        %5235 = vmatpush1.msra.mxu0 0.0
        %5236 = vmatprep.subr.mxu0 0.0
        %5237 = vmatpush1.msra.mxu0 0.0
        %5238 = vmatprep.subr.mxu0 0.0
        %5239 = vmatpush1.msra.mxu0 0.0
        %5240 = vmatprep.subr.mxu0 0.0
        %5241 = vmatpush1.msra.mxu0 0.0
        %5242 = vmatprep.subr.mxu0 0.0
        %5243 = vmatpush1.msra.mxu0 0.0
        %5244 = vmatprep.subr.mxu0 0.0
        %5245 = vmatpush1.msra.mxu0 0.0
        %5246 = vmatprep.subr.mxu0 0.0
        %5247 = vmatpush1.msra.mxu0 0.0
        %5248 = vmatprep.subr.mxu0 0.0
        %5249 = vmatpush1.msra.mxu0 0.0
        %5250 = vmatprep.subr.mxu0 0.0
        %5251 = vmatpush1.msra.mxu0 0.0
        %5252 = vmatprep.subr.mxu0 0.0
        %5253 = vmatpush1.msra.mxu0 0.0
        %5254 = vmatprep.subr.mxu0 0.0
        %5255 = vmatpush1.msra.mxu0 0.0
        %5256 = vmatprep.subr.mxu0 0.0
        %5257 = vmatpush1.msra.mxu0 0.0
        %5258 = vmatprep.subr.mxu0 0.0
        %5259 = vmatpush1.msra.mxu0 0.0
        %5260 = vmatprep.subr.mxu0 0.0
        %5261 = vmatpush1.msra.mxu0 0.0
        %5262 = vmatprep.subr.mxu0 0.0
        %5263 = vmatpush1.msra.mxu0 0.0
        %5264 = vmatprep.subr.mxu0 0.0
        %5265 = vmatpush1.msra.mxu0 0.0
        %5266 = vmatprep.subr.mxu0 0.0
        %5267 = vmatpush1.msra.mxu0 0.0
        %5268 = vmatprep.subr.mxu0 0.0
        %5269 = vmatpush1.msra.mxu0 0.0
        %5270 = vmatprep.subr.mxu0 0.0
        %5271 = vmatpush1.msra.mxu0 0.0
        %5272 = vmatprep.subr.mxu0 0.0
        %5273 = vmatpush1.msra.mxu0 0.0
        %5274 = vmatprep.subr.mxu0 0.0
        %5275 = vmatpush1.msra.mxu0 0.0
        %5276 = vmatprep.mubr.f32.mxu0 0.0
        %5277 = vmatmul.mubr.f32.gmra.mrb[0].mxu0 %v5208
        %v5278 = vpop.f32.mrb[0].mxu0
        %v5279 = vadd.f32 0.0, %v5278
        %v5280 = vpop.f32.mrb[0].mxu0
        %v5281 = vadd.f32 0.0, %v5280
        %5282 = vmatprep.mubr.f32.mxu0 0.0
        %5283 = vmatmul.mubr.f32.gmra.mrb[0].mxu0 %v5210
        %v5284 = vpop.f32.mrb[0].mxu0
        %v5285 = vadd.f32 0.0, %v5284
        %v5286 = vpop.f32.mrb[0].mxu0
        %v5287 = vadd.f32 0.0, %v5286
        %5288 = vdwg.mxu0
        %v5289 = vadd.f32 %v5190, %v5279
        %v5290 = vadd.f32 %v5191, %v5281
        %v5291 = vadd.f32 %v5192, %v5285
        %v5292 = vadd.f32 %v5193, %v5287
        %5293 = vrot.lane.b32.xlu0 %v4443, 34
        %v5294 = vpop.permute.xlu0 %5293
        %5295 = vrot.lane.b32.xlu0 %v4444, 34
        %v5296 = vpop.permute.xlu0 %5295
        %v5297 = vsel %vm2263, %v5294, %v5296
        %v5301 = vmul.f32 %v4445, %v5294
        %v5302 = vmul.f32 %v4446, %v5297
        %v5303 = vmul.f32 %v4451, %v5296
        %5304 = vrot.lane.b32.xlu0 %v4449, 64
        %v5305 = vpop.permute.xlu0 %5304
        %5306 = vrot.lane.b32.xlu0 %v4450, 64
        %v5307 = vpop.permute.xlu0 %5306
        %5311 = vrot.lane.b32.xlu0 %v5301, 94
        %v5312 = vpop.permute.xlu0 %5311
        %5313 = vrot.lane.b32.xlu0 %v5302, 94
        %v5314 = vpop.permute.xlu0 %5313
        %5315 = vrot.lane.b32.xlu0 %v5303, 94
        %v5316 = vpop.permute.xlu0 %5315
        %v5317 = vsel %vm2312, %v5312, %v5314
        %v5318 = vsel %vm2312, %v5314, %v5316
        %v5321 = vsel %vm4471, %v5305, 0
        %v5323 = vsel %vm4471, %v5307, 0
        %5325 = vmatprep.subr.mxu0 %v5318
        %5326 = vmatpush1.msra.mxu0 %v5317
        %5327 = vmatprep.subr.mxu0 0.0
        %5328 = vmatpush1.msra.mxu0 0.0
        %5329 = vmatprep.subr.mxu0 0.0
        %5330 = vmatpush1.msra.mxu0 0.0
        %5331 = vmatprep.subr.mxu0 0.0
        %5332 = vmatpush1.msra.mxu0 0.0
        %5333 = vmatprep.subr.mxu0 0.0
        %5334 = vmatpush1.msra.mxu0 0.0
        %5335 = vmatprep.subr.mxu0 0.0
        %5336 = vmatpush1.msra.mxu0 0.0
        %5337 = vmatprep.subr.mxu0 0.0
        %5338 = vmatpush1.msra.mxu0 0.0
        %5339 = vmatprep.subr.mxu0 0.0
        %5340 = vmatpush1.msra.mxu0 0.0
        %5341 = vmatprep.subr.mxu0 0.0
        %5342 = vmatpush1.msra.mxu0 0.0
        %5343 = vmatprep.subr.mxu0 0.0
        %5344 = vmatpush1.msra.mxu0 0.0
        %5345 = vmatprep.subr.mxu0 0.0
        %5346 = vmatpush1.msra.mxu0 0.0
        %5347 = vmatprep.subr.mxu0 0.0
        %5348 = vmatpush1.msra.mxu0 0.0
        %5349 = vmatprep.subr.mxu0 0.0
        %5350 = vmatpush1.msra.mxu0 0.0
        %5351 = vmatprep.subr.mxu0 0.0
        %5352 = vmatpush1.msra.mxu0 0.0
        %5353 = vmatprep.subr.mxu0 0.0
        %5354 = vmatpush1.msra.mxu0 0.0
        %5355 = vmatprep.subr.mxu0 0.0
        %5356 = vmatpush1.msra.mxu0 0.0
        %5357 = vmatprep.subr.mxu0 0.0
        %5358 = vmatpush1.msra.mxu0 0.0
        %5359 = vmatprep.subr.mxu0 0.0
        %5360 = vmatpush1.msra.mxu0 0.0
        %5361 = vmatprep.subr.mxu0 0.0
        %5362 = vmatpush1.msra.mxu0 0.0
        %5363 = vmatprep.subr.mxu0 0.0
        %5364 = vmatpush1.msra.mxu0 0.0
        %5365 = vmatprep.subr.mxu0 0.0
        %5366 = vmatpush1.msra.mxu0 0.0
        %5367 = vmatprep.subr.mxu0 0.0
        %5368 = vmatpush1.msra.mxu0 0.0
        %5369 = vmatprep.subr.mxu0 0.0
        %5370 = vmatpush1.msra.mxu0 0.0
        %5371 = vmatprep.subr.mxu0 0.0
        %5372 = vmatpush1.msra.mxu0 0.0
        %5373 = vmatprep.subr.mxu0 0.0
        %5374 = vmatpush1.msra.mxu0 0.0
        %5375 = vmatprep.subr.mxu0 0.0
        %5376 = vmatpush1.msra.mxu0 0.0
        %5377 = vmatprep.subr.mxu0 0.0
        %5378 = vmatpush1.msra.mxu0 0.0
        %5379 = vmatprep.subr.mxu0 0.0
        %5380 = vmatpush1.msra.mxu0 0.0
        %5381 = vmatprep.subr.mxu0 0.0
        %5382 = vmatpush1.msra.mxu0 0.0
        %5383 = vmatprep.subr.mxu0 0.0
        %5384 = vmatpush1.msra.mxu0 0.0
        %5385 = vmatprep.subr.mxu0 0.0
        %5386 = vmatpush1.msra.mxu0 0.0
        %5387 = vmatprep.subr.mxu0 0.0
        %5388 = vmatpush1.msra.mxu0 0.0
        %5389 = vmatprep.mubr.f32.mxu0 0.0
        %5390 = vmatmul.mubr.f32.gmra.mrb[0].mxu0 %v5321
        %v5391 = vpop.f32.mrb[0].mxu0
        %v5392 = vadd.f32 0.0, %v5391
        %v5393 = vpop.f32.mrb[0].mxu0
        %v5394 = vadd.f32 0.0, %v5393
        %5395 = vmatprep.mubr.f32.mxu0 0.0
        %5396 = vmatmul.mubr.f32.gmra.mrb[0].mxu0 %v5323
        %v5397 = vpop.f32.mrb[0].mxu0
        %v5398 = vadd.f32 0.0, %v5397
        %v5399 = vpop.f32.mrb[0].mxu0
        %v5400 = vadd.f32 0.0, %v5399
        %5401 = vdwg.mxu0
        %v5402 = vadd.f32 %v5289, %v5392
        %v5403 = vadd.f32 %v5290, %v5394
        %v5404 = vadd.f32 %v5291, %v5398
        %v5405 = vadd.f32 %v5292, %v5400
        %v5406 = vld [vmem:[%s5] sm:$0xff]
        %v5407 = vld [vmem:[%s5 + $0x8] sm:$0xff]
        %5409 = vset.pattern.permute.xlu0 0
        %5410 = vperm.xlu0 %5409, %v5406
        %v5411 = vpop.permute.xlu0 %5410
        %5414 = vset.pattern.permute.xlu0 0
        %5415 = vperm.xlu0 %5414, %v5407
        %v5416 = vpop.permute.xlu0 %5415
        %v5418 = vadd.f32 %v5402, %v5411
        %v5419 = vadd.f32 %v5403, %v5411
        %v5420 = vadd.f32 %v5404, %v5416
        %v5421 = vadd.f32 %v5405, %v5416
        %v5422 = vmax.f32 %v5418, 0.0
        %v5423 = vmax.f32 %v5419, 0.0
        %v5424 = vmax.f32 %v5420, 0.0
        %v5425 = vmax.f32 %v5421, 0.0
        %5430 = vrot.lane.b32.xlu0 %v5422, 127
        %v5431 = vpop.permute.xlu0 %5430
        %5432 = vrot.lane.b32.xlu0 %v5423, 127
        %v5433 = vpop.permute.xlu0 %5432
        %5434 = vrot.lane.b32.xlu0 %v5424, 127
        %v5435 = vpop.permute.xlu0 %5434
        %5436 = vrot.lane.b32.xlu0 %v5425, 127
        %v5437 = vpop.permute.xlu0 %5436
        %v5438 = vsel %vm486, %v5431, %v5433
        %v5439 = vsel %vm486, %v5435, %v5437
        %v5444 = vmax.f32 %v5422, %v5438
        %v5445 = vmax.f32 %v5423, %v5433
        %v5446 = vmax.f32 %v5424, %v5439
        %v5447 = vmax.f32 %v5425, %v5437
        %5452 = vrot.lane.b32.xlu0 %v5444, 112
        %v5453 = vpop.permute.xlu0 %5452
        %5454 = vrot.lane.b32.xlu0 %v5445, 112
        %v5455 = vpop.permute.xlu0 %5454
        %5456 = vrot.lane.b32.xlu0 %v5446, 112
        %v5457 = vpop.permute.xlu0 %5456
        %5458 = vrot.lane.b32.xlu0 %v5447, 112
        %v5459 = vpop.permute.xlu0 %5458
        %v5460 = vsel %vm4776, %v5453, %v5455
        %v5461 = vsel %vm4776, %v5457, %v5459
        %v5466 = vmax.f32 %v5444, %v5460
        %v5467 = vmax.f32 %v5445, %v5455
        %v5468 = vmax.f32 %v5446, %v5461
        %v5469 = vmax.f32 %v5447, %v5459
        %v5470 = vld [vmem:[%s6] sm:$0xff]
        %v5471 = vld [vmem:[%s6 + $0x8] sm:$0xff]
        %v5472 = vld [vmem:[%s6 + $0x10] sm:$0xff]
        %v5473 = vld [vmem:[%s6 + $0x18] sm:$0xff]
        %v5474 = vld [vmem:[%s6 + $0x20] sm:$0xff]
        %v5475 = vld [vmem:[%s6 + $0x28] sm:$0xff]
        %v5476 = vld [vmem:[%s6 + $0x30] sm:$0xff]
        %v5477 = vld [vmem:[%s6 + $0x38] sm:$0xff]
        %v5478 = vld [vmem:[%s6 + $0x40] sm:$0xff]
        %v5479 = vld [vmem:[%s6 + $0x48] sm:$0xff]
        %v5480 = vld [vmem:[%s6 + $0x50] sm:$0xff]
        %v5481 = vld [vmem:[%s6 + $0x58] sm:$0xff]
        %v5482 = vld [vmem:[%s6 + $0x60] sm:$0xff]
        %v5483 = vld [vmem:[%s6 + $0x68] sm:$0xff]
        %v5484 = vld [vmem:[%s6 + $0x70] sm:$0xff]
        %v5485 = vld [vmem:[%s6 + $0x78] sm:$0xff]
        %v5486 = vld [vmem:[%s6 + $0x80] sm:$0xff]
        %v5487 = vld [vmem:[%s6 + $0x88] sm:$0xff]
        %v5488 = vld [vmem:[%s6 + $0x90] sm:$0xff]
        %v5489 = vld [vmem:[%s6 + $0x98] sm:$0xff]
        %v5490 = vld [vmem:[%s6 + $0xa0] sm:$0xff]
        %v5491 = vld [vmem:[%s6 + $0xa8] sm:$0xff]
        %v5492 = vld [vmem:[%s6 + $0xb0] sm:$0xff]
        %v5493 = vld [vmem:[%s6 + $0xb8] sm:$0xff]
        %v5494 = vld [vmem:[%s6 + $0xc0] sm:$0xff]
        %v5495 = vld [vmem:[%s6 + $0xc8] sm:$0xff]
        %v5496 = vld [vmem:[%s6 + $0xd0] sm:$0xff]
        %v5497 = vld [vmem:[%s6 + $0xd8] sm:$0xff]
        %v5498 = vld [vmem:[%s6 + $0xe0] sm:$0xff]
        %v5499 = vld [vmem:[%s6 + $0xe8] sm:$0x7f]
        %v5501 = vsel %vm4876, %v5467, 0
        %v5504 = vsel %vm4876, %v5469, 0
        %v5507 = vsel %vm4122, %v5499, 0
        %5509 = vmatprep.subr.mxu0 0.0
        %5510 = vmatpush1.msra.mxu0 %v5470
        %5511 = vmatprep.subr.mxu0 0.0
        %5512 = vmatpush1.msra.mxu0 %v5471
        %5513 = vmatprep.subr.mxu0 0.0
        %5514 = vmatpush1.msra.mxu0 %v5472
        %5515 = vmatprep.subr.mxu0 0.0
        %5516 = vmatpush1.msra.mxu0 %v5473
        %5517 = vmatprep.subr.mxu0 0.0
        %5518 = vmatpush1.msra.mxu0 %v5474
        %5519 = vmatprep.subr.mxu0 0.0
        %5520 = vmatpush1.msra.mxu0 %v5475
        %5521 = vmatprep.subr.mxu0 0.0
        %5522 = vmatpush1.msra.mxu0 %v5476
        %5523 = vmatprep.subr.mxu0 0.0
        %5524 = vmatpush1.msra.mxu0 %v5477
        %5525 = vmatprep.subr.mxu0 0.0
        %5526 = vmatpush1.msra.mxu0 %v5478
        %5527 = vmatprep.subr.mxu0 0.0
        %5528 = vmatpush1.msra.mxu0 %v5479
        %5529 = vmatprep.subr.mxu0 0.0
        %5530 = vmatpush1.msra.mxu0 %v5480
        %5531 = vmatprep.subr.mxu0 0.0
        %5532 = vmatpush1.msra.mxu0 %v5481
        %5533 = vmatprep.subr.mxu0 0.0
        %5534 = vmatpush1.msra.mxu0 %v5482
        %5535 = vmatprep.subr.mxu0 0.0
        %5536 = vmatpush1.msra.mxu0 %v5483
        %5537 = vmatprep.subr.mxu0 0.0
        %5538 = vmatpush1.msra.mxu0 %v5484
        %5539 = vmatprep.subr.mxu0 0.0
        %5540 = vmatpush1.msra.mxu0 %v5485
        %5541 = vmatprep.subr.mxu0 0.0
        %5542 = vmatpush1.msra.mxu0 %v5486
        %5543 = vmatprep.subr.mxu0 0.0
        %5544 = vmatpush1.msra.mxu0 %v5487
        %5545 = vmatprep.subr.mxu0 0.0
        %5546 = vmatpush1.msra.mxu0 %v5488
        %5547 = vmatprep.subr.mxu0 0.0
        %5548 = vmatpush1.msra.mxu0 %v5489
        %5549 = vmatprep.subr.mxu0 0.0
        %5550 = vmatpush1.msra.mxu0 %v5490
        %5551 = vmatprep.subr.mxu0 0.0
        %5552 = vmatpush1.msra.mxu0 %v5491
        %5553 = vmatprep.subr.mxu0 0.0
        %5554 = vmatpush1.msra.mxu0 %v5492
        %5555 = vmatprep.subr.mxu0 0.0
        %5556 = vmatpush1.msra.mxu0 %v5493
        %5557 = vmatprep.subr.mxu0 0.0
        %5558 = vmatpush1.msra.mxu0 %v5494
        %5559 = vmatprep.subr.mxu0 0.0
        %5560 = vmatpush1.msra.mxu0 %v5495
        %5561 = vmatprep.subr.mxu0 0.0
        %5562 = vmatpush1.msra.mxu0 %v5496
        %5563 = vmatprep.subr.mxu0 0.0
        %5564 = vmatpush1.msra.mxu0 %v5497
        %5565 = vmatprep.subr.mxu0 0.0
        %5566 = vmatpush1.msra.mxu0 %v5498
        %5567 = vmatprep.subr.mxu0 0.0
        %5568 = vmatpush1.msra.mxu0 %v5507
        %5569 = vmatprep.subr.mxu0 0.0
        %5570 = vmatpush1.msra.mxu0 0.0
        %5571 = vmatprep.subr.mxu0 0.0
        %5572 = vmatpush1.msra.mxu0 0.0
        %5573 = vmatprep.mubr.f32.mxu0 %v5501
        %5574 = vmatmul.mubr.f32.gmra.mrb[0].mxu0 %v5466
        %v5575 = vpop.f32.mrb[0].mxu0
        %v5576 = vadd.f32 0.0, %v5575
        %v5577 = vpop.f32.mrb[0].mxu0
        %5578 = vmatprep.mubr.f32.mxu0 %v5504
        %5579 = vmatmul.mubr.f32.gmra.mrb[0].mxu0 %v5468
        %v5580 = vpop.f32.mrb[0].mxu0
        %v5581 = vadd.f32 0.0, %v5580
        %v5582 = vpop.f32.mrb[0].mxu0
        %5583 = vdwg.mxu0
        %v5584 = vld [vmem:[%s7] sm:$0xff]
        %v5585 = vld [vmem:[%s7 + $0x8] sm:$0xff]
        %v5586 = vld [vmem:[%s7 + $0x10] sm:$0xff]
        %v5587 = vld [vmem:[%s7 + $0x18] sm:$0xff]
        %v5588 = vld [vmem:[%s7 + $0x20] sm:$0xff]
        %v5589 = vld [vmem:[%s7 + $0x28] sm:$0xff]
        %v5590 = vld [vmem:[%s7 + $0x30] sm:$0xff]
        %v5591 = vld [vmem:[%s7 + $0x38] sm:$0xff]
        %v5593 = vsel %vm2648, %v5576, 0
        %v5596 = vsel %vm2648, %v5581, 0
        %5598 = vmatprep.subr.mxu0 0.0
        %5599 = vmatpush1.msra.mxu0 %v5584
        %5600 = vmatprep.subr.mxu0 0.0
        %5601 = vmatpush1.msra.mxu0 %v5585
        %5602 = vmatprep.subr.mxu0 0.0
        %5603 = vmatpush1.msra.mxu0 %v5586
        %5604 = vmatprep.subr.mxu0 0.0
        %5605 = vmatpush1.msra.mxu0 %v5587
        %5606 = vmatprep.subr.mxu0 0.0
        %5607 = vmatpush1.msra.mxu0 %v5588
        %5608 = vmatprep.subr.mxu0 0.0
        %5609 = vmatpush1.msra.mxu0 %v5589
        %5610 = vmatprep.subr.mxu0 0.0
        %5611 = vmatpush1.msra.mxu0 %v5590
        %5612 = vmatprep.subr.mxu0 0.0
        %5613 = vmatpush1.msra.mxu0 %v5591
        %5614 = vmatprep.subr.mxu0 0.0
        %5615 = vmatpush1.msra.mxu0 0.0
        %5616 = vmatprep.subr.mxu0 0.0
        %5617 = vmatpush1.msra.mxu0 0.0
        %5618 = vmatprep.subr.mxu0 0.0
        %5619 = vmatpush1.msra.mxu0 0.0
        %5620 = vmatprep.subr.mxu0 0.0
        %5621 = vmatpush1.msra.mxu0 0.0
        %5622 = vmatprep.subr.mxu0 0.0
        %5623 = vmatpush1.msra.mxu0 0.0
        %5624 = vmatprep.subr.mxu0 0.0
        %5625 = vmatpush1.msra.mxu0 0.0
        %5626 = vmatprep.subr.mxu0 0.0
        %5627 = vmatpush1.msra.mxu0 0.0
        %5628 = vmatprep.subr.mxu0 0.0
        %5629 = vmatpush1.msra.mxu0 0.0
        %5630 = vmatprep.subr.mxu0 0.0
        %5631 = vmatpush1.msra.mxu0 0.0
        %5632 = vmatprep.subr.mxu0 0.0
        %5633 = vmatpush1.msra.mxu0 0.0
        %5634 = vmatprep.subr.mxu0 0.0
        %5635 = vmatpush1.msra.mxu0 0.0
        %5636 = vmatprep.subr.mxu0 0.0
        %5637 = vmatpush1.msra.mxu0 0.0
        %5638 = vmatprep.subr.mxu0 0.0
        %5639 = vmatpush1.msra.mxu0 0.0
        %5640 = vmatprep.subr.mxu0 0.0
        %5641 = vmatpush1.msra.mxu0 0.0
        %5642 = vmatprep.subr.mxu0 0.0
        %5643 = vmatpush1.msra.mxu0 0.0
        %5644 = vmatprep.subr.mxu0 0.0
        %5645 = vmatpush1.msra.mxu0 0.0
        %5646 = vmatprep.subr.mxu0 0.0
        %5647 = vmatpush1.msra.mxu0 0.0
        %5648 = vmatprep.subr.mxu0 0.0
        %5649 = vmatpush1.msra.mxu0 0.0
        %5650 = vmatprep.subr.mxu0 0.0
        %5651 = vmatpush1.msra.mxu0 0.0
        %5652 = vmatprep.subr.mxu0 0.0
        %5653 = vmatpush1.msra.mxu0 0.0
        %5654 = vmatprep.subr.mxu0 0.0
        %5655 = vmatpush1.msra.mxu0 0.0
        %5656 = vmatprep.subr.mxu0 0.0
        %5657 = vmatpush1.msra.mxu0 0.0
        %5658 = vmatprep.subr.mxu0 0.0
        %5659 = vmatpush1.msra.mxu0 0.0
        %5660 = vmatprep.subr.mxu0 0.0
        %5661 = vmatpush1.msra.mxu0 0.0
        %5662 = vmatprep.mubr.f32.mxu0 0.0
        %5663 = vmatmul.mubr.f32.gmra.mrb[0].mxu0 %v5593
        %v5664 = vpop.f32.mrb[0].mxu0
        %v5665 = vadd.f32 0.0, %v5664
        %v5666 = vpop.f32.mrb[0].mxu0
        %5667 = vmatprep.mubr.f32.mxu0 0.0
        %5668 = vmatmul.mubr.f32.gmra.mrb[0].mxu0 %v5596
        %v5669 = vpop.f32.mrb[0].mxu0
        %v5670 = vadd.f32 0.0, %v5669
        %v5671 = vpop.f32.mrb[0].mxu0
        %5672 = vdwg.mxu0
        %vm5673 = vcmask 400384
        %5674 = vst.msk [vmem:[%s313] sm:$0xff] %vm5673, %v5665
        %5675 = vst.msk [vmem:[%s313 + $0x8] sm:$0xff] %vm5673, %v5670
        %s5676 = sand.u32 %s204, 1
        %s5677 = scalar_lea.sflag [#allocation6], %s5676
        %s5678 = sand.u32 %s204, 1
        %s5679 = smul.addr %s5678, 16
        %s5680 = scalar_lea.vmem [#allocation7], %s5679
        // Predicated region
        $region57: #{tpu_custom_call.1} parent=51 // pred_check
          %p5681 = pneg %p214
        $region58: #{tpu_custom_call.1} parent=51 // pred_check_branch
          %5683 = sbr.rel (%p5681) target = $region60
        $region59: #{tpu_custom_call.1} parent=51 // pred_region
          %s5685 = ssub.s32 256, 256
          %5686 = vsyncadd %s5677, %s5685
          %s5687 = smul.addr %s23, 2
          %s5688 = smul.addr %s5687, 128
          %s5689 = scalar_lea.hbm %s8, %s5688
          %s5690 = sshll.u32 %s5680, 4
          %s5691 = int_to_ptr.vmem [resolvable:$true] %s5690
          %5696 = dma.vmem_to_hbm [thread:$0]  %s5691, 256, %s5689, %s5677, 128, 128, 8
        $region60: #{tpu_custom_call.1} parent=51 // pred_fallthru
          _
      $region52: #{tpu_custom_call.1} parent=5 // pred_fallthru
        _
      %p5697 = scmp.le.s32.totalorder 2, %s18
      // Predicated region
      $region61: #{tpu_custom_call.1} parent=5 // pred_check
        %p5698 = pneg %p5697
      $region62: #{tpu_custom_call.1} parent=5 // pred_check_branch
        %5700 = sbr.rel (%p5698) target = $region64
      $region63: #{tpu_custom_call.1} parent=5 // pred_region
        %s5701 = ssub.s32 %s18, 2
        // Predicated region
        $region65: #{tpu_custom_call.1} parent=63 // pred_check
          %p5702 = pneg %p220
        $region66: #{tpu_custom_call.1} parent=63 // pred_check_branch
          %5704 = sbr.rel (%p5702) target = $region68
        $region67: #{tpu_custom_call.1} parent=63 // pred_region
          %s5705 = sand.u32 %s205, 1
          %s5706 = scalar_lea.sflag [#allocation6], %s5705
          %s5707 = sand.u32 %s205, 1
          %s5708 = smul.addr %s5707, 16
          %s5709 = scalar_lea.vmem [#allocation7], %s5708
          %5710 = dma.done %s5706, 256
        $region68: #{tpu_custom_call.1} parent=63 // pred_fallthru
          _
      $region64: #{tpu_custom_call.1} parent=5 // pred_fallthru
        _
    $region6: #{tpu_custom_call.1} parent=1 // loop_footer
      %s22 = sadd.s32 1, %s18
    $region7: #{tpu_custom_call.1} parent=1 // loop_footer_branch
      %17 = sbr.rel target = $region3
    $region8: #{tpu_custom_call.1} parent=1 // loop_exit
      _
    %5711 = vsyncpa [#allocation5], 1
    %s5712 = scalar_lea.sflag [#allocation5], 1
    %5713 = vsyncpa %s5712, 1
    %5714 = vsyncpa [#allocation6], 1
    %s5715 = scalar_lea.sflag [#allocation6], 1
    %5716 = vsyncpa %s5715, 1

</llo_original>
